<compile_context>
chip_gen: v5e
topology: v5e:2x2
jax: 0.10.0
libtpu: 0.0.40
codegen_flags: <defaults>
</compile_context>

<pallas_src>
import functools

import numpy as np
import jax
import jax.numpy as jnp
from jax.experimental import pallas as pl
from jax.experimental.pallas import tpu as pltpu


# ----------------------------- parameter setup ------------------------------

def make_lmu_matrices(order, theta):
    """Continuous-time Legendre delay (A, B), Euler-discretized with dt=1."""
    Q = np.arange(order, dtype=np.float64)
    R = (2.0 * Q + 1.0)[:, None] / float(theta)
    i, j = np.meshgrid(Q, Q, indexing="ij")
    A = np.where(i < j, -1.0, (-1.0) ** (i - j + 1)) * R          # (order, order)
    B = ((-1.0) ** Q)[:, None] * R                                 # (order, 1)
    Ad = np.eye(order) + A                                         # Euler, dt = 1
    Bd = B
    return jnp.asarray(Ad, jnp.float32), jnp.asarray(Bd, jnp.float32)


def init_params(key, inp_size, units, order, theta):
    ks = jax.random.split(key, 8)

    def lecun(k, shape):
        fan_in = shape[0]
        return (jax.random.normal(k, shape, jnp.float32) /
                np.sqrt(float(fan_in))).astype(jnp.float32)

    params = dict(
        e_x=lecun(ks[0], (inp_size, 1)),
        e_h=lecun(ks[1], (units, 1)),
        e_m=lecun(ks[2], (order, 1)),
        W_x=lecun(ks[3], (inp_size, units)),
        W_h=lecun(ks[4], (units, units)),
        W_m=lecun(ks[5], (order, units)),
        G_x=lecun(ks[6], (inp_size, units)),
        G_h=lecun(ks[7], (units, units)),
        b_g=jnp.zeros((1, units), jnp.float32),
    )
    A, B = make_lmu_matrices(order, theta)
    params["A_T"] = jnp.transpose(A)          # (order, order), pre-transposed
    params["B_T"] = jnp.transpose(B)          # (1, order),     pre-transposed
    return params


# ------------------------- packed / padded parameters -------------------------

def _round_up(x, m):
    return ((x + m - 1) // m) * m


def pack_params(params, inp_size, units, order):
    """Concatenate + lane-pad (to 128) the weights once, outside the recurrence.

    Column layout of the "F" axis (shared by xp and h@Hcat):
        [ cand block (units_p) | gate block (units_p) | u column (128, col 0 used) ]
    Column layout of the m-projection:
        [ A^T block (order_p) | u column (128, col 0 used) ]
    """
    units_p = _round_up(units, 128)
    order_p = _round_up(order, 128)
    f_p = 2 * units_p + 128
    off_cand, off_gate, off_u = 0, units_p, 2 * units_p

    # x-side projection matrix (used once in the wrapper, not in the kernel).
    xw = jnp.zeros((inp_size, f_p), jnp.float32)
    xw = xw.at[:, off_cand:off_cand + units].set(params["W_x"])
    xw = xw.at[:, off_gate:off_gate + units].set(params["G_x"])
    xw = xw.at[:, off_u:off_u + 1].set(params["e_x"])
    xb = jnp.zeros((1, f_p), jnp.float32)
    xb = xb.at[:, off_gate:off_gate + units].set(params["b_g"])   # fold bias in

    # h-side concatenated weights: h @ [W_h | G_h | e_h]  (one matmul per step).
    hcat = jnp.zeros((units_p, f_p), jnp.float32)
    hcat = hcat.at[:units, off_cand:off_cand + units].set(params["W_h"])
    hcat = hcat.at[:units, off_gate:off_gate + units].set(params["G_h"])
    hcat = hcat.at[:units, off_u:off_u + 1].set(params["e_h"])

    # m-side concatenated weights: m @ [A^T | e_m]  (one matmul per step).
    mcat = jnp.zeros((order_p, order_p + 128), jnp.float32)
    mcat = mcat.at[:order, :order].set(params["A_T"])
    mcat = mcat.at[:order, order_p:order_p + 1].set(params["e_m"])

    wm = jnp.zeros((order_p, units_p), jnp.float32)
    wm = wm.at[:order, :units].set(params["W_m"])

    brow = jnp.zeros((1, order_p), jnp.float32)
    brow = brow.at[:, :order].set(params["B_T"])

    return dict(xw=xw, xb=xb, hcat=hcat, mcat=mcat, wm=wm, brow=brow)


# --------------------------------- kernel -----------------------------------

def _lmu_kernel(xp_ref, h0_ref, m0_ref,
                hcat_ref, mcat_ref, wm_ref, brow_ref,
                out_ref, hT_ref, mT_ref,
                h_sc, m_sc,
                *, t_chunk, units_p, order_p):
    c = pl.program_id(0)

    # Initialize the VMEM-resident recurrent state on the first chunk.
    @pl.when(c == 0)
    def _():
        h_sc[...] = h0_ref[...]
        m_sc[...] = m0_ref[...]

    dot = functools.partial(jnp.dot, preferred_element_type=jnp.float32)

    h = h_sc[...]            # (batch, units_p)
    m = m_sc[...]            # (batch, order_p)
    brow = brow_ref[...]     # (1, order_p)

    # Statically unrolled inner loop over the time chunk (t_chunk is small and
    # compile-time known); the serial dependence is h/m -> next step.
    for i in range(t_chunk):
        # x-side contributions were precomputed; add the h-side projection.
        s = xp_ref[i] + dot(h, hcat_ref[...])            # (batch, 2*units_p+128)
        mp = dot(m, mcat_ref[...])                       # (batch, order_p+128)

        # u_t = x@e_x + h@e_h + m@e_m   (batch, 1)
        u = s[:, 2 * units_p:2 * units_p + 1] + mp[:, order_p:order_p + 1]

        # m_t = m@A^T + u*B_row   -- K=1 outer product done on the VPU.
        m = mp[:, :order_p] + u * brow

        # Gated hidden update.
        cand = jnp.tanh(s[:, :units_p] + dot(m, wm_ref[...]))
        g = jax.nn.sigmoid(s[:, units_p:2 * units_p])
        h = g * cand + (1.0 - g) * h

        # Lane-dense store into the per-chunk output block (written back to HBM
        # once per grid step by the pipeline).
        out_ref[i] = h

    h_sc[...] = h
    m_sc[...] = m

    @pl.when(c == pl.num_programs(0) - 1)
    def _():
        hT_ref[...] = h
        mT_ref[...] = m


# --------------------------------- wrapper -----------------------------------

def _pick_time_chunk(seq, max_chunk=16):
    c = min(seq, max_chunk)
    while seq % c != 0:
        c -= 1
    return c


def lmu_gate_forward(x, state, packed):
    """x: (batch, seq, inp_size); state: (h (batch,units), m (batch,order))."""
    h0, m0 = state
    batch, seq, inp = x.shape
    units = h0.shape[1]
    order = m0.shape[1]
    units_p = packed["hcat"].shape[0]
    order_p = packed["mcat"].shape[0]
    f_p = packed["hcat"].shape[1]

    t_chunk = _pick_time_chunk(seq)
    n_chunks = seq // t_chunk

    # Hoist the time-parallel x projections out of the recurrence: one large
    # (seq*batch, inp) x (inp, f_p) matmul in plain XLA, bias folded in.
    x_tm = jnp.transpose(x, (1, 0, 2)).reshape(seq * batch, inp)
    xp = (jnp.dot(x_tm, packed["xw"], preferred_element_type=jnp.float32)
          + packed["xb"]).reshape(seq, batch, f_p)

    # Zero-pad the state to the lane-padded widths (exact: padded lanes stay 0).
    h0_p = jnp.zeros((batch, units_p), jnp.float32).at[:, :units].set(h0)
    m0_p = jnp.zeros((batch, order_p), jnp.float32).at[:, :order].set(m0)

    def full(shape):
        return pl.BlockSpec(shape, lambda c, _s=shape: (0,) * len(_s))

    kernel = functools.partial(_lmu_kernel, t_chunk=t_chunk,
                               units_p=units_p, order_p=order_p)

    out_tm, hT_p, mT_p = pl.pallas_call(
        kernel,
        grid=(n_chunks,),
        in_specs=[
            pl.BlockSpec((t_chunk, batch, f_p), lambda c: (c, 0, 0)),   # xp chunk
            full((batch, units_p)),                                     # h0
            full((batch, order_p)),                                     # m0
            full((units_p, f_p)),                                       # [W_h|G_h|e_h]
            full((order_p, order_p + 128)),                             # [A^T|e_m]
            full((order_p, units_p)),                                   # W_m
            full((1, order_p)),                                         # B row
        ],
        out_specs=[
            pl.BlockSpec((t_chunk, batch, units_p), lambda c: (c, 0, 0)),
            full((batch, units_p)),
            full((batch, order_p)),
        ],
        out_shape=[
            jax.ShapeDtypeStruct((seq, batch, units_p), jnp.float32),
            jax.ShapeDtypeStruct((batch, units_p), jnp.float32),
            jax.ShapeDtypeStruct((batch, order_p), jnp.float32),
        ],
        scratch_shapes=[
            pltpu.VMEM((batch, units_p), jnp.float32),   # resident h
            pltpu.VMEM((batch, order_p), jnp.float32),   # resident m
        ],
        # Time is a true recurrence -> "arbitrary".  For v7x (2 TCs) a leading
        # "parallel" batch axis can be added when batch is large enough to shard
        # in sublane-aligned tiles.
        compiler_params=pltpu.CompilerParams(dimension_semantics=("arbitrary",)),
    )(xp, h0_p, m0_p, packed["hcat"], packed["mcat"], packed["wm"], packed["brow"])

    # Back to the PyTorch (batch, seq, units) convention; strip lane padding.
    outputs = jnp.transpose(out_tm[:, :, :units], (1, 0, 2))
    return outputs, (hT_p[:, :units], mT_p[:, :order])


# ------------------------------ JAX reference ---------------------------------

def lmu_gate_ref(x, state, p):
    h0, m0 = state

    def step(carry, x_t):
        h, m = carry
        u = x_t @ p["e_x"] + h @ p["e_h"] + m @ p["e_m"]
        m_new = m @ p["A_T"] + u @ p["B_T"]
        cand = jnp.tanh(x_t @ p["W_x"] + h @ p["W_h"] + m_new @ p["W_m"])
        g = jax.nn.sigmoid(x_t @ p["G_x"] + h @ p["G_h"] + p["b_g"])
        h_new = g * cand + (1.0 - g) * h
        return (h_new, m_new), h_new

    (hT, mT), ys = jax.lax.scan(step, (h0, m0), jnp.transpose(x, (1, 0, 2)))
    return jnp.transpose(ys, (1, 0, 2)), (hT, mT)


# ----------------------------------- main --------------------------------------

if __name__ == "__main__":
    # Small shapes consistent with LMUGate(inp_size, order, theta, output_dims).
    inp_size, order, theta, units = 4, 32, 32.0, 8
    batch, seq = 2, 8

    key = jax.random.PRNGKey(0)
    k_param, k_x = jax.random.split(key)
    params = init_params(k_param, inp_size, units, order, theta)
    packed = pack_params(params, inp_size, units, order)

    x = jax.random.normal(k_x, (batch, seq, inp_size), dtype=jnp.float32)
    # init_hidden(batch): (zeros(batch, units), zeros(batch, order))
    state = (jnp.zeros((batch, units), jnp.float32),
             jnp.zeros((batch, order), jnp.float32))

    fwd = jax.jit(lmu_gate_forward)
    out, (hT, mT) = fwd(x, state, packed)
    jax.block_until_ready((out, hT, mT))

    ref_out, (ref_h, ref_m) = lmu_gate_ref(x, state, params)
    assert out.shape == (batch, seq, units)
    max_err = float(np.abs(np.asarray(out) - np.asarray(ref_out)).max())
    assert np.allclose(np.asarray(out), np.asarray(ref_out), atol=1e-5), max_err
    assert np.allclose(np.asarray(hT), np.asarray(ref_h), atol=1e-5)
    assert np.allclose(np.asarray(mT), np.asarray(ref_m), atol=1e-5)

    print("KERNEL_OK")
</pallas_src>

<mosaic_0001>
module attributes {stable_mosaic.version = 11 : i64} {
  func.func @_lmu_kernel(%arg0: i32, %arg1: memref<8x2x384xf32, #tpu.memory_space<vmem>>, %arg2: memref<2x128xf32, #tpu.memory_space<vmem>>, %arg3: memref<2x128xf32, #tpu.memory_space<vmem>>, %arg4: memref<128x384xf32, #tpu.memory_space<vmem>>, %arg5: memref<128x256xf32, #tpu.memory_space<vmem>>, %arg6: memref<128x128xf32, #tpu.memory_space<vmem>>, %arg7: memref<1x128xf32, #tpu.memory_space<vmem>>, %arg8: memref<8x2x128xf32, #tpu.memory_space<vmem>>, %arg9: memref<2x128xf32, #tpu.memory_space<vmem>>, %arg10: memref<2x128xf32, #tpu.memory_space<vmem>>, %arg11: memref<2x128xf32, #tpu.memory_space<vmem>>, %arg12: memref<2x128xf32, #tpu.memory_space<vmem>>) attributes {dimension_semantics = [#tpu.dimension_semantics<arbitrary>], iteration_bounds = array<i64: 1>, scalar_prefetch = 0 : i64, scratch_operands = 2 : i64, tpu.core_type = #tpu.core_type<tc>, window_params = [{transform_indices = @transform_0, window_bounds = array<i64: 8, 2, 384>}, {pipeline_mode = #tpu.pipeline_mode<synchronous>, transform_indices = @transform_1, window_bounds = array<i64: 2, 128>}, {pipeline_mode = #tpu.pipeline_mode<synchronous>, transform_indices = @transform_2, window_bounds = array<i64: 2, 128>}, {pipeline_mode = #tpu.pipeline_mode<synchronous>, transform_indices = @transform_3, window_bounds = array<i64: 128, 384>}, {pipeline_mode = #tpu.pipeline_mode<synchronous>, transform_indices = @transform_4, window_bounds = array<i64: 128, 256>}, {pipeline_mode = #tpu.pipeline_mode<synchronous>, transform_indices = @transform_5, window_bounds = array<i64: 128, 128>}, {pipeline_mode = #tpu.pipeline_mode<synchronous>, transform_indices = @transform_6, window_bounds = array<i64: 1, 128>}, {transform_indices = @transform_7, window_bounds = array<i64: 8, 2, 128>}, {pipeline_mode = #tpu.pipeline_mode<synchronous>, transform_indices = @transform_8, window_bounds = array<i64: 2, 128>}, {pipeline_mode = #tpu.pipeline_mode<synchronous>, transform_indices = @transform_9, window_bounds = array<i64: 2, 128>}]} {
    %c0_i32 = arith.constant 0 : i32
    %0 = arith.cmpi eq, %arg0, %c0_i32 : i32
    %1 = arith.extui %0 : i1 to i32
    %c0_i32_0 = arith.constant 0 : i32
    %2 = arith.cmpi ne, %1, %c0_i32_0 : i32
    scf.if %2 {
      %c0_140 = arith.constant 0 : index
      %c0_141 = arith.constant 0 : index
      %283 = vector.load %arg2[%c0_140, %c0_141] : memref<2x128xf32, #tpu.memory_space<vmem>>, vector<2x128xf32>
      %c0_142 = arith.constant 0 : index
      %c0_143 = arith.constant 0 : index
      %284 = vector.load %arg11[%c0_142, %c0_143] : memref<2x128xf32, #tpu.memory_space<vmem>>, vector<2x128xf32>
      tpu.vector_store %arg11[%c0_142, %c0_143], %283 {strides = array<i32>} : memref<2x128xf32, #tpu.memory_space<vmem>>, vector<2x128xf32>,
      %c0_144 = arith.constant 0 : index
      %c0_145 = arith.constant 0 : index
      %285 = vector.load %arg3[%c0_144, %c0_145] : memref<2x128xf32, #tpu.memory_space<vmem>>, vector<2x128xf32>
      %c0_146 = arith.constant 0 : index
      %c0_147 = arith.constant 0 : index
      %286 = vector.load %arg12[%c0_146, %c0_147] : memref<2x128xf32, #tpu.memory_space<vmem>>, vector<2x128xf32>
      tpu.vector_store %arg12[%c0_146, %c0_147], %285 {strides = array<i32>} : memref<2x128xf32, #tpu.memory_space<vmem>>, vector<2x128xf32>,
    } else {
    }
    %c0 = arith.constant 0 : index
    %c0_1 = arith.constant 0 : index
    %3 = vector.load %arg11[%c0, %c0_1] : memref<2x128xf32, #tpu.memory_space<vmem>>, vector<2x128xf32>
    %c0_2 = arith.constant 0 : index
    %c0_3 = arith.constant 0 : index
    %4 = vector.load %arg12[%c0_2, %c0_3] : memref<2x128xf32, #tpu.memory_space<vmem>>, vector<2x128xf32>
    %c0_4 = arith.constant 0 : index
    %c0_5 = arith.constant 0 : index
    %5 = vector.load %arg7[%c0_4, %c0_5] : memref<1x128xf32, #tpu.memory_space<vmem>>, vector<1x128xf32>
    %c0_6 = arith.constant 0 : index
    %c0_7 = arith.constant 0 : index
    %c0_8 = arith.constant 0 : index
    %6 = vector.load %arg1[%c0_6, %c0_7, %c0_8] : memref<8x2x384xf32, #tpu.memory_space<vmem>>, vector<1x2x384xf32>
    %7 = vector.shape_cast %6 : vector<1x2x384xf32> to vector<2x384xf32>
    %c0_9 = arith.constant 0 : index
    %c0_10 = arith.constant 0 : index
    %8 = vector.load %arg4[%c0_9, %c0_10] : memref<128x384xf32, #tpu.memory_space<vmem>>, vector<128x384xf32>
    %cst = arith.constant dense<0.000000e+00> : vector<2x384xf32>
    %9 = tpu.matmul %3, %8, %cst {dimension_numbers = #tpu.dot_dimension_numbers<[1], [0], [0], [1], [0, 0, 1, 1], [], []>} : vector<2x128xf32>, vector<128x384xf32>, vector<2x384xf32> -> vector<2x384xf32>
    %10 = arith.addf %7, %9 : vector<2x384xf32>
    %c0_11 = arith.constant 0 : index
    %c0_12 = arith.constant 0 : index
    %11 = vector.load %arg5[%c0_11, %c0_12] : memref<128x256xf32, #tpu.memory_space<vmem>>, vector<128x256xf32>
    %cst_13 = arith.constant dense<0.000000e+00> : vector<2x256xf32>
    %12 = tpu.matmul %4, %11, %cst_13 {dimension_numbers = #tpu.dot_dimension_numbers<[1], [0], [0], [1], [0, 0, 1, 1], [], []>} : vector<2x128xf32>, vector<128x256xf32>, vector<2x256xf32> -> vector<2x256xf32>
    %13 = vector.extract_strided_slice %10 {offsets = [0, 256], sizes = [2, 1], strides = [1, 1]} : vector<2x384xf32> to vector<2x1xf32>
    %14 = vector.extract_strided_slice %12 {offsets = [0, 128], sizes = [2, 1], strides = [1, 1]} : vector<2x256xf32> to vector<2x1xf32>
    %15 = arith.addf %13, %14 : vector<2x1xf32>
    %16 = vector.extract_strided_slice %12 {offsets = [0, 0], sizes = [2, 128], strides = [1, 1]} : vector<2x256xf32> to vector<2x128xf32>
    %17 = vector.broadcast %15 : vector<2x1xf32> to vector<2x128xf32>
    %18 = vector.broadcast %5 : vector<1x128xf32> to vector<2x128xf32>
    %19 = arith.mulf %17, %18 : vector<2x128xf32>
    %20 = arith.addf %16, %19 : vector<2x128xf32>
    %21 = vector.extract_strided_slice %10 {offsets = [0, 0], sizes = [2, 128], strides = [1, 1]} : vector<2x384xf32> to vector<2x128xf32>
    %c0_14 = arith.constant 0 : index
    %c0_15 = arith.constant 0 : index
    %22 = vector.load %arg6[%c0_14, %c0_15] : memref<128x128xf32, #tpu.memory_space<vmem>>, vector<128x128xf32>
    %cst_16 = arith.constant dense<0.000000e+00> : vector<2x128xf32>
    %23 = tpu.matmul %20, %22, %cst_16 {dimension_numbers = #tpu.dot_dimension_numbers<[1], [0], [0], [1], [0, 0, 1, 1], [], []>} : vector<2x128xf32>, vector<128x128xf32>, vector<2x128xf32> -> vector<2x128xf32>
    %24 = arith.addf %21, %23 : vector<2x128xf32>
    %25 = math.tanh %24 : vector<2x128xf32>
    %26 = vector.extract_strided_slice %10 {offsets = [0, 128], sizes = [2, 128], strides = [1, 1]} : vector<2x384xf32> to vector<2x128xf32>
    %27 = arith.negf %26 : vector<2x128xf32>
    %28 = math.exp %27 : vector<2x128xf32>
    %cst_17 = arith.constant 1.000000e+00 : f32
    %29 = vector.broadcast %cst_17 : f32 to vector<2x128xf32>
    %30 = arith.addf %29, %28 : vector<2x128xf32>
    %31 = arith.divf %29, %30 : vector<2x128xf32>
    %32 = arith.mulf %31, %25 : vector<2x128xf32>
    %cst_18 = arith.constant 1.000000e+00 : f32
    %33 = vector.broadcast %cst_18 : f32 to vector<2x128xf32>
    %34 = arith.subf %33, %31 : vector<2x128xf32>
    %35 = arith.mulf %34, %3 : vector<2x128xf32>
    %36 = arith.addf %32, %35 : vector<2x128xf32>
    %c0_19 = arith.constant 0 : index
    %c0_20 = arith.constant 0 : index
    %c0_21 = arith.constant 0 : index
    %37 = vector.load %arg8[%c0_19, %c0_20, %c0_21] : memref<8x2x128xf32, #tpu.memory_space<vmem>>, vector<1x2x128xf32>
    %38 = vector.shape_cast %37 : vector<1x2x128xf32> to vector<2x128xf32>
    %39 = vector.shape_cast %36 : vector<2x128xf32> to vector<1x2x128xf32>
    tpu.vector_store %arg8[%c0_19, %c0_20, %c0_21], %39 {strides = array<i32>} : memref<8x2x128xf32, #tpu.memory_space<vmem>>, vector<1x2x128xf32>,
    %c1 = arith.constant 1 : index
    %c0_22 = arith.constant 0 : index
    %c0_23 = arith.constant 0 : index
    %40 = vector.load %arg1[%c1, %c0_22, %c0_23] : memref<8x2x384xf32, #tpu.memory_space<vmem>>, vector<1x2x384xf32>
    %41 = vector.shape_cast %40 : vector<1x2x384xf32> to vector<2x384xf32>
    %c0_24 = arith.constant 0 : index
    %c0_25 = arith.constant 0 : index
    %42 = vector.load %arg4[%c0_24, %c0_25] : memref<128x384xf32, #tpu.memory_space<vmem>>, vector<128x384xf32>
    %cst_26 = arith.constant dense<0.000000e+00> : vector<2x384xf32>
    %43 = tpu.matmul %36, %42, %cst_26 {dimension_numbers = #tpu.dot_dimension_numbers<[1], [0], [0], [1], [0, 0, 1, 1], [], []>} : vector<2x128xf32>, vector<128x384xf32>, vector<2x384xf32> -> vector<2x384xf32>
    %44 = arith.addf %41, %43 : vector<2x384xf32>
    %c0_27 = arith.constant 0 : index
    %c0_28 = arith.constant 0 : index
    %45 = vector.load %arg5[%c0_27, %c0_28] : memref<128x256xf32, #tpu.memory_space<vmem>>, vector<128x256xf32>
    %cst_29 = arith.constant dense<0.000000e+00> : vector<2x256xf32>
    %46 = tpu.matmul %20, %45, %cst_29 {dimension_numbers = #tpu.dot_dimension_numbers<[1], [0], [0], [1], [0, 0, 1, 1], [], []>} : vector<2x128xf32>, vector<128x256xf32>, vector<2x256xf32> -> vector<2x256xf32>
    %47 = vector.extract_strided_slice %44 {offsets = [0, 256], sizes = [2, 1], strides = [1, 1]} : vector<2x384xf32> to vector<2x1xf32>
    %48 = vector.extract_strided_slice %46 {offsets = [0, 128], sizes = [2, 1], strides = [1, 1]} : vector<2x256xf32> to vector<2x1xf32>
    %49 = arith.addf %47, %48 : vector<2x1xf32>
    %50 = vector.extract_strided_slice %46 {offsets = [0, 0], sizes = [2, 128], strides = [1, 1]} : vector<2x256xf32> to vector<2x128xf32>
    %51 = vector.broadcast %49 : vector<2x1xf32> to vector<2x128xf32>
    %52 = vector.broadcast %5 : vector<1x128xf32> to vector<2x128xf32>
    %53 = arith.mulf %51, %52 : vector<2x128xf32>
    %54 = arith.addf %50, %53 : vector<2x128xf32>
    %55 = vector.extract_strided_slice %44 {offsets = [0, 0], sizes = [2, 128], strides = [1, 1]} : vector<2x384xf32> to vector<2x128xf32>
    %c0_30 = arith.constant 0 : index
    %c0_31 = arith.constant 0 : index
    %56 = vector.load %arg6[%c0_30, %c0_31] : memref<128x128xf32, #tpu.memory_space<vmem>>, vector<128x128xf32>
    %cst_32 = arith.constant dense<0.000000e+00> : vector<2x128xf32>
    %57 = tpu.matmul %54, %56, %cst_32 {dimension_numbers = #tpu.dot_dimension_numbers<[1], [0], [0], [1], [0, 0, 1, 1], [], []>} : vector<2x128xf32>, vector<128x128xf32>, vector<2x128xf32> -> vector<2x128xf32>
    %58 = arith.addf %55, %57 : vector<2x128xf32>
    %59 = math.tanh %58 : vector<2x128xf32>
    %60 = vector.extract_strided_slice %44 {offsets = [0, 128], sizes = [2, 128], strides = [1, 1]} : vector<2x384xf32> to vector<2x128xf32>
    %61 = arith.negf %60 : vector<2x128xf32>
    %62 = math.exp %61 : vector<2x128xf32>
    %cst_33 = arith.constant 1.000000e+00 : f32
    %63 = vector.broadcast %cst_33 : f32 to vector<2x128xf32>
    %64 = arith.addf %63, %62 : vector<2x128xf32>
    %65 = arith.divf %63, %64 : vector<2x128xf32>
    %66 = arith.mulf %65, %59 : vector<2x128xf32>
    %cst_34 = arith.constant 1.000000e+00 : f32
    %67 = vector.broadcast %cst_34 : f32 to vector<2x128xf32>
    %68 = arith.subf %67, %65 : vector<2x128xf32>
    %69 = arith.mulf %68, %36 : vector<2x128xf32>
    %70 = arith.addf %66, %69 : vector<2x128xf32>
    %c1_35 = arith.constant 1 : index
    %c0_36 = arith.constant 0 : index
    %c0_37 = arith.constant 0 : index
    %71 = vector.load %arg8[%c1_35, %c0_36, %c0_37] : memref<8x2x128xf32, #tpu.memory_space<vmem>>, vector<1x2x128xf32>
    %72 = vector.shape_cast %71 : vector<1x2x128xf32> to vector<2x128xf32>
    %73 = vector.shape_cast %70 : vector<2x128xf32> to vector<1x2x128xf32>
    tpu.vector_store %arg8[%c1_35, %c0_36, %c0_37], %73 {strides = array<i32>} : memref<8x2x128xf32, #tpu.memory_space<vmem>>, vector<1x2x128xf32>,
    %c2 = arith.constant 2 : index
    %c0_38 = arith.constant 0 : index
    %c0_39 = arith.constant 0 : index
    %74 = vector.load %arg1[%c2, %c0_38, %c0_39] : memref<8x2x384xf32, #tpu.memory_space<vmem>>, vector<1x2x384xf32>
    %75 = vector.shape_cast %74 : vector<1x2x384xf32> to vector<2x384xf32>
    %c0_40 = arith.constant 0 : index
    %c0_41 = arith.constant 0 : index
    %76 = vector.load %arg4[%c0_40, %c0_41] : memref<128x384xf32, #tpu.memory_space<vmem>>, vector<128x384xf32>
    %cst_42 = arith.constant dense<0.000000e+00> : vector<2x384xf32>
    %77 = tpu.matmul %70, %76, %cst_42 {dimension_numbers = #tpu.dot_dimension_numbers<[1], [0], [0], [1], [0, 0, 1, 1], [], []>} : vector<2x128xf32>, vector<128x384xf32>, vector<2x384xf32> -> vector<2x384xf32>
    %78 = arith.addf %75, %77 : vector<2x384xf32>
    %c0_43 = arith.constant 0 : index
    %c0_44 = arith.constant 0 : index
    %79 = vector.load %arg5[%c0_43, %c0_44] : memref<128x256xf32, #tpu.memory_space<vmem>>, vector<128x256xf32>
    %cst_45 = arith.constant dense<0.000000e+00> : vector<2x256xf32>
    %80 = tpu.matmul %54, %79, %cst_45 {dimension_numbers = #tpu.dot_dimension_numbers<[1], [0], [0], [1], [0, 0, 1, 1], [], []>} : vector<2x128xf32>, vector<128x256xf32>, vector<2x256xf32> -> vector<2x256xf32>
    %81 = vector.extract_strided_slice %78 {offsets = [0, 256], sizes = [2, 1], strides = [1, 1]} : vector<2x384xf32> to vector<2x1xf32>
    %82 = vector.extract_strided_slice %80 {offsets = [0, 128], sizes = [2, 1], strides = [1, 1]} : vector<2x256xf32> to vector<2x1xf32>
    %83 = arith.addf %81, %82 : vector<2x1xf32>
    %84 = vector.extract_strided_slice %80 {offsets = [0, 0], sizes = [2, 128], strides = [1, 1]} : vector<2x256xf32> to vector<2x128xf32>
    %85 = vector.broadcast %83 : vector<2x1xf32> to vector<2x128xf32>
    %86 = vector.broadcast %5 : vector<1x128xf32> to vector<2x128xf32>
    %87 = arith.mulf %85, %86 : vector<2x128xf32>
    %88 = arith.addf %84, %87 : vector<2x128xf32>
    %89 = vector.extract_strided_slice %78 {offsets = [0, 0], sizes = [2, 128], strides = [1, 1]} : vector<2x384xf32> to vector<2x128xf32>
    %c0_46 = arith.constant 0 : index
    %c0_47 = arith.constant 0 : index
    %90 = vector.load %arg6[%c0_46, %c0_47] : memref<128x128xf32, #tpu.memory_space<vmem>>, vector<128x128xf32>
    %cst_48 = arith.constant dense<0.000000e+00> : vector<2x128xf32>
    %91 = tpu.matmul %88, %90, %cst_48 {dimension_numbers = #tpu.dot_dimension_numbers<[1], [0], [0], [1], [0, 0, 1, 1], [], []>} : vector<2x128xf32>, vector<128x128xf32>, vector<2x128xf32> -> vector<2x128xf32>
    %92 = arith.addf %89, %91 : vector<2x128xf32>
    %93 = math.tanh %92 : vector<2x128xf32>
    %94 = vector.extract_strided_slice %78 {offsets = [0, 128], sizes = [2, 128], strides = [1, 1]} : vector<2x384xf32> to vector<2x128xf32>
    %95 = arith.negf %94 : vector<2x128xf32>
    %96 = math.exp %95 : vector<2x128xf32>
    %cst_49 = arith.constant 1.000000e+00 : f32
    %97 = vector.broadcast %cst_49 : f32 to vector<2x128xf32>
    %98 = arith.addf %97, %96 : vector<2x128xf32>
    %99 = arith.divf %97, %98 : vector<2x128xf32>
    %100 = arith.mulf %99, %93 : vector<2x128xf32>
    %cst_50 = arith.constant 1.000000e+00 : f32
    %101 = vector.broadcast %cst_50 : f32 to vector<2x128xf32>
    %102 = arith.subf %101, %99 : vector<2x128xf32>
    %103 = arith.mulf %102, %70 : vector<2x128xf32>
    %104 = arith.addf %100, %103 : vector<2x128xf32>
    %c2_51 = arith.constant 2 : index
    %c0_52 = arith.constant 0 : index
    %c0_53 = arith.constant 0 : index
    %105 = vector.load %arg8[%c2_51, %c0_52, %c0_53] : memref<8x2x128xf32, #tpu.memory_space<vmem>>, vector<1x2x128xf32>
    %106 = vector.shape_cast %105 : vector<1x2x128xf32> to vector<2x128xf32>
    %107 = vector.shape_cast %104 : vector<2x128xf32> to vector<1x2x128xf32>
    tpu.vector_store %arg8[%c2_51, %c0_52, %c0_53], %107 {strides = array<i32>} : memref<8x2x128xf32, #tpu.memory_space<vmem>>, vector<1x2x128xf32>,
    %c3 = arith.constant 3 : index
    %c0_54 = arith.constant 0 : index
    %c0_55 = arith.constant 0 : index
    %108 = vector.load %arg1[%c3, %c0_54, %c0_55] : memref<8x2x384xf32, #tpu.memory_space<vmem>>, vector<1x2x384xf32>
    %109 = vector.shape_cast %108 : vector<1x2x384xf32> to vector<2x384xf32>
    %c0_56 = arith.constant 0 : index
    %c0_57 = arith.constant 0 : index
    %110 = vector.load %arg4[%c0_56, %c0_57] : memref<128x384xf32, #tpu.memory_space<vmem>>, vector<128x384xf32>
    %cst_58 = arith.constant dense<0.000000e+00> : vector<2x384xf32>
    %111 = tpu.matmul %104, %110, %cst_58 {dimension_numbers = #tpu.dot_dimension_numbers<[1], [0], [0], [1], [0, 0, 1, 1], [], []>} : vector<2x128xf32>, vector<128x384xf32>, vector<2x384xf32> -> vector<2x384xf32>
    %112 = arith.addf %109, %111 : vector<2x384xf32>
    %c0_59 = arith.constant 0 : index
    %c0_60 = arith.constant 0 : index
    %113 = vector.load %arg5[%c0_59, %c0_60] : memref<128x256xf32, #tpu.memory_space<vmem>>, vector<128x256xf32>
    %cst_61 = arith.constant dense<0.000000e+00> : vector<2x256xf32>
    %114 = tpu.matmul %88, %113, %cst_61 {dimension_numbers = #tpu.dot_dimension_numbers<[1], [0], [0], [1], [0, 0, 1, 1], [], []>} : vector<2x128xf32>, vector<128x256xf32>, vector<2x256xf32> -> vector<2x256xf32>
    %115 = vector.extract_strided_slice %112 {offsets = [0, 256], sizes = [2, 1], strides = [1, 1]} : vector<2x384xf32> to vector<2x1xf32>
    %116 = vector.extract_strided_slice %114 {offsets = [0, 128], sizes = [2, 1], strides = [1, 1]} : vector<2x256xf32> to vector<2x1xf32>
    %117 = arith.addf %115, %116 : vector<2x1xf32>
    %118 = vector.extract_strided_slice %114 {offsets = [0, 0], sizes = [2, 128], strides = [1, 1]} : vector<2x256xf32> to vector<2x128xf32>
    %119 = vector.broadcast %117 : vector<2x1xf32> to vector<2x128xf32>
    %120 = vector.broadcast %5 : vector<1x128xf32> to vector<2x128xf32>
    %121 = arith.mulf %119, %120 : vector<2x128xf32>
    %122 = arith.addf %118, %121 : vector<2x128xf32>
    %123 = vector.extract_strided_slice %112 {offsets = [0, 0], sizes = [2, 128], strides = [1, 1]} : vector<2x384xf32> to vector<2x128xf32>
    %c0_62 = arith.constant 0 : index
    %c0_63 = arith.constant 0 : index
    %124 = vector.load %arg6[%c0_62, %c0_63] : memref<128x128xf32, #tpu.memory_space<vmem>>, vector<128x128xf32>
    %cst_64 = arith.constant dense<0.000000e+00> : vector<2x128xf32>
    %125 = tpu.matmul %122, %124, %cst_64 {dimension_numbers = #tpu.dot_dimension_numbers<[1], [0], [0], [1], [0, 0, 1, 1], [], []>} : vector<2x128xf32>, vector<128x128xf32>, vector<2x128xf32> -> vector<2x128xf32>
    %126 = arith.addf %123, %125 : vector<2x128xf32>
    %127 = math.tanh %126 : vector<2x128xf32>
    %128 = vector.extract_strided_slice %112 {offsets = [0, 128], sizes = [2, 128], strides = [1, 1]} : vector<2x384xf32> to vector<2x128xf32>
    %129 = arith.negf %128 : vector<2x128xf32>
    %130 = math.exp %129 : vector<2x128xf32>
    %cst_65 = arith.constant 1.000000e+00 : f32
    %131 = vector.broadcast %cst_65 : f32 to vector<2x128xf32>
    %132 = arith.addf %131, %130 : vector<2x128xf32>
    %133 = arith.divf %131, %132 : vector<2x128xf32>
    %134 = arith.mulf %133, %127 : vector<2x128xf32>
    %cst_66 = arith.constant 1.000000e+00 : f32
    %135 = vector.broadcast %cst_66 : f32 to vector<2x128xf32>
    %136 = arith.subf %135, %133 : vector<2x128xf32>
    %137 = arith.mulf %136, %104 : vector<2x128xf32>
    %138 = arith.addf %134, %137 : vector<2x128xf32>
    %c3_67 = arith.constant 3 : index
    %c0_68 = arith.constant 0 : index
    %c0_69 = arith.constant 0 : index
    %139 = vector.load %arg8[%c3_67, %c0_68, %c0_69] : memref<8x2x128xf32, #tpu.memory_space<vmem>>, vector<1x2x128xf32>
    %140 = vector.shape_cast %139 : vector<1x2x128xf32> to vector<2x128xf32>
    %141 = vector.shape_cast %138 : vector<2x128xf32> to vector<1x2x128xf32>
    tpu.vector_store %arg8[%c3_67, %c0_68, %c0_69], %141 {strides = array<i32>} : memref<8x2x128xf32, #tpu.memory_space<vmem>>, vector<1x2x128xf32>,
    %c4 = arith.constant 4 : index
    %c0_70 = arith.constant 0 : index
    %c0_71 = arith.constant 0 : index
    %142 = vector.load %arg1[%c4, %c0_70, %c0_71] : memref<8x2x384xf32, #tpu.memory_space<vmem>>, vector<1x2x384xf32>
    %143 = vector.shape_cast %142 : vector<1x2x384xf32> to vector<2x384xf32>
    %c0_72 = arith.constant 0 : index
    %c0_73 = arith.constant 0 : index
    %144 = vector.load %arg4[%c0_72, %c0_73] : memref<128x384xf32, #tpu.memory_space<vmem>>, vector<128x384xf32>
    %cst_74 = arith.constant dense<0.000000e+00> : vector<2x384xf32>
    %145 = tpu.matmul %138, %144, %cst_74 {dimension_numbers = #tpu.dot_dimension_numbers<[1], [0], [0], [1], [0, 0, 1, 1], [], []>} : vector<2x128xf32>, vector<128x384xf32>, vector<2x384xf32> -> vector<2x384xf32>
    %146 = arith.addf %143, %145 : vector<2x384xf32>
    %c0_75 = arith.constant 0 : index
    %c0_76 = arith.constant 0 : index
    %147 = vector.load %arg5[%c0_75, %c0_76] : memref<128x256xf32, #tpu.memory_space<vmem>>, vector<128x256xf32>
    %cst_77 = arith.constant dense<0.000000e+00> : vector<2x256xf32>
    %148 = tpu.matmul %122, %147, %cst_77 {dimension_numbers = #tpu.dot_dimension_numbers<[1], [0], [0], [1], [0, 0, 1, 1], [], []>} : vector<2x128xf32>, vector<128x256xf32>, vector<2x256xf32> -> vector<2x256xf32>
    %149 = vector.extract_strided_slice %146 {offsets = [0, 256], sizes = [2, 1], strides = [1, 1]} : vector<2x384xf32> to vector<2x1xf32>
    %150 = vector.extract_strided_slice %148 {offsets = [0, 128], sizes = [2, 1], strides = [1, 1]} : vector<2x256xf32> to vector<2x1xf32>
    %151 = arith.addf %149, %150 : vector<2x1xf32>
    %152 = vector.extract_strided_slice %148 {offsets = [0, 0], sizes = [2, 128], strides = [1, 1]} : vector<2x256xf32> to vector<2x128xf32>
    %153 = vector.broadcast %151 : vector<2x1xf32> to vector<2x128xf32>
    %154 = vector.broadcast %5 : vector<1x128xf32> to vector<2x128xf32>
    %155 = arith.mulf %153, %154 : vector<2x128xf32>
    %156 = arith.addf %152, %155 : vector<2x128xf32>
    %157 = vector.extract_strided_slice %146 {offsets = [0, 0], sizes = [2, 128], strides = [1, 1]} : vector<2x384xf32> to vector<2x128xf32>
    %c0_78 = arith.constant 0 : index
    %c0_79 = arith.constant 0 : index
    %158 = vector.load %arg6[%c0_78, %c0_79] : memref<128x128xf32, #tpu.memory_space<vmem>>, vector<128x128xf32>
    %cst_80 = arith.constant dense<0.000000e+00> : vector<2x128xf32>
    %159 = tpu.matmul %156, %158, %cst_80 {dimension_numbers = #tpu.dot_dimension_numbers<[1], [0], [0], [1], [0, 0, 1, 1], [], []>} : vector<2x128xf32>, vector<128x128xf32>, vector<2x128xf32> -> vector<2x128xf32>
    %160 = arith.addf %157, %159 : vector<2x128xf32>
    %161 = math.tanh %160 : vector<2x128xf32>
    %162 = vector.extract_strided_slice %146 {offsets = [0, 128], sizes = [2, 128], strides = [1, 1]} : vector<2x384xf32> to vector<2x128xf32>
    %163 = arith.negf %162 : vector<2x128xf32>
    %164 = math.exp %163 : vector<2x128xf32>
    %cst_81 = arith.constant 1.000000e+00 : f32
    %165 = vector.broadcast %cst_81 : f32 to vector<2x128xf32>
    %166 = arith.addf %165, %164 : vector<2x128xf32>
    %167 = arith.divf %165, %166 : vector<2x128xf32>
    %168 = arith.mulf %167, %161 : vector<2x128xf32>
    %cst_82 = arith.constant 1.000000e+00 : f32
    %169 = vector.broadcast %cst_82 : f32 to vector<2x128xf32>
    %170 = arith.subf %169, %167 : vector<2x128xf32>
    %171 = arith.mulf %170, %138 : vector<2x128xf32>
    %172 = arith.addf %168, %171 : vector<2x128xf32>
    %c4_83 = arith.constant 4 : index
    %c0_84 = arith.constant 0 : index
    %c0_85 = arith.constant 0 : index
    %173 = vector.load %arg8[%c4_83, %c0_84, %c0_85] : memref<8x2x128xf32, #tpu.memory_space<vmem>>, vector<1x2x128xf32>
    %174 = vector.shape_cast %173 : vector<1x2x128xf32> to vector<2x128xf32>
    %175 = vector.shape_cast %172 : vector<2x128xf32> to vector<1x2x128xf32>
    tpu.vector_store %arg8[%c4_83, %c0_84, %c0_85], %175 {strides = array<i32>} : memref<8x2x128xf32, #tpu.memory_space<vmem>>, vector<1x2x128xf32>,
    %c5 = arith.constant 5 : index
    %c0_86 = arith.constant 0 : index
    %c0_87 = arith.constant 0 : index
    %176 = vector.load %arg1[%c5, %c0_86, %c0_87] : memref<8x2x384xf32, #tpu.memory_space<vmem>>, vector<1x2x384xf32>
    %177 = vector.shape_cast %176 : vector<1x2x384xf32> to vector<2x384xf32>
    %c0_88 = arith.constant 0 : index
    %c0_89 = arith.constant 0 : index
    %178 = vector.load %arg4[%c0_88, %c0_89] : memref<128x384xf32, #tpu.memory_space<vmem>>, vector<128x384xf32>
    %cst_90 = arith.constant dense<0.000000e+00> : vector<2x384xf32>
    %179 = tpu.matmul %172, %178, %cst_90 {dimension_numbers = #tpu.dot_dimension_numbers<[1], [0], [0], [1], [0, 0, 1, 1], [], []>} : vector<2x128xf32>, vector<128x384xf32>, vector<2x384xf32> -> vector<2x384xf32>
    %180 = arith.addf %177, %179 : vector<2x384xf32>
    %c0_91 = arith.constant 0 : index
    %c0_92 = arith.constant 0 : index
    %181 = vector.load %arg5[%c0_91, %c0_92] : memref<128x256xf32, #tpu.memory_space<vmem>>, vector<128x256xf32>
    %cst_93 = arith.constant dense<0.000000e+00> : vector<2x256xf32>
    %182 = tpu.matmul %156, %181, %cst_93 {dimension_numbers = #tpu.dot_dimension_numbers<[1], [0], [0], [1], [0, 0, 1, 1], [], []>} : vector<2x128xf32>, vector<128x256xf32>, vector<2x256xf32> -> vector<2x256xf32>
    %183 = vector.extract_strided_slice %180 {offsets = [0, 256], sizes = [2, 1], strides = [1, 1]} : vector<2x384xf32> to vector<2x1xf32>
    %184 = vector.extract_strided_slice %182 {offsets = [0, 128], sizes = [2, 1], strides = [1, 1]} : vector<2x256xf32> to vector<2x1xf32>
    %185 = arith.addf %183, %184 : vector<2x1xf32>
    %186 = vector.extract_strided_slice %182 {offsets = [0, 0], sizes = [2, 128], strides = [1, 1]} : vector<2x256xf32> to vector<2x128xf32>
    %187 = vector.broadcast %185 : vector<2x1xf32> to vector<2x128xf32>
    %188 = vector.broadcast %5 : vector<1x128xf32> to vector<2x128xf32>
    %189 = arith.mulf %187, %188 : vector<2x128xf32>
    %190 = arith.addf %186, %189 : vector<2x128xf32>
    %191 = vector.extract_strided_slice %180 {offsets = [0, 0], sizes = [2, 128], strides = [1, 1]} : vector<2x384xf32> to vector<2x128xf32>
    %c0_94 = arith.constant 0 : index
    %c0_95 = arith.constant 0 : index
    %192 = vector.load %arg6[%c0_94, %c0_95] : memref<128x128xf32, #tpu.memory_space<vmem>>, vector<128x128xf32>
    %cst_96 = arith.constant dense<0.000000e+00> : vector<2x128xf32>
    %193 = tpu.matmul %190, %192, %cst_96 {dimension_numbers = #tpu.dot_dimension_numbers<[1], [0], [0], [1], [0, 0, 1, 1], [], []>} : vector<2x128xf32>, vector<128x128xf32>, vector<2x128xf32> -> vector<2x128xf32>
    %194 = arith.addf %191, %193 : vector<2x128xf32>
    %195 = math.tanh %194 : vector<2x128xf32>
    %196 = vector.extract_strided_slice %180 {offsets = [0, 128], sizes = [2, 128], strides = [1, 1]} : vector<2x384xf32> to vector<2x128xf32>
    %197 = arith.negf %196 : vector<2x128xf32>
    %198 = math.exp %197 : vector<2x128xf32>
    %cst_97 = arith.constant 1.000000e+00 : f32
    %199 = vector.broadcast %cst_97 : f32 to vector<2x128xf32>
    %200 = arith.addf %199, %198 : vector<2x128xf32>
    %201 = arith.divf %199, %200 : vector<2x128xf32>
    %202 = arith.mulf %201, %195 : vector<2x128xf32>
    %cst_98 = arith.constant 1.000000e+00 : f32
    %203 = vector.broadcast %cst_98 : f32 to vector<2x128xf32>
    %204 = arith.subf %203, %201 : vector<2x128xf32>
    %205 = arith.mulf %204, %172 : vector<2x128xf32>
    %206 = arith.addf %202, %205 : vector<2x128xf32>
    %c5_99 = arith.constant 5 : index
    %c0_100 = arith.constant 0 : index
    %c0_101 = arith.constant 0 : index
    %207 = vector.load %arg8[%c5_99, %c0_100, %c0_101] : memref<8x2x128xf32, #tpu.memory_space<vmem>>, vector<1x2x128xf32>
    %208 = vector.shape_cast %207 : vector<1x2x128xf32> to vector<2x128xf32>
    %209 = vector.shape_cast %206 : vector<2x128xf32> to vector<1x2x128xf32>
    tpu.vector_store %arg8[%c5_99, %c0_100, %c0_101], %209 {strides = array<i32>} : memref<8x2x128xf32, #tpu.memory_space<vmem>>, vector<1x2x128xf32>,
    %c6 = arith.constant 6 : index
    %c0_102 = arith.constant 0 : index
    %c0_103 = arith.constant 0 : index
    %210 = vector.load %arg1[%c6, %c0_102, %c0_103] : memref<8x2x384xf32, #tpu.memory_space<vmem>>, vector<1x2x384xf32>
    %211 = vector.shape_cast %210 : vector<1x2x384xf32> to vector<2x384xf32>
    %c0_104 = arith.constant 0 : index
    %c0_105 = arith.constant 0 : index
    %212 = vector.load %arg4[%c0_104, %c0_105] : memref<128x384xf32, #tpu.memory_space<vmem>>, vector<128x384xf32>
    %cst_106 = arith.constant dense<0.000000e+00> : vector<2x384xf32>
    %213 = tpu.matmul %206, %212, %cst_106 {dimension_numbers = #tpu.dot_dimension_numbers<[1], [0], [0], [1], [0, 0, 1, 1], [], []>} : vector<2x128xf32>, vector<128x384xf32>, vector<2x384xf32> -> vector<2x384xf32>
    %214 = arith.addf %211, %213 : vector<2x384xf32>
    %c0_107 = arith.constant 0 : index
    %c0_108 = arith.constant 0 : index
    %215 = vector.load %arg5[%c0_107, %c0_108] : memref<128x256xf32, #tpu.memory_space<vmem>>, vector<128x256xf32>
    %cst_109 = arith.constant dense<0.000000e+00> : vector<2x256xf32>
    %216 = tpu.matmul %190, %215, %cst_109 {dimension_numbers = #tpu.dot_dimension_numbers<[1], [0], [0], [1], [0, 0, 1, 1], [], []>} : vector<2x128xf32>, vector<128x256xf32>, vector<2x256xf32> -> vector<2x256xf32>
    %217 = vector.extract_strided_slice %214 {offsets = [0, 256], sizes = [2, 1], strides = [1, 1]} : vector<2x384xf32> to vector<2x1xf32>
    %218 = vector.extract_strided_slice %216 {offsets = [0, 128], sizes = [2, 1], strides = [1, 1]} : vector<2x256xf32> to vector<2x1xf32>
    %219 = arith.addf %217, %218 : vector<2x1xf32>
    %220 = vector.extract_strided_slice %216 {offsets = [0, 0], sizes = [2, 128], strides = [1, 1]} : vector<2x256xf32> to vector<2x128xf32>
    %221 = vector.broadcast %219 : vector<2x1xf32> to vector<2x128xf32>
    %222 = vector.broadcast %5 : vector<1x128xf32> to vector<2x128xf32>
    %223 = arith.mulf %221, %222 : vector<2x128xf32>
    %224 = arith.addf %220, %223 : vector<2x128xf32>
    %225 = vector.extract_strided_slice %214 {offsets = [0, 0], sizes = [2, 128], strides = [1, 1]} : vector<2x384xf32> to vector<2x128xf32>
    %c0_110 = arith.constant 0 : index
    %c0_111 = arith.constant 0 : index
    %226 = vector.load %arg6[%c0_110, %c0_111] : memref<128x128xf32, #tpu.memory_space<vmem>>, vector<128x128xf32>
    %cst_112 = arith.constant dense<0.000000e+00> : vector<2x128xf32>
    %227 = tpu.matmul %224, %226, %cst_112 {dimension_numbers = #tpu.dot_dimension_numbers<[1], [0], [0], [1], [0, 0, 1, 1], [], []>} : vector<2x128xf32>, vector<128x128xf32>, vector<2x128xf32> -> vector<2x128xf32>
    %228 = arith.addf %225, %227 : vector<2x128xf32>
    %229 = math.tanh %228 : vector<2x128xf32>
    %230 = vector.extract_strided_slice %214 {offsets = [0, 128], sizes = [2, 128], strides = [1, 1]} : vector<2x384xf32> to vector<2x128xf32>
    %231 = arith.negf %230 : vector<2x128xf32>
    %232 = math.exp %231 : vector<2x128xf32>
    %cst_113 = arith.constant 1.000000e+00 : f32
    %233 = vector.broadcast %cst_113 : f32 to vector<2x128xf32>
    %234 = arith.addf %233, %232 : vector<2x128xf32>
    %235 = arith.divf %233, %234 : vector<2x128xf32>
    %236 = arith.mulf %235, %229 : vector<2x128xf32>
    %cst_114 = arith.constant 1.000000e+00 : f32
    %237 = vector.broadcast %cst_114 : f32 to vector<2x128xf32>
    %238 = arith.subf %237, %235 : vector<2x128xf32>
    %239 = arith.mulf %238, %206 : vector<2x128xf32>
    %240 = arith.addf %236, %239 : vector<2x128xf32>
    %c6_115 = arith.constant 6 : index
    %c0_116 = arith.constant 0 : index
    %c0_117 = arith.constant 0 : index
    %241 = vector.load %arg8[%c6_115, %c0_116, %c0_117] : memref<8x2x128xf32, #tpu.memory_space<vmem>>, vector<1x2x128xf32>
    %242 = vector.shape_cast %241 : vector<1x2x128xf32> to vector<2x128xf32>
    %243 = vector.shape_cast %240 : vector<2x128xf32> to vector<1x2x128xf32>
    tpu.vector_store %arg8[%c6_115, %c0_116, %c0_117], %243 {strides = array<i32>} : memref<8x2x128xf32, #tpu.memory_space<vmem>>, vector<1x2x128xf32>,
    %c7 = arith.constant 7 : index
    %c0_118 = arith.constant 0 : index
    %c0_119 = arith.constant 0 : index
    %244 = vector.load %arg1[%c7, %c0_118, %c0_119] : memref<8x2x384xf32, #tpu.memory_space<vmem>>, vector<1x2x384xf32>
    %245 = vector.shape_cast %244 : vector<1x2x384xf32> to vector<2x384xf32>
    %c0_120 = arith.constant 0 : index
    %c0_121 = arith.constant 0 : index
    %246 = vector.load %arg4[%c0_120, %c0_121] : memref<128x384xf32, #tpu.memory_space<vmem>>, vector<128x384xf32>
    %cst_122 = arith.constant dense<0.000000e+00> : vector<2x384xf32>
    %247 = tpu.matmul %240, %246, %cst_122 {dimension_numbers = #tpu.dot_dimension_numbers<[1], [0], [0], [1], [0, 0, 1, 1], [], []>} : vector<2x128xf32>, vector<128x384xf32>, vector<2x384xf32> -> vector<2x384xf32>
    %248 = arith.addf %245, %247 : vector<2x384xf32>
    %c0_123 = arith.constant 0 : index
    %c0_124 = arith.constant 0 : index
    %249 = vector.load %arg5[%c0_123, %c0_124] : memref<128x256xf32, #tpu.memory_space<vmem>>, vector<128x256xf32>
    %cst_125 = arith.constant dense<0.000000e+00> : vector<2x256xf32>
    %250 = tpu.matmul %224, %249, %cst_125 {dimension_numbers = #tpu.dot_dimension_numbers<[1], [0], [0], [1], [0, 0, 1, 1], [], []>} : vector<2x128xf32>, vector<128x256xf32>, vector<2x256xf32> -> vector<2x256xf32>
    %251 = vector.extract_strided_slice %248 {offsets = [0, 256], sizes = [2, 1], strides = [1, 1]} : vector<2x384xf32> to vector<2x1xf32>
    %252 = vector.extract_strided_slice %250 {offsets = [0, 128], sizes = [2, 1], strides = [1, 1]} : vector<2x256xf32> to vector<2x1xf32>
    %253 = arith.addf %251, %252 : vector<2x1xf32>
    %254 = vector.extract_strided_slice %250 {offsets = [0, 0], sizes = [2, 128], strides = [1, 1]} : vector<2x256xf32> to vector<2x128xf32>
    %255 = vector.broadcast %253 : vector<2x1xf32> to vector<2x128xf32>
    %256 = vector.broadcast %5 : vector<1x128xf32> to vector<2x128xf32>
    %257 = arith.mulf %255, %256 : vector<2x128xf32>
    %258 = arith.addf %254, %257 : vector<2x128xf32>
    %259 = vector.extract_strided_slice %248 {offsets = [0, 0], sizes = [2, 128], strides = [1, 1]} : vector<2x384xf32> to vector<2x128xf32>
    %c0_126 = arith.constant 0 : index
    %c0_127 = arith.constant 0 : index
    %260 = vector.load %arg6[%c0_126, %c0_127] : memref<128x128xf32, #tpu.memory_space<vmem>>, vector<128x128xf32>
    %cst_128 = arith.constant dense<0.000000e+00> : vector<2x128xf32>
    %261 = tpu.matmul %258, %260, %cst_128 {dimension_numbers = #tpu.dot_dimension_numbers<[1], [0], [0], [1], [0, 0, 1, 1], [], []>} : vector<2x128xf32>, vector<128x128xf32>, vector<2x128xf32> -> vector<2x128xf32>
    %262 = arith.addf %259, %261 : vector<2x128xf32>
    %263 = math.tanh %262 : vector<2x128xf32>
    %264 = vector.extract_strided_slice %248 {offsets = [0, 128], sizes = [2, 128], strides = [1, 1]} : vector<2x384xf32> to vector<2x128xf32>
    %265 = arith.negf %264 : vector<2x128xf32>
    %266 = math.exp %265 : vector<2x128xf32>
    %cst_129 = arith.constant 1.000000e+00 : f32
    %267 = vector.broadcast %cst_129 : f32 to vector<2x128xf32>
    %268 = arith.addf %267, %266 : vector<2x128xf32>
    %269 = arith.divf %267, %268 : vector<2x128xf32>
    %270 = arith.mulf %269, %263 : vector<2x128xf32>
    %cst_130 = arith.constant 1.000000e+00 : f32
    %271 = vector.broadcast %cst_130 : f32 to vector<2x128xf32>
    %272 = arith.subf %271, %269 : vector<2x128xf32>
    %273 = arith.mulf %272, %240 : vector<2x128xf32>
    %274 = arith.addf %270, %273 : vector<2x128xf32>
    %c7_131 = arith.constant 7 : index
    %c0_132 = arith.constant 0 : index
    %c0_133 = arith.constant 0 : index
    %275 = vector.load %arg8[%c7_131, %c0_132, %c0_133] : memref<8x2x128xf32, #tpu.memory_space<vmem>>, vector<1x2x128xf32>
    %276 = vector.shape_cast %275 : vector<1x2x128xf32> to vector<2x128xf32>
    %277 = vector.shape_cast %274 : vector<2x128xf32> to vector<1x2x128xf32>
    tpu.vector_store %arg8[%c7_131, %c0_132, %c0_133], %277 {strides = array<i32>} : memref<8x2x128xf32, #tpu.memory_space<vmem>>, vector<1x2x128xf32>,
    %c0_134 = arith.constant 0 : index
    %c0_135 = arith.constant 0 : index
    %278 = vector.load %arg11[%c0_134, %c0_135] : memref<2x128xf32, #tpu.memory_space<vmem>>, vector<2x128xf32>
    tpu.vector_store %arg11[%c0_134, %c0_135], %274 {strides = array<i32>} : memref<2x128xf32, #tpu.memory_space<vmem>>, vector<2x128xf32>,
    %c0_136 = arith.constant 0 : index
    %c0_137 = arith.constant 0 : index
    %279 = vector.load %arg12[%c0_136, %c0_137] : memref<2x128xf32, #tpu.memory_space<vmem>>, vector<2x128xf32>
    tpu.vector_store %arg12[%c0_136, %c0_137], %258 {strides = array<i32>} : memref<2x128xf32, #tpu.memory_space<vmem>>, vector<2x128xf32>,
    %c0_i32_138 = arith.constant 0 : i32
    %280 = arith.cmpi eq, %arg0, %c0_i32_138 : i32
    %281 = arith.extui %280 : i1 to i32
    %c0_i32_139 = arith.constant 0 : i32
    %282 = arith.cmpi ne, %281, %c0_i32_139 : i32
    scf.if %282 {
      %c0_140 = arith.constant 0 : index
      %c0_141 = arith.constant 0 : index
      %283 = vector.load %arg9[%c0_140, %c0_141] : memref<2x128xf32, #tpu.memory_space<vmem>>, vector<2x128xf32>
      tpu.vector_store %arg9[%c0_140, %c0_141], %274 {strides = array<i32>} : memref<2x128xf32, #tpu.memory_space<vmem>>, vector<2x128xf32>,
      %c0_142 = arith.constant 0 : index
      %c0_143 = arith.constant 0 : index
      %284 = vector.load %arg10[%c0_142, %c0_143] : memref<2x128xf32, #tpu.memory_space<vmem>>, vector<2x128xf32>
      tpu.vector_store %arg10[%c0_142, %c0_143], %258 {strides = array<i32>} : memref<2x128xf32, #tpu.memory_space<vmem>>, vector<2x128xf32>,
    } else {
    }
    return
  }
  func.func @transform_0(%arg0: i32) -> (i32, i32, i32) {
    %c0_i32 = arith.constant 0 : i32
    %c0_i32_0 = arith.constant 0 : i32
    %c0_i32_1 = arith.constant 0 : i32
    return %arg0, %c0_i32, %c0_i32_0 : i32, i32, i32
  }
  func.func @transform_1(%arg0: i32) -> (i32, i32) {
    %c0_i32 = arith.constant 0 : i32
    %c0_i32_0 = arith.constant 0 : i32
    %c0_i32_1 = arith.constant 0 : i32
    return %c0_i32, %c0_i32_0 : i32, i32
  }
  func.func @transform_2(%arg0: i32) -> (i32, i32) {
    %c0_i32 = arith.constant 0 : i32
    %c0_i32_0 = arith.constant 0 : i32
    %c0_i32_1 = arith.constant 0 : i32
    return %c0_i32, %c0_i32_0 : i32, i32
  }
  func.func @transform_3(%arg0: i32) -> (i32, i32) {
    %c0_i32 = arith.constant 0 : i32
    %c0_i32_0 = arith.constant 0 : i32
    %c0_i32_1 = arith.constant 0 : i32
    return %c0_i32, %c0_i32_0 : i32, i32
  }
  func.func @transform_4(%arg0: i32) -> (i32, i32) {
    %c0_i32 = arith.constant 0 : i32
    %c0_i32_0 = arith.constant 0 : i32
    %c0_i32_1 = arith.constant 0 : i32
    return %c0_i32, %c0_i32_0 : i32, i32
  }
  func.func @transform_5(%arg0: i32) -> (i32, i32) {
    %c0_i32 = arith.constant 0 : i32
    %c0_i32_0 = arith.constant 0 : i32
    %c0_i32_1 = arith.constant 0 : i32
    return %c0_i32, %c0_i32_0 : i32, i32
  }
  func.func @transform_6(%arg0: i32) -> (i32, i32) {
    %c0_i32 = arith.constant 0 : i32
    %c0_i32_0 = arith.constant 0 : i32
    %c0_i32_1 = arith.constant 0 : i32
    return %c0_i32, %c0_i32_0 : i32, i32
  }
  func.func @transform_7(%arg0: i32) -> (i32, i32, i32) {
    %c0_i32 = arith.constant 0 : i32
    %c0_i32_0 = arith.constant 0 : i32
    %c0_i32_1 = arith.constant 0 : i32
    return %arg0, %c0_i32, %c0_i32_0 : i32, i32, i32
  }
  func.func @transform_8(%arg0: i32) -> (i32, i32) {
    %c0_i32 = arith.constant 0 : i32
    %c0_i32_0 = arith.constant 0 : i32
    %c0_i32_1 = arith.constant 0 : i32
    return %c0_i32, %c0_i32_0 : i32, i32
  }
  func.func @transform_9(%arg0: i32) -> (i32, i32) {
    %c0_i32 = arith.constant 0 : i32
    %c0_i32_0 = arith.constant 0 : i32
    %c0_i32_1 = arith.constant 0 : i32
    return %c0_i32, %c0_i32_0 : i32, i32
  }
}

</mosaic_0001>

<llo_original>
// kernel: lmu_gate_forward.1
$region0: #{lmu_gate_forward.1}
  #allocation0 [shape = 'u32[]', space=smem, size = 0x4, offset = 0x4, fixed_abs, tag = 'smem constant byte address 0x4 - core index']
  #allocation1 [shape = 'u32[72,128]{1,0:T(1,128)}', space=vmem, size = 0x9000, scoped, tag = 'internal scratch']
  #allocation2 [shape = 'f32[2,128]{1,0:T(2,128)}', space=vmem, size = 0x400, scoped, tag = 'scratch operand']
  #allocation3 [shape = 'f32[2,128]{1,0:T(2,128)}', space=vmem, size = 0x400, scoped, tag = 'scratch operand']
  %s0 = inlined_call_operand.vmem [shape: f32[8,2,384], index: 0, kind: input, shape index: {}]
  %s1 = inlined_call_operand.vmem [shape: f32[2,128], index: 1, kind: input, shape index: {}]
  %s2 = inlined_call_operand.vmem [shape: f32[2,128], index: 2, kind: input, shape index: {}]
  %s3 = inlined_call_operand.hbm [shape: f32[128,384], index: 3, kind: input, shape index: {}]
  %s4 = inlined_call_operand.hbm [shape: f32[128,256], index: 4, kind: input, shape index: {}]
  %s5 = inlined_call_operand.vmem [shape: f32[128,128], index: 5, kind: input, shape index: {}]
  %s6 = inlined_call_operand.vmem [shape: f32[1,128], index: 6, kind: input, shape index: {}]
  %s7 = inlined_call_operand.vmem [shape: f32[8,2,128], index: 7, kind: output, shape index: {0}]
  %s8 = inlined_call_operand.hbm [shape: f32[2,128], index: 8, kind: output, shape index: {1}]
  %s9 = inlined_call_operand.hbm [shape: f32[2,128], index: 9, kind: output, shape index: {2}]
  %10 = xla_tuple %s7, %s8, %s9
  %s11 = sld [smem:[#allocation0]]
  $region70: #{lmu_gate_forward.1} parent=0
    _
  %s13 = ssub.s32 1, %s11
  %s14 = scalar_select 0, %s13, %s11
  $region1: #{lmu_gate_forward.1} parent=0
    #allocation4 [shape = 'u8[196608]{0}', space=vmem, size = 0x30000, scoped, tag = 'input window, operand 3, single buffered']
    #allocation5 [shape = 's32[1]{0}', space=sflag, size = 0x4, scoped, tag = 'scoped memory for lmu_gate_forward.1']
    #allocation6 [shape = 's32[1]{0}', space=sflag, size = 0x4, scoped, tag = 'scoped memory for lmu_gate_forward.1']
    #allocation7 [shape = 'u8[131072]{0}', space=vmem, size = 0x20000, scoped, tag = 'input window, operand 4, single buffered']
    #allocation8 [shape = 's32[1]{0}', space=sflag, size = 0x4, scoped, tag = 'scoped memory for lmu_gate_forward.1']
    #allocation9 [shape = 'u8[1024]{0}', space=vmem, size = 0x400, scoped, tag = 'output window, operand 1, single buffered']
    #allocation10 [shape = 'u8[1024]{0}', space=vmem, size = 0x400, scoped, tag = 'output window, operand 2, single buffered']
    #allocation11 [shape = 's32[1]{0}', space=sflag, size = 0x4, scoped, tag = 'scoped memory for lmu_gate_forward.1']
    %15 = vsyncpa [#allocation5], 0
    %16 = vsyncpa [#allocation8], 0
    %17 = vsyncpa [#allocation6], 0
    %18 = vsyncpa [#allocation11], 0
    // Predicated region
    $region2: #{lmu_gate_forward.1} parent=1 // pred_check
      _
    $region3: #{lmu_gate_forward.1} parent=1 // pred_check_branch
      %20 = sbr.rel (0) target = $region5
    $region4: #{lmu_gate_forward.1} parent=1 // pred_region
      _
    $region5: #{lmu_gate_forward.1} parent=1 // pred_fallthru
      _
    // Predicated region
    $region6: #{lmu_gate_forward.1} parent=1 // pred_check
      _
    $region7: #{lmu_gate_forward.1} parent=1 // pred_check_branch
      %22 = sbr.rel (0) target = $region9
    $region8: #{lmu_gate_forward.1} parent=1 // pred_region
      _
    $region9: #{lmu_gate_forward.1} parent=1 // pred_fallthru
      _
    // Predicated region
    $region10: #{lmu_gate_forward.1} parent=1 // pred_check
      _
    $region11: #{lmu_gate_forward.1} parent=1 // pred_check_branch
      %24 = sbr.rel (0) target = $region13
    $region12: #{lmu_gate_forward.1} parent=1 // pred_region
      _
    $region13: #{lmu_gate_forward.1} parent=1 // pred_fallthru
      _
    // Predicated region
    $region14: #{lmu_gate_forward.1} parent=1 // pred_check
      _
    $region15: #{lmu_gate_forward.1} parent=1 // pred_check_branch
      %26 = sbr.rel (0) target = $region17
    $region16: #{lmu_gate_forward.1} parent=1 // pred_region
      %28 = vsyncadd [#allocation5], 0
      %s29 = sshll.u32 %s3, 4
      %s30 = int_to_ptr.hbm [resolvable:$true] %s29
      %s31 = sshll.u32 [#allocation4], 4
      %s32 = int_to_ptr.vmem [resolvable:$true] %s31
      %37 = dma.hbm_to_vmem [thread:$0]  %s30, 6144, %s32, [#allocation5], 384, 384, 24
    $region17: #{lmu_gate_forward.1} parent=1 // pred_fallthru
      _
    // Predicated region
    $region18: #{lmu_gate_forward.1} parent=1 // pred_check
      _
    $region19: #{lmu_gate_forward.1} parent=1 // pred_check_branch
      %39 = sbr.rel (0) target = $region21
    $region20: #{lmu_gate_forward.1} parent=1 // pred_region
      %41 = vsyncadd [#allocation8], 0
      %s42 = sshll.u32 %s4, 4
      %s43 = int_to_ptr.hbm [resolvable:$true] %s42
      %s44 = sshll.u32 [#allocation7], 4
      %s45 = int_to_ptr.vmem [resolvable:$true] %s44
      %50 = dma.hbm_to_vmem [thread:$0]  %s43, 4096, %s45, [#allocation8], 256, 256, 16
    $region21: #{lmu_gate_forward.1} parent=1 // pred_fallthru
      _
    // Predicated region
    $region22: #{lmu_gate_forward.1} parent=1 // pred_check
      _
    $region23: #{lmu_gate_forward.1} parent=1 // pred_check_branch
      %52 = sbr.rel (0) target = $region25
    $region24: #{lmu_gate_forward.1} parent=1 // pred_region
      _
    $region25: #{lmu_gate_forward.1} parent=1 // pred_fallthru
      _
    // Predicated region
    $region26: #{lmu_gate_forward.1} parent=1 // pred_check
      _
    $region27: #{lmu_gate_forward.1} parent=1 // pred_check_branch
      %54 = sbr.rel (0) target = $region29
    $region28: #{lmu_gate_forward.1} parent=1 // pred_region
      _
    $region29: #{lmu_gate_forward.1} parent=1 // pred_fallthru
      _
    // Predicated region
    $region30: #{lmu_gate_forward.1} parent=1 // pred_check
      _
    $region31: #{lmu_gate_forward.1} parent=1 // pred_check_branch
      %56 = sbr.rel (0) target = $region33
    $region32: #{lmu_gate_forward.1} parent=1 // pred_region
      %58 = dma.done [#allocation5], 6144
    $region33: #{lmu_gate_forward.1} parent=1 // pred_fallthru
      _
    // Predicated region
    $region34: #{lmu_gate_forward.1} parent=1 // pred_check
      _
    $region35: #{lmu_gate_forward.1} parent=1 // pred_check_branch
      %60 = sbr.rel (0) target = $region37
    $region36: #{lmu_gate_forward.1} parent=1 // pred_region
      %62 = dma.done [#allocation8], 4096
    $region37: #{lmu_gate_forward.1} parent=1 // pred_fallthru
      _
    %p63 = scmp.eq.s32.totalorder 0, 0
    // Predicated region
    $region38: #{lmu_gate_forward.1} parent=1 // pred_check
      %p64 = pneg %p63
    $region39: #{lmu_gate_forward.1} parent=1 // pred_check_branch
      %66 = sbr.rel (%p64) target = $region41
    $region40: #{lmu_gate_forward.1} parent=1 // pred_region
      %v67 = vld [vmem:[%s1] sm:$0x3]
      %68 = vst [vmem:[#allocation2] sm:$0x3] %v67
      %v69 = vld [vmem:[%s2] sm:$0x3]
      %70 = vst [vmem:[#allocation3] sm:$0x3] %v69
    $region41: #{lmu_gate_forward.1} parent=1 // pred_fallthru
      _
    %v71 = vld [vmem:[#allocation2] sm:$0x3]
    %v72 = vld [vmem:[#allocation3] sm:$0x3]
    %v73 = vld [vmem:[%s6] sm:$0x1]
    %v74 = vld [vmem:[%s0] sm:$0x3f]
    %v75 = vld [vmem:[#allocation4] sm:$0xff]
    %v76 = vld [vmem:[#allocation4 + $0x8] sm:$0xff]
    %v77 = vld [vmem:[#allocation4 + $0x10] sm:$0xff]
    %v78 = vld [vmem:[#allocation4 + $0x18] sm:$0xff]
    %v79 = vld [vmem:[#allocation4 + $0x20] sm:$0xff]
    %v80 = vld [vmem:[#allocation4 + $0x28] sm:$0xff]
    %v81 = vld [vmem:[#allocation4 + $0x30] sm:$0xff]
    %v82 = vld [vmem:[#allocation4 + $0x38] sm:$0xff]
    %v83 = vld [vmem:[#allocation4 + $0x40] sm:$0xff]
    %v84 = vld [vmem:[#allocation4 + $0x48] sm:$0xff]
    %v85 = vld [vmem:[#allocation4 + $0x50] sm:$0xff]
    %v86 = vld [vmem:[#allocation4 + $0x58] sm:$0xff]
    %v87 = vld [vmem:[#allocation4 + $0x60] sm:$0xff]
    %v88 = vld [vmem:[#allocation4 + $0x68] sm:$0xff]
    %v89 = vld [vmem:[#allocation4 + $0x70] sm:$0xff]
    %v90 = vld [vmem:[#allocation4 + $0x78] sm:$0xff]
    %v91 = vld [vmem:[#allocation4 + $0x80] sm:$0xff]
    %v92 = vld [vmem:[#allocation4 + $0x88] sm:$0xff]
    %v93 = vld [vmem:[#allocation4 + $0x90] sm:$0xff]
    %v94 = vld [vmem:[#allocation4 + $0x98] sm:$0xff]
    %v95 = vld [vmem:[#allocation4 + $0xa0] sm:$0xff]
    %v96 = vld [vmem:[#allocation4 + $0xa8] sm:$0xff]
    %v97 = vld [vmem:[#allocation4 + $0xb0] sm:$0xff]
    %v98 = vld [vmem:[#allocation4 + $0xb8] sm:$0xff]
    %v99 = vld [vmem:[#allocation4 + $0xc0] sm:$0xff]
    %v100 = vld [vmem:[#allocation4 + $0xc8] sm:$0xff]
    %v101 = vld [vmem:[#allocation4 + $0xd0] sm:$0xff]
    %v102 = vld [vmem:[#allocation4 + $0xd8] sm:$0xff]
    %v103 = vld [vmem:[#allocation4 + $0xe0] sm:$0xff]
    %v104 = vld [vmem:[#allocation4 + $0xe8] sm:$0xff]
    %v105 = vld [vmem:[#allocation4 + $0xf0] sm:$0xff]
    %v106 = vld [vmem:[#allocation4 + $0xf8] sm:$0xff]
    %v107 = vld [vmem:[#allocation4 + $0x100] sm:$0xff]
    %v108 = vld [vmem:[#allocation4 + $0x108] sm:$0xff]
    %v109 = vld [vmem:[#allocation4 + $0x110] sm:$0xff]
    %v110 = vld [vmem:[#allocation4 + $0x118] sm:$0xff]
    %v111 = vld [vmem:[#allocation4 + $0x120] sm:$0xff]
    %v112 = vld [vmem:[#allocation4 + $0x128] sm:$0xff]
    %v113 = vld [vmem:[#allocation4 + $0x130] sm:$0xff]
    %v114 = vld [vmem:[#allocation4 + $0x138] sm:$0xff]
    %v115 = vld [vmem:[#allocation4 + $0x140] sm:$0xff]
    %v116 = vld [vmem:[#allocation4 + $0x148] sm:$0xff]
    %v117 = vld [vmem:[#allocation4 + $0x150] sm:$0xff]
    %v118 = vld [vmem:[#allocation4 + $0x158] sm:$0xff]
    %v119 = vld [vmem:[#allocation4 + $0x160] sm:$0xff]
    %v120 = vld [vmem:[#allocation4 + $0x168] sm:$0xff]
    %v121 = vld [vmem:[#allocation4 + $0x170] sm:$0xff]
    %v122 = vld [vmem:[#allocation4 + $0x178] sm:$0xff]
    %123 = vmatpush.msra.mxu0 %v120
    %124 = vmatpush.msra.mxu0 %v117
    %125 = vmatpush.msra.mxu0 %v114
    %126 = vmatpush.msra.mxu0 %v111
    %127 = vmatpush.msra.mxu0 %v108
    %128 = vmatpush.msra.mxu0 %v105
    %129 = vmatpush.msra.mxu0 %v102
    %130 = vmatpush.msra.mxu0 %v99
    %131 = vmatpush.msra.mxu0 %v96
    %132 = vmatpush.msra.mxu0 %v93
    %133 = vmatpush.msra.mxu0 %v90
    %134 = vmatpush.msra.mxu0 %v87
    %135 = vmatpush.msra.mxu0 %v84
    %136 = vmatpush.msra.mxu0 %v81
    %137 = vmatpush.msra.mxu0 %v78
    %138 = vmatpush.msra.mxu0 %v75
    %139 = vmatmul.f32.gmra.mxu0 %v71
    %v140 = vpop.f32.mrf.mxu0
    %v141 = vadd.f32 0.0, %v140
    %142 = vdwg.mxu0
    %143 = vmatpush.msra.mxu0 %v121
    %144 = vmatpush.msra.mxu0 %v118
    %145 = vmatpush.msra.mxu0 %v115
    %146 = vmatpush.msra.mxu0 %v112
    %147 = vmatpush.msra.mxu0 %v109
    %148 = vmatpush.msra.mxu0 %v106
    %149 = vmatpush.msra.mxu0 %v103
    %150 = vmatpush.msra.mxu0 %v100
    %151 = vmatpush.msra.mxu0 %v97
    %152 = vmatpush.msra.mxu0 %v94
    %153 = vmatpush.msra.mxu0 %v91
    %154 = vmatpush.msra.mxu0 %v88
    %155 = vmatpush.msra.mxu0 %v85
    %156 = vmatpush.msra.mxu0 %v82
    %157 = vmatpush.msra.mxu0 %v79
    %158 = vmatpush.msra.mxu0 %v76
    %159 = vmatmul.f32.gmra.mxu0 %v71
    %v160 = vpop.f32.mrf.mxu0
    %v161 = vadd.f32 0.0, %v160
    %162 = vdwg.mxu0
    %163 = vmatpush.msra.mxu0 %v122
    %164 = vmatpush.msra.mxu0 %v119
    %165 = vmatpush.msra.mxu0 %v116
    %166 = vmatpush.msra.mxu0 %v113
    %167 = vmatpush.msra.mxu0 %v110
    %168 = vmatpush.msra.mxu0 %v107
    %169 = vmatpush.msra.mxu0 %v104
    %170 = vmatpush.msra.mxu0 %v101
    %171 = vmatpush.msra.mxu0 %v98
    %172 = vmatpush.msra.mxu0 %v95
    %173 = vmatpush.msra.mxu0 %v92
    %174 = vmatpush.msra.mxu0 %v89
    %175 = vmatpush.msra.mxu0 %v86
    %176 = vmatpush.msra.mxu0 %v83
    %177 = vmatpush.msra.mxu0 %v80
    %178 = vmatpush.msra.mxu0 %v77
    %179 = vmatmul.f32.gmra.mxu0 %v71
    %v180 = vpop.f32.mrf.mxu0
    %v181 = vadd.f32 0.0, %v180
    %182 = vdwg.mxu0
    %v186 = vrot.slane %v161, 6
    %v187 = vrot.slane %v181, 4
    %vm188 = vcmask 1041408
    %v189 = vsel %vm188, %v141, %v186
    %vm190 = vcmask 1043456
    %v191 = vsel %vm190, %v189, %v187
    %v193 = vadd.f32 %v74, %v191
    %v194 = vld [vmem:[#allocation7] sm:$0xff]
    %v195 = vld [vmem:[#allocation7 + $0x8] sm:$0xff]
    %v196 = vld [vmem:[#allocation7 + $0x10] sm:$0xff]
    %v197 = vld [vmem:[#allocation7 + $0x18] sm:$0xff]
    %v198 = vld [vmem:[#allocation7 + $0x20] sm:$0xff]
    %v199 = vld [vmem:[#allocation7 + $0x28] sm:$0xff]
    %v200 = vld [vmem:[#allocation7 + $0x30] sm:$0xff]
    %v201 = vld [vmem:[#allocation7 + $0x38] sm:$0xff]
    %v202 = vld [vmem:[#allocation7 + $0x40] sm:$0xff]
    %v203 = vld [vmem:[#allocation7 + $0x48] sm:$0xff]
    %v204 = vld [vmem:[#allocation7 + $0x50] sm:$0xff]
    %v205 = vld [vmem:[#allocation7 + $0x58] sm:$0xff]
    %v206 = vld [vmem:[#allocation7 + $0x60] sm:$0xff]
    %v207 = vld [vmem:[#allocation7 + $0x68] sm:$0xff]
    %v208 = vld [vmem:[#allocation7 + $0x70] sm:$0xff]
    %v209 = vld [vmem:[#allocation7 + $0x78] sm:$0xff]
    %v210 = vld [vmem:[#allocation7 + $0x80] sm:$0xff]
    %v211 = vld [vmem:[#allocation7 + $0x88] sm:$0xff]
    %v212 = vld [vmem:[#allocation7 + $0x90] sm:$0xff]
    %v213 = vld [vmem:[#allocation7 + $0x98] sm:$0xff]
    %v214 = vld [vmem:[#allocation7 + $0xa0] sm:$0xff]
    %v215 = vld [vmem:[#allocation7 + $0xa8] sm:$0xff]
    %v216 = vld [vmem:[#allocation7 + $0xb0] sm:$0xff]
    %v217 = vld [vmem:[#allocation7 + $0xb8] sm:$0xff]
    %v218 = vld [vmem:[#allocation7 + $0xc0] sm:$0xff]
    %v219 = vld [vmem:[#allocation7 + $0xc8] sm:$0xff]
    %v220 = vld [vmem:[#allocation7 + $0xd0] sm:$0xff]
    %v221 = vld [vmem:[#allocation7 + $0xd8] sm:$0xff]
    %v222 = vld [vmem:[#allocation7 + $0xe0] sm:$0xff]
    %v223 = vld [vmem:[#allocation7 + $0xe8] sm:$0xff]
    %v224 = vld [vmem:[#allocation7 + $0xf0] sm:$0xff]
    %v225 = vld [vmem:[#allocation7 + $0xf8] sm:$0xff]
    %226 = vmatpush.msra.mxu0 %v224
    %227 = vmatpush.msra.mxu0 %v222
    %228 = vmatpush.msra.mxu0 %v220
    %229 = vmatpush.msra.mxu0 %v218
    %230 = vmatpush.msra.mxu0 %v216
    %231 = vmatpush.msra.mxu0 %v214
    %232 = vmatpush.msra.mxu0 %v212
    %233 = vmatpush.msra.mxu0 %v210
    %234 = vmatpush.msra.mxu0 %v208
    %235 = vmatpush.msra.mxu0 %v206
    %236 = vmatpush.msra.mxu0 %v204
    %237 = vmatpush.msra.mxu0 %v202
    %238 = vmatpush.msra.mxu0 %v200
    %239 = vmatpush.msra.mxu0 %v198
    %240 = vmatpush.msra.mxu0 %v196
    %241 = vmatpush.msra.mxu0 %v194
    %242 = vmatmul.f32.gmra.mxu0 %v72
    %v243 = vpop.f32.mrf.mxu0
    %v244 = vadd.f32 0.0, %v243
    %245 = vdwg.mxu0
    %246 = vmatpush.msra.mxu0 %v225
    %247 = vmatpush.msra.mxu0 %v223
    %248 = vmatpush.msra.mxu0 %v221
    %249 = vmatpush.msra.mxu0 %v219
    %250 = vmatpush.msra.mxu0 %v217
    %251 = vmatpush.msra.mxu0 %v215
    %252 = vmatpush.msra.mxu0 %v213
    %253 = vmatpush.msra.mxu0 %v211
    %254 = vmatpush.msra.mxu0 %v209
    %255 = vmatpush.msra.mxu0 %v207
    %256 = vmatpush.msra.mxu0 %v205
    %257 = vmatpush.msra.mxu0 %v203
    %258 = vmatpush.msra.mxu0 %v201
    %259 = vmatpush.msra.mxu0 %v199
    %260 = vmatpush.msra.mxu0 %v197
    %261 = vmatpush.msra.mxu0 %v195
    %262 = vmatmul.f32.gmra.mxu0 %v72
    %v263 = vpop.f32.mrf.mxu0
    %v264 = vadd.f32 0.0, %v263
    %265 = vdwg.mxu0
    %v267 = vrot.slane %v193, 4
    %v269 = vadd.f32 %v267, %v264
    %271 = vset.pattern.permute.xlu0 0
    %272 = vperm.xlu0 %271, %v269
    %v273 = vpop.permute.xlu0 %272
    %v276 = vunpack.c.l.s4 269488144
    %v277 = vunpack.c.0.s8 %v276
    %v278 = vperm.slane %v273, %v277
    %v280 = vperm.slane %v73, 0
    %v282 = vmul.f32 %v278, %v280
    %v283 = vadd.f32 %v244, %v282
    %v284 = vld [vmem:[%s5] sm:$0xff]
    %v285 = vld [vmem:[%s5 + $0x8] sm:$0xff]
    %v286 = vld [vmem:[%s5 + $0x10] sm:$0xff]
    %v287 = vld [vmem:[%s5 + $0x18] sm:$0xff]
    %v288 = vld [vmem:[%s5 + $0x20] sm:$0xff]
    %v289 = vld [vmem:[%s5 + $0x28] sm:$0xff]
    %v290 = vld [vmem:[%s5 + $0x30] sm:$0xff]
    %v291 = vld [vmem:[%s5 + $0x38] sm:$0xff]
    %v292 = vld [vmem:[%s5 + $0x40] sm:$0xff]
    %v293 = vld [vmem:[%s5 + $0x48] sm:$0xff]
    %v294 = vld [vmem:[%s5 + $0x50] sm:$0xff]
    %v295 = vld [vmem:[%s5 + $0x58] sm:$0xff]
    %v296 = vld [vmem:[%s5 + $0x60] sm:$0xff]
    %v297 = vld [vmem:[%s5 + $0x68] sm:$0xff]
    %v298 = vld [vmem:[%s5 + $0x70] sm:$0xff]
    %v299 = vld [vmem:[%s5 + $0x78] sm:$0xff]
    %300 = vmatpush.msra.mxu0 %v299
    %301 = vmatpush.msra.mxu0 %v298
    %302 = vmatpush.msra.mxu0 %v297
    %303 = vmatpush.msra.mxu0 %v296
    %304 = vmatpush.msra.mxu0 %v295
    %305 = vmatpush.msra.mxu0 %v294
    %306 = vmatpush.msra.mxu0 %v293
    %307 = vmatpush.msra.mxu0 %v292
    %308 = vmatpush.msra.mxu0 %v291
    %309 = vmatpush.msra.mxu0 %v290
    %310 = vmatpush.msra.mxu0 %v289
    %311 = vmatpush.msra.mxu0 %v288
    %312 = vmatpush.msra.mxu0 %v287
    %313 = vmatpush.msra.mxu0 %v286
    %314 = vmatpush.msra.mxu0 %v285
    %315 = vmatpush.msra.mxu0 %v284
    %316 = vmatmul.f32.gmra.mxu0 %v283
    %v317 = vpop.f32.mrf.mxu0
    %v318 = vadd.f32 0.0, %v317
    %319 = vdwg.mxu0
    %v320 = vadd.f32 %v193, %v318
    %v321 = vtanh.pop %v320
    %v322 = vrot.slane %v193, 2
    %v324 = vxor.u32 %v322, 2147483648
    %v325 = vmul.f32 %v324, 1.442695
    %v326 = vpow.pop %v325
    %v327 = vadd.f32 %v326, 1.0
    %v328 = vrcp.pop %v327
    %v329 = vmul.f32 %v327, %v328
    %v330 = vsub.f32 1.0, %v329
    %v331 = vmul.f32 %v328, %v330
    %v332 = vadd.f32 %v328, %v331
    %vm333 = vweird.f32 %v327
    %vm334 = vweird.f32 %v328
    %vm335 = vmor %vm333, %vm334
    %v336 = vsel %vm335, %v328, %v332
    %v337 = vand.u32 2147483647, %v327
    %vm338 = vcmp.eq.f32.partialorder %v337, 8.507059e+37
    %v339 = vand.u32 %v327, 2147483648
    %v340 = vor.u32 1.1754944e-38, %v339
    %v341 = vsel %vm338, %v340, %v336
    %v342 = vmul.f32 1.0, %v341
    %v343 = vmul.f32 %v342, %v321
    %v344 = vsub.f32 1.0, %v342
    %v345 = vmul.f32 %v344, %v71
    %v346 = vadd.f32 %v343, %v345
    %347 = vst [vmem:[%s7] sm:$0x3] %v346
    %s348 = scalar_lea.vmem %s0, 6
    %v349 = vld [vmem:[%s348] sm:$0x3f]
    %v350 = vld [vmem:[#allocation4] sm:$0xff]
    %v351 = vld [vmem:[#allocation4 + $0x8] sm:$0xff]
    %v352 = vld [vmem:[#allocation4 + $0x10] sm:$0xff]
    %v353 = vld [vmem:[#allocation4 + $0x18] sm:$0xff]
    %v354 = vld [vmem:[#allocation4 + $0x20] sm:$0xff]
    %v355 = vld [vmem:[#allocation4 + $0x28] sm:$0xff]
    %v356 = vld [vmem:[#allocation4 + $0x30] sm:$0xff]
    %v357 = vld [vmem:[#allocation4 + $0x38] sm:$0xff]
    %v358 = vld [vmem:[#allocation4 + $0x40] sm:$0xff]
    %v359 = vld [vmem:[#allocation4 + $0x48] sm:$0xff]
    %v360 = vld [vmem:[#allocation4 + $0x50] sm:$0xff]
    %v361 = vld [vmem:[#allocation4 + $0x58] sm:$0xff]
    %v362 = vld [vmem:[#allocation4 + $0x60] sm:$0xff]
    %v363 = vld [vmem:[#allocation4 + $0x68] sm:$0xff]
    %v364 = vld [vmem:[#allocation4 + $0x70] sm:$0xff]
    %v365 = vld [vmem:[#allocation4 + $0x78] sm:$0xff]
    %v366 = vld [vmem:[#allocation4 + $0x80] sm:$0xff]
    %v367 = vld [vmem:[#allocation4 + $0x88] sm:$0xff]
    %v368 = vld [vmem:[#allocation4 + $0x90] sm:$0xff]
    %v369 = vld [vmem:[#allocation4 + $0x98] sm:$0xff]
    %v370 = vld [vmem:[#allocation4 + $0xa0] sm:$0xff]
    %v371 = vld [vmem:[#allocation4 + $0xa8] sm:$0xff]
    %v372 = vld [vmem:[#allocation4 + $0xb0] sm:$0xff]
    %v373 = vld [vmem:[#allocation4 + $0xb8] sm:$0xff]
    %v374 = vld [vmem:[#allocation4 + $0xc0] sm:$0xff]
    %v375 = vld [vmem:[#allocation4 + $0xc8] sm:$0xff]
    %v376 = vld [vmem:[#allocation4 + $0xd0] sm:$0xff]
    %v377 = vld [vmem:[#allocation4 + $0xd8] sm:$0xff]
    %v378 = vld [vmem:[#allocation4 + $0xe0] sm:$0xff]
    %v379 = vld [vmem:[#allocation4 + $0xe8] sm:$0xff]
    %v380 = vld [vmem:[#allocation4 + $0xf0] sm:$0xff]
    %v381 = vld [vmem:[#allocation4 + $0xf8] sm:$0xff]
    %v382 = vld [vmem:[#allocation4 + $0x100] sm:$0xff]
    %v383 = vld [vmem:[#allocation4 + $0x108] sm:$0xff]
    %v384 = vld [vmem:[#allocation4 + $0x110] sm:$0xff]
    %v385 = vld [vmem:[#allocation4 + $0x118] sm:$0xff]
    %v386 = vld [vmem:[#allocation4 + $0x120] sm:$0xff]
    %v387 = vld [vmem:[#allocation4 + $0x128] sm:$0xff]
    %v388 = vld [vmem:[#allocation4 + $0x130] sm:$0xff]
    %v389 = vld [vmem:[#allocation4 + $0x138] sm:$0xff]
    %v390 = vld [vmem:[#allocation4 + $0x140] sm:$0xff]
    %v391 = vld [vmem:[#allocation4 + $0x148] sm:$0xff]
    %v392 = vld [vmem:[#allocation4 + $0x150] sm:$0xff]
    %v393 = vld [vmem:[#allocation4 + $0x158] sm:$0xff]
    %v394 = vld [vmem:[#allocation4 + $0x160] sm:$0xff]
    %v395 = vld [vmem:[#allocation4 + $0x168] sm:$0xff]
    %v396 = vld [vmem:[#allocation4 + $0x170] sm:$0xff]
    %v397 = vld [vmem:[#allocation4 + $0x178] sm:$0xff]
    %398 = vmatpush.msra.mxu0 %v395
    %399 = vmatpush.msra.mxu0 %v392
    %400 = vmatpush.msra.mxu0 %v389
    %401 = vmatpush.msra.mxu0 %v386
    %402 = vmatpush.msra.mxu0 %v383
    %403 = vmatpush.msra.mxu0 %v380
    %404 = vmatpush.msra.mxu0 %v377
    %405 = vmatpush.msra.mxu0 %v374
    %406 = vmatpush.msra.mxu0 %v371
    %407 = vmatpush.msra.mxu0 %v368
    %408 = vmatpush.msra.mxu0 %v365
    %409 = vmatpush.msra.mxu0 %v362
    %410 = vmatpush.msra.mxu0 %v359
    %411 = vmatpush.msra.mxu0 %v356
    %412 = vmatpush.msra.mxu0 %v353
    %413 = vmatpush.msra.mxu0 %v350
    %414 = vmatmul.f32.gmra.mxu0 %v346
    %v415 = vpop.f32.mrf.mxu0
    %v416 = vadd.f32 0.0, %v415
    %417 = vdwg.mxu0
    %418 = vmatpush.msra.mxu0 %v396
    %419 = vmatpush.msra.mxu0 %v393
    %420 = vmatpush.msra.mxu0 %v390
    %421 = vmatpush.msra.mxu0 %v387
    %422 = vmatpush.msra.mxu0 %v384
    %423 = vmatpush.msra.mxu0 %v381
    %424 = vmatpush.msra.mxu0 %v378
    %425 = vmatpush.msra.mxu0 %v375
    %426 = vmatpush.msra.mxu0 %v372
    %427 = vmatpush.msra.mxu0 %v369
    %428 = vmatpush.msra.mxu0 %v366
    %429 = vmatpush.msra.mxu0 %v363
    %430 = vmatpush.msra.mxu0 %v360
    %431 = vmatpush.msra.mxu0 %v357
    %432 = vmatpush.msra.mxu0 %v354
    %433 = vmatpush.msra.mxu0 %v351
    %434 = vmatmul.f32.gmra.mxu0 %v346
    %v435 = vpop.f32.mrf.mxu0
    %v436 = vadd.f32 0.0, %v435
    %437 = vdwg.mxu0
    %438 = vmatpush.msra.mxu0 %v397
    %439 = vmatpush.msra.mxu0 %v394
    %440 = vmatpush.msra.mxu0 %v391
    %441 = vmatpush.msra.mxu0 %v388
    %442 = vmatpush.msra.mxu0 %v385
    %443 = vmatpush.msra.mxu0 %v382
    %444 = vmatpush.msra.mxu0 %v379
    %445 = vmatpush.msra.mxu0 %v376
    %446 = vmatpush.msra.mxu0 %v373
    %447 = vmatpush.msra.mxu0 %v370
    %448 = vmatpush.msra.mxu0 %v367
    %449 = vmatpush.msra.mxu0 %v364
    %450 = vmatpush.msra.mxu0 %v361
    %451 = vmatpush.msra.mxu0 %v358
    %452 = vmatpush.msra.mxu0 %v355
    %453 = vmatpush.msra.mxu0 %v352
    %454 = vmatmul.f32.gmra.mxu0 %v346
    %v455 = vpop.f32.mrf.mxu0
    %v456 = vadd.f32 0.0, %v455
    %457 = vdwg.mxu0
    %v461 = vrot.slane %v436, 6
    %v462 = vrot.slane %v456, 4
    %v463 = vsel %vm188, %v416, %v461
    %v464 = vsel %vm190, %v463, %v462
    %v466 = vadd.f32 %v349, %v464
    %v467 = vld [vmem:[#allocation7] sm:$0xff]
    %v468 = vld [vmem:[#allocation7 + $0x8] sm:$0xff]
    %v469 = vld [vmem:[#allocation7 + $0x10] sm:$0xff]
    %v470 = vld [vmem:[#allocation7 + $0x18] sm:$0xff]
    %v471 = vld [vmem:[#allocation7 + $0x20] sm:$0xff]
    %v472 = vld [vmem:[#allocation7 + $0x28] sm:$0xff]
    %v473 = vld [vmem:[#allocation7 + $0x30] sm:$0xff]
    %v474 = vld [vmem:[#allocation7 + $0x38] sm:$0xff]
    %v475 = vld [vmem:[#allocation7 + $0x40] sm:$0xff]
    %v476 = vld [vmem:[#allocation7 + $0x48] sm:$0xff]
    %v477 = vld [vmem:[#allocation7 + $0x50] sm:$0xff]
    %v478 = vld [vmem:[#allocation7 + $0x58] sm:$0xff]
    %v479 = vld [vmem:[#allocation7 + $0x60] sm:$0xff]
    %v480 = vld [vmem:[#allocation7 + $0x68] sm:$0xff]
    %v481 = vld [vmem:[#allocation7 + $0x70] sm:$0xff]
    %v482 = vld [vmem:[#allocation7 + $0x78] sm:$0xff]
    %v483 = vld [vmem:[#allocation7 + $0x80] sm:$0xff]
    %v484 = vld [vmem:[#allocation7 + $0x88] sm:$0xff]
    %v485 = vld [vmem:[#allocation7 + $0x90] sm:$0xff]
    %v486 = vld [vmem:[#allocation7 + $0x98] sm:$0xff]
    %v487 = vld [vmem:[#allocation7 + $0xa0] sm:$0xff]
    %v488 = vld [vmem:[#allocation7 + $0xa8] sm:$0xff]
    %v489 = vld [vmem:[#allocation7 + $0xb0] sm:$0xff]
    %v490 = vld [vmem:[#allocation7 + $0xb8] sm:$0xff]
    %v491 = vld [vmem:[#allocation7 + $0xc0] sm:$0xff]
    %v492 = vld [vmem:[#allocation7 + $0xc8] sm:$0xff]
    %v493 = vld [vmem:[#allocation7 + $0xd0] sm:$0xff]
    %v494 = vld [vmem:[#allocation7 + $0xd8] sm:$0xff]
    %v495 = vld [vmem:[#allocation7 + $0xe0] sm:$0xff]
    %v496 = vld [vmem:[#allocation7 + $0xe8] sm:$0xff]
    %v497 = vld [vmem:[#allocation7 + $0xf0] sm:$0xff]
    %v498 = vld [vmem:[#allocation7 + $0xf8] sm:$0xff]
    %499 = vmatpush.msra.mxu0 %v497
    %500 = vmatpush.msra.mxu0 %v495
    %501 = vmatpush.msra.mxu0 %v493
    %502 = vmatpush.msra.mxu0 %v491
    %503 = vmatpush.msra.mxu0 %v489
    %504 = vmatpush.msra.mxu0 %v487
    %505 = vmatpush.msra.mxu0 %v485
    %506 = vmatpush.msra.mxu0 %v483
    %507 = vmatpush.msra.mxu0 %v481
    %508 = vmatpush.msra.mxu0 %v479
    %509 = vmatpush.msra.mxu0 %v477
    %510 = vmatpush.msra.mxu0 %v475
    %511 = vmatpush.msra.mxu0 %v473
    %512 = vmatpush.msra.mxu0 %v471
    %513 = vmatpush.msra.mxu0 %v469
    %514 = vmatpush.msra.mxu0 %v467
    %515 = vmatmul.f32.gmra.mxu0 %v283
    %v516 = vpop.f32.mrf.mxu0
    %v517 = vadd.f32 0.0, %v516
    %518 = vdwg.mxu0
    %519 = vmatpush.msra.mxu0 %v498
    %520 = vmatpush.msra.mxu0 %v496
    %521 = vmatpush.msra.mxu0 %v494
    %522 = vmatpush.msra.mxu0 %v492
    %523 = vmatpush.msra.mxu0 %v490
    %524 = vmatpush.msra.mxu0 %v488
    %525 = vmatpush.msra.mxu0 %v486
    %526 = vmatpush.msra.mxu0 %v484
    %527 = vmatpush.msra.mxu0 %v482
    %528 = vmatpush.msra.mxu0 %v480
    %529 = vmatpush.msra.mxu0 %v478
    %530 = vmatpush.msra.mxu0 %v476
    %531 = vmatpush.msra.mxu0 %v474
    %532 = vmatpush.msra.mxu0 %v472
    %533 = vmatpush.msra.mxu0 %v470
    %534 = vmatpush.msra.mxu0 %v468
    %535 = vmatmul.f32.gmra.mxu0 %v283
    %v536 = vpop.f32.mrf.mxu0
    %v537 = vadd.f32 0.0, %v536
    %538 = vdwg.mxu0
    %v540 = vrot.slane %v466, 4
    %v542 = vadd.f32 %v540, %v537
    %544 = vset.pattern.permute.xlu0 0
    %545 = vperm.xlu0 %544, %v542
    %v546 = vpop.permute.xlu0 %545
    %v549 = vunpack.c.l.s4 269488144
    %v550 = vunpack.c.0.s8 %v549
    %v551 = vperm.slane %v546, %v550
    %v552 = vmul.f32 %v551, %v280
    %v553 = vadd.f32 %v517, %v552
    %v554 = vld [vmem:[%s5] sm:$0xff]
    %v555 = vld [vmem:[%s5 + $0x8] sm:$0xff]
    %v556 = vld [vmem:[%s5 + $0x10] sm:$0xff]
    %v557 = vld [vmem:[%s5 + $0x18] sm:$0xff]
    %v558 = vld [vmem:[%s5 + $0x20] sm:$0xff]
    %v559 = vld [vmem:[%s5 + $0x28] sm:$0xff]
    %v560 = vld [vmem:[%s5 + $0x30] sm:$0xff]
    %v561 = vld [vmem:[%s5 + $0x38] sm:$0xff]
    %v562 = vld [vmem:[%s5 + $0x40] sm:$0xff]
    %v563 = vld [vmem:[%s5 + $0x48] sm:$0xff]
    %v564 = vld [vmem:[%s5 + $0x50] sm:$0xff]
    %v565 = vld [vmem:[%s5 + $0x58] sm:$0xff]
    %v566 = vld [vmem:[%s5 + $0x60] sm:$0xff]
    %v567 = vld [vmem:[%s5 + $0x68] sm:$0xff]
    %v568 = vld [vmem:[%s5 + $0x70] sm:$0xff]
    %v569 = vld [vmem:[%s5 + $0x78] sm:$0xff]
    %570 = vmatpush.msra.mxu0 %v569
    %571 = vmatpush.msra.mxu0 %v568
    %572 = vmatpush.msra.mxu0 %v567
    %573 = vmatpush.msra.mxu0 %v566
    %574 = vmatpush.msra.mxu0 %v565
    %575 = vmatpush.msra.mxu0 %v564
    %576 = vmatpush.msra.mxu0 %v563
    %577 = vmatpush.msra.mxu0 %v562
    %578 = vmatpush.msra.mxu0 %v561
    %579 = vmatpush.msra.mxu0 %v560
    %580 = vmatpush.msra.mxu0 %v559
    %581 = vmatpush.msra.mxu0 %v558
    %582 = vmatpush.msra.mxu0 %v557
    %583 = vmatpush.msra.mxu0 %v556
    %584 = vmatpush.msra.mxu0 %v555
    %585 = vmatpush.msra.mxu0 %v554
    %586 = vmatmul.f32.gmra.mxu0 %v553
    %v587 = vpop.f32.mrf.mxu0
    %v588 = vadd.f32 0.0, %v587
    %589 = vdwg.mxu0
    %v590 = vadd.f32 %v466, %v588
    %v591 = vtanh.pop %v590
    %v592 = vrot.slane %v466, 2
    %v594 = vxor.u32 %v592, 2147483648
    %v595 = vmul.f32 %v594, 1.442695
    %v596 = vpow.pop %v595
    %v597 = vadd.f32 %v596, 1.0
    %v598 = vrcp.pop %v597
    %v599 = vmul.f32 %v597, %v598
    %v600 = vsub.f32 1.0, %v599
    %v601 = vmul.f32 %v598, %v600
    %v602 = vadd.f32 %v598, %v601
    %vm603 = vweird.f32 %v597
    %vm604 = vweird.f32 %v598
    %vm605 = vmor %vm603, %vm604
    %v606 = vsel %vm605, %v598, %v602
    %v607 = vand.u32 2147483647, %v597
    %vm608 = vcmp.eq.f32.partialorder %v607, 8.507059e+37
    %v609 = vand.u32 %v597, 2147483648
    %v610 = vor.u32 1.1754944e-38, %v609
    %v611 = vsel %vm608, %v610, %v606
    %v612 = vmul.f32 1.0, %v611
    %v613 = vmul.f32 %v612, %v591
    %v614 = vsub.f32 1.0, %v612
    %v615 = vmul.f32 %v614, %v346
    %v616 = vadd.f32 %v613, %v615
    %s617 = scalar_lea.vmem %s7, 2
    %618 = vst [vmem:[%s617] sm:$0x3] %v616
    %s619 = scalar_lea.vmem %s0, 12
    %v620 = vld [vmem:[%s619] sm:$0x3f]
    %v621 = vld [vmem:[#allocation4] sm:$0xff]
    %v622 = vld [vmem:[#allocation4 + $0x8] sm:$0xff]
    %v623 = vld [vmem:[#allocation4 + $0x10] sm:$0xff]
    %v624 = vld [vmem:[#allocation4 + $0x18] sm:$0xff]
    %v625 = vld [vmem:[#allocation4 + $0x20] sm:$0xff]
    %v626 = vld [vmem:[#allocation4 + $0x28] sm:$0xff]
    %v627 = vld [vmem:[#allocation4 + $0x30] sm:$0xff]
    %v628 = vld [vmem:[#allocation4 + $0x38] sm:$0xff]
    %v629 = vld [vmem:[#allocation4 + $0x40] sm:$0xff]
    %v630 = vld [vmem:[#allocation4 + $0x48] sm:$0xff]
    %v631 = vld [vmem:[#allocation4 + $0x50] sm:$0xff]
    %v632 = vld [vmem:[#allocation4 + $0x58] sm:$0xff]
    %v633 = vld [vmem:[#allocation4 + $0x60] sm:$0xff]
    %v634 = vld [vmem:[#allocation4 + $0x68] sm:$0xff]
    %v635 = vld [vmem:[#allocation4 + $0x70] sm:$0xff]
    %v636 = vld [vmem:[#allocation4 + $0x78] sm:$0xff]
    %v637 = vld [vmem:[#allocation4 + $0x80] sm:$0xff]
    %v638 = vld [vmem:[#allocation4 + $0x88] sm:$0xff]
    %v639 = vld [vmem:[#allocation4 + $0x90] sm:$0xff]
    %v640 = vld [vmem:[#allocation4 + $0x98] sm:$0xff]
    %v641 = vld [vmem:[#allocation4 + $0xa0] sm:$0xff]
    %v642 = vld [vmem:[#allocation4 + $0xa8] sm:$0xff]
    %v643 = vld [vmem:[#allocation4 + $0xb0] sm:$0xff]
    %v644 = vld [vmem:[#allocation4 + $0xb8] sm:$0xff]
    %v645 = vld [vmem:[#allocation4 + $0xc0] sm:$0xff]
    %v646 = vld [vmem:[#allocation4 + $0xc8] sm:$0xff]
    %v647 = vld [vmem:[#allocation4 + $0xd0] sm:$0xff]
    %v648 = vld [vmem:[#allocation4 + $0xd8] sm:$0xff]
    %v649 = vld [vmem:[#allocation4 + $0xe0] sm:$0xff]
    %v650 = vld [vmem:[#allocation4 + $0xe8] sm:$0xff]
    %v651 = vld [vmem:[#allocation4 + $0xf0] sm:$0xff]
    %v652 = vld [vmem:[#allocation4 + $0xf8] sm:$0xff]
    %v653 = vld [vmem:[#allocation4 + $0x100] sm:$0xff]
    %v654 = vld [vmem:[#allocation4 + $0x108] sm:$0xff]
    %v655 = vld [vmem:[#allocation4 + $0x110] sm:$0xff]
    %v656 = vld [vmem:[#allocation4 + $0x118] sm:$0xff]
    %v657 = vld [vmem:[#allocation4 + $0x120] sm:$0xff]
    %v658 = vld [vmem:[#allocation4 + $0x128] sm:$0xff]
    %v659 = vld [vmem:[#allocation4 + $0x130] sm:$0xff]
    %v660 = vld [vmem:[#allocation4 + $0x138] sm:$0xff]
    %v661 = vld [vmem:[#allocation4 + $0x140] sm:$0xff]
    %v662 = vld [vmem:[#allocation4 + $0x148] sm:$0xff]
    %v663 = vld [vmem:[#allocation4 + $0x150] sm:$0xff]
    %v664 = vld [vmem:[#allocation4 + $0x158] sm:$0xff]
    %v665 = vld [vmem:[#allocation4 + $0x160] sm:$0xff]
    %v666 = vld [vmem:[#allocation4 + $0x168] sm:$0xff]
    %v667 = vld [vmem:[#allocation4 + $0x170] sm:$0xff]
    %v668 = vld [vmem:[#allocation4 + $0x178] sm:$0xff]
    %669 = vmatpush.msra.mxu0 %v666
    %670 = vmatpush.msra.mxu0 %v663
    %671 = vmatpush.msra.mxu0 %v660
    %672 = vmatpush.msra.mxu0 %v657
    %673 = vmatpush.msra.mxu0 %v654
    %674 = vmatpush.msra.mxu0 %v651
    %675 = vmatpush.msra.mxu0 %v648
    %676 = vmatpush.msra.mxu0 %v645
    %677 = vmatpush.msra.mxu0 %v642
    %678 = vmatpush.msra.mxu0 %v639
    %679 = vmatpush.msra.mxu0 %v636
    %680 = vmatpush.msra.mxu0 %v633
    %681 = vmatpush.msra.mxu0 %v630
    %682 = vmatpush.msra.mxu0 %v627
    %683 = vmatpush.msra.mxu0 %v624
    %684 = vmatpush.msra.mxu0 %v621
    %685 = vmatmul.f32.gmra.mxu0 %v616
    %v686 = vpop.f32.mrf.mxu0
    %v687 = vadd.f32 0.0, %v686
    %688 = vdwg.mxu0
    %689 = vmatpush.msra.mxu0 %v667
    %690 = vmatpush.msra.mxu0 %v664
    %691 = vmatpush.msra.mxu0 %v661
    %692 = vmatpush.msra.mxu0 %v658
    %693 = vmatpush.msra.mxu0 %v655
    %694 = vmatpush.msra.mxu0 %v652
    %695 = vmatpush.msra.mxu0 %v649
    %696 = vmatpush.msra.mxu0 %v646
    %697 = vmatpush.msra.mxu0 %v643
    %698 = vmatpush.msra.mxu0 %v640
    %699 = vmatpush.msra.mxu0 %v637
    %700 = vmatpush.msra.mxu0 %v634
    %701 = vmatpush.msra.mxu0 %v631
    %702 = vmatpush.msra.mxu0 %v628
    %703 = vmatpush.msra.mxu0 %v625
    %704 = vmatpush.msra.mxu0 %v622
    %705 = vmatmul.f32.gmra.mxu0 %v616
    %v706 = vpop.f32.mrf.mxu0
    %v707 = vadd.f32 0.0, %v706
    %708 = vdwg.mxu0
    %709 = vmatpush.msra.mxu0 %v668
    %710 = vmatpush.msra.mxu0 %v665
    %711 = vmatpush.msra.mxu0 %v662
    %712 = vmatpush.msra.mxu0 %v659
    %713 = vmatpush.msra.mxu0 %v656
    %714 = vmatpush.msra.mxu0 %v653
    %715 = vmatpush.msra.mxu0 %v650
    %716 = vmatpush.msra.mxu0 %v647
    %717 = vmatpush.msra.mxu0 %v644
    %718 = vmatpush.msra.mxu0 %v641
    %719 = vmatpush.msra.mxu0 %v638
    %720 = vmatpush.msra.mxu0 %v635
    %721 = vmatpush.msra.mxu0 %v632
    %722 = vmatpush.msra.mxu0 %v629
    %723 = vmatpush.msra.mxu0 %v626
    %724 = vmatpush.msra.mxu0 %v623
    %725 = vmatmul.f32.gmra.mxu0 %v616
    %v726 = vpop.f32.mrf.mxu0
    %v727 = vadd.f32 0.0, %v726
    %728 = vdwg.mxu0
    %v732 = vrot.slane %v707, 6
    %v733 = vrot.slane %v727, 4
    %v734 = vsel %vm188, %v687, %v732
    %v735 = vsel %vm190, %v734, %v733
    %v737 = vadd.f32 %v620, %v735
    %v738 = vld [vmem:[#allocation7] sm:$0xff]
    %v739 = vld [vmem:[#allocation7 + $0x8] sm:$0xff]
    %v740 = vld [vmem:[#allocation7 + $0x10] sm:$0xff]
    %v741 = vld [vmem:[#allocation7 + $0x18] sm:$0xff]
    %v742 = vld [vmem:[#allocation7 + $0x20] sm:$0xff]
    %v743 = vld [vmem:[#allocation7 + $0x28] sm:$0xff]
    %v744 = vld [vmem:[#allocation7 + $0x30] sm:$0xff]
    %v745 = vld [vmem:[#allocation7 + $0x38] sm:$0xff]
    %v746 = vld [vmem:[#allocation7 + $0x40] sm:$0xff]
    %v747 = vld [vmem:[#allocation7 + $0x48] sm:$0xff]
    %v748 = vld [vmem:[#allocation7 + $0x50] sm:$0xff]
    %v749 = vld [vmem:[#allocation7 + $0x58] sm:$0xff]
    %v750 = vld [vmem:[#allocation7 + $0x60] sm:$0xff]
    %v751 = vld [vmem:[#allocation7 + $0x68] sm:$0xff]
    %v752 = vld [vmem:[#allocation7 + $0x70] sm:$0xff]
    %v753 = vld [vmem:[#allocation7 + $0x78] sm:$0xff]
    %v754 = vld [vmem:[#allocation7 + $0x80] sm:$0xff]
    %v755 = vld [vmem:[#allocation7 + $0x88] sm:$0xff]
    %v756 = vld [vmem:[#allocation7 + $0x90] sm:$0xff]
    %v757 = vld [vmem:[#allocation7 + $0x98] sm:$0xff]
    %v758 = vld [vmem:[#allocation7 + $0xa0] sm:$0xff]
    %v759 = vld [vmem:[#allocation7 + $0xa8] sm:$0xff]
    %v760 = vld [vmem:[#allocation7 + $0xb0] sm:$0xff]
    %v761 = vld [vmem:[#allocation7 + $0xb8] sm:$0xff]
    %v762 = vld [vmem:[#allocation7 + $0xc0] sm:$0xff]
    %v763 = vld [vmem:[#allocation7 + $0xc8] sm:$0xff]
    %v764 = vld [vmem:[#allocation7 + $0xd0] sm:$0xff]
    %v765 = vld [vmem:[#allocation7 + $0xd8] sm:$0xff]
    %v766 = vld [vmem:[#allocation7 + $0xe0] sm:$0xff]
    %v767 = vld [vmem:[#allocation7 + $0xe8] sm:$0xff]
    %v768 = vld [vmem:[#allocation7 + $0xf0] sm:$0xff]
    %v769 = vld [vmem:[#allocation7 + $0xf8] sm:$0xff]
    %770 = vmatpush.msra.mxu0 %v768
    %771 = vmatpush.msra.mxu0 %v766
    %772 = vmatpush.msra.mxu0 %v764
    %773 = vmatpush.msra.mxu0 %v762
    %774 = vmatpush.msra.mxu0 %v760
    %775 = vmatpush.msra.mxu0 %v758
    %776 = vmatpush.msra.mxu0 %v756
    %777 = vmatpush.msra.mxu0 %v754
    %778 = vmatpush.msra.mxu0 %v752
    %779 = vmatpush.msra.mxu0 %v750
    %780 = vmatpush.msra.mxu0 %v748
    %781 = vmatpush.msra.mxu0 %v746
    %782 = vmatpush.msra.mxu0 %v744
    %783 = vmatpush.msra.mxu0 %v742
    %784 = vmatpush.msra.mxu0 %v740
    %785 = vmatpush.msra.mxu0 %v738
    %786 = vmatmul.f32.gmra.mxu0 %v553
    %v787 = vpop.f32.mrf.mxu0
    %v788 = vadd.f32 0.0, %v787
    %789 = vdwg.mxu0
    %790 = vmatpush.msra.mxu0 %v769
    %791 = vmatpush.msra.mxu0 %v767
    %792 = vmatpush.msra.mxu0 %v765
    %793 = vmatpush.msra.mxu0 %v763
    %794 = vmatpush.msra.mxu0 %v761
    %795 = vmatpush.msra.mxu0 %v759
    %796 = vmatpush.msra.mxu0 %v757
    %797 = vmatpush.msra.mxu0 %v755
    %798 = vmatpush.msra.mxu0 %v753
    %799 = vmatpush.msra.mxu0 %v751
    %800 = vmatpush.msra.mxu0 %v749
    %801 = vmatpush.msra.mxu0 %v747
    %802 = vmatpush.msra.mxu0 %v745
    %803 = vmatpush.msra.mxu0 %v743
    %804 = vmatpush.msra.mxu0 %v741
    %805 = vmatpush.msra.mxu0 %v739
    %806 = vmatmul.f32.gmra.mxu0 %v553
    %v807 = vpop.f32.mrf.mxu0
    %v808 = vadd.f32 0.0, %v807
    %809 = vdwg.mxu0
    %v811 = vrot.slane %v737, 4
    %v813 = vadd.f32 %v811, %v808
    %815 = vset.pattern.permute.xlu0 0
    %816 = vperm.xlu0 %815, %v813
    %v817 = vpop.permute.xlu0 %816
    %v820 = vunpack.c.l.s4 269488144
    %v821 = vunpack.c.0.s8 %v820
    %v822 = vperm.slane %v817, %v821
    %v823 = vmul.f32 %v822, %v280
    %v824 = vadd.f32 %v788, %v823
    %v825 = vld [vmem:[%s5] sm:$0xff]
    %v826 = vld [vmem:[%s5 + $0x8] sm:$0xff]
    %v827 = vld [vmem:[%s5 + $0x10] sm:$0xff]
    %v828 = vld [vmem:[%s5 + $0x18] sm:$0xff]
    %v829 = vld [vmem:[%s5 + $0x20] sm:$0xff]
    %v830 = vld [vmem:[%s5 + $0x28] sm:$0xff]
    %v831 = vld [vmem:[%s5 + $0x30] sm:$0xff]
    %v832 = vld [vmem:[%s5 + $0x38] sm:$0xff]
    %v833 = vld [vmem:[%s5 + $0x40] sm:$0xff]
    %v834 = vld [vmem:[%s5 + $0x48] sm:$0xff]
    %v835 = vld [vmem:[%s5 + $0x50] sm:$0xff]
    %v836 = vld [vmem:[%s5 + $0x58] sm:$0xff]
    %v837 = vld [vmem:[%s5 + $0x60] sm:$0xff]
    %v838 = vld [vmem:[%s5 + $0x68] sm:$0xff]
    %v839 = vld [vmem:[%s5 + $0x70] sm:$0xff]
    %v840 = vld [vmem:[%s5 + $0x78] sm:$0xff]
    %841 = vmatpush.msra.mxu0 %v840
    %842 = vmatpush.msra.mxu0 %v839
    %843 = vmatpush.msra.mxu0 %v838
    %844 = vmatpush.msra.mxu0 %v837
    %845 = vmatpush.msra.mxu0 %v836
    %846 = vmatpush.msra.mxu0 %v835
    %847 = vmatpush.msra.mxu0 %v834
    %848 = vmatpush.msra.mxu0 %v833
    %849 = vmatpush.msra.mxu0 %v832
    %850 = vmatpush.msra.mxu0 %v831
    %851 = vmatpush.msra.mxu0 %v830
    %852 = vmatpush.msra.mxu0 %v829
    %853 = vmatpush.msra.mxu0 %v828
    %854 = vmatpush.msra.mxu0 %v827
    %855 = vmatpush.msra.mxu0 %v826
    %856 = vmatpush.msra.mxu0 %v825
    %857 = vmatmul.f32.gmra.mxu0 %v824
    %v858 = vpop.f32.mrf.mxu0
    %v859 = vadd.f32 0.0, %v858
    %860 = vdwg.mxu0
    %v861 = vadd.f32 %v737, %v859
    %v862 = vtanh.pop %v861
    %v863 = vrot.slane %v737, 2
    %v865 = vxor.u32 %v863, 2147483648
    %v866 = vmul.f32 %v865, 1.442695
    %v867 = vpow.pop %v866
    %v868 = vadd.f32 %v867, 1.0
    %v869 = vrcp.pop %v868
    %v870 = vmul.f32 %v868, %v869
    %v871 = vsub.f32 1.0, %v870
    %v872 = vmul.f32 %v869, %v871
    %v873 = vadd.f32 %v869, %v872
    %vm874 = vweird.f32 %v868
    %vm875 = vweird.f32 %v869
    %vm876 = vmor %vm874, %vm875
    %v877 = vsel %vm876, %v869, %v873
    %v878 = vand.u32 2147483647, %v868
    %vm879 = vcmp.eq.f32.partialorder %v878, 8.507059e+37
    %v880 = vand.u32 %v868, 2147483648
    %v881 = vor.u32 1.1754944e-38, %v880
    %v882 = vsel %vm879, %v881, %v877
    %v883 = vmul.f32 1.0, %v882
    %v884 = vmul.f32 %v883, %v862
    %v885 = vsub.f32 1.0, %v883
    %v886 = vmul.f32 %v885, %v616
    %v887 = vadd.f32 %v884, %v886
    %s888 = scalar_lea.vmem %s7, 4
    %889 = vst [vmem:[%s888] sm:$0x3] %v887
    %s890 = scalar_lea.vmem %s0, 18
    %v891 = vld [vmem:[%s890] sm:$0x3f]
    %v892 = vld [vmem:[#allocation4] sm:$0xff]
    %v893 = vld [vmem:[#allocation4 + $0x8] sm:$0xff]
    %v894 = vld [vmem:[#allocation4 + $0x10] sm:$0xff]
    %v895 = vld [vmem:[#allocation4 + $0x18] sm:$0xff]
    %v896 = vld [vmem:[#allocation4 + $0x20] sm:$0xff]
    %v897 = vld [vmem:[#allocation4 + $0x28] sm:$0xff]
    %v898 = vld [vmem:[#allocation4 + $0x30] sm:$0xff]
    %v899 = vld [vmem:[#allocation4 + $0x38] sm:$0xff]
    %v900 = vld [vmem:[#allocation4 + $0x40] sm:$0xff]
    %v901 = vld [vmem:[#allocation4 + $0x48] sm:$0xff]
    %v902 = vld [vmem:[#allocation4 + $0x50] sm:$0xff]
    %v903 = vld [vmem:[#allocation4 + $0x58] sm:$0xff]
    %v904 = vld [vmem:[#allocation4 + $0x60] sm:$0xff]
    %v905 = vld [vmem:[#allocation4 + $0x68] sm:$0xff]
    %v906 = vld [vmem:[#allocation4 + $0x70] sm:$0xff]
    %v907 = vld [vmem:[#allocation4 + $0x78] sm:$0xff]
    %v908 = vld [vmem:[#allocation4 + $0x80] sm:$0xff]
    %v909 = vld [vmem:[#allocation4 + $0x88] sm:$0xff]
    %v910 = vld [vmem:[#allocation4 + $0x90] sm:$0xff]
    %v911 = vld [vmem:[#allocation4 + $0x98] sm:$0xff]
    %v912 = vld [vmem:[#allocation4 + $0xa0] sm:$0xff]
    %v913 = vld [vmem:[#allocation4 + $0xa8] sm:$0xff]
    %v914 = vld [vmem:[#allocation4 + $0xb0] sm:$0xff]
    %v915 = vld [vmem:[#allocation4 + $0xb8] sm:$0xff]
    %v916 = vld [vmem:[#allocation4 + $0xc0] sm:$0xff]
    %v917 = vld [vmem:[#allocation4 + $0xc8] sm:$0xff]
    %v918 = vld [vmem:[#allocation4 + $0xd0] sm:$0xff]
    %v919 = vld [vmem:[#allocation4 + $0xd8] sm:$0xff]
    %v920 = vld [vmem:[#allocation4 + $0xe0] sm:$0xff]
    %v921 = vld [vmem:[#allocation4 + $0xe8] sm:$0xff]
    %v922 = vld [vmem:[#allocation4 + $0xf0] sm:$0xff]
    %v923 = vld [vmem:[#allocation4 + $0xf8] sm:$0xff]
    %v924 = vld [vmem:[#allocation4 + $0x100] sm:$0xff]
    %v925 = vld [vmem:[#allocation4 + $0x108] sm:$0xff]
    %v926 = vld [vmem:[#allocation4 + $0x110] sm:$0xff]
    %v927 = vld [vmem:[#allocation4 + $0x118] sm:$0xff]
    %v928 = vld [vmem:[#allocation4 + $0x120] sm:$0xff]
    %v929 = vld [vmem:[#allocation4 + $0x128] sm:$0xff]
    %v930 = vld [vmem:[#allocation4 + $0x130] sm:$0xff]
    %v931 = vld [vmem:[#allocation4 + $0x138] sm:$0xff]
    %v932 = vld [vmem:[#allocation4 + $0x140] sm:$0xff]
    %v933 = vld [vmem:[#allocation4 + $0x148] sm:$0xff]
    %v934 = vld [vmem:[#allocation4 + $0x150] sm:$0xff]
    %v935 = vld [vmem:[#allocation4 + $0x158] sm:$0xff]
    %v936 = vld [vmem:[#allocation4 + $0x160] sm:$0xff]
    %v937 = vld [vmem:[#allocation4 + $0x168] sm:$0xff]
    %v938 = vld [vmem:[#allocation4 + $0x170] sm:$0xff]
    %v939 = vld [vmem:[#allocation4 + $0x178] sm:$0xff]
    %940 = vmatpush.msra.mxu0 %v937
    %941 = vmatpush.msra.mxu0 %v934
    %942 = vmatpush.msra.mxu0 %v931
    %943 = vmatpush.msra.mxu0 %v928
    %944 = vmatpush.msra.mxu0 %v925
    %945 = vmatpush.msra.mxu0 %v922
    %946 = vmatpush.msra.mxu0 %v919
    %947 = vmatpush.msra.mxu0 %v916
    %948 = vmatpush.msra.mxu0 %v913
    %949 = vmatpush.msra.mxu0 %v910
    %950 = vmatpush.msra.mxu0 %v907
    %951 = vmatpush.msra.mxu0 %v904
    %952 = vmatpush.msra.mxu0 %v901
    %953 = vmatpush.msra.mxu0 %v898
    %954 = vmatpush.msra.mxu0 %v895
    %955 = vmatpush.msra.mxu0 %v892
    %956 = vmatmul.f32.gmra.mxu0 %v887
    %v957 = vpop.f32.mrf.mxu0
    %v958 = vadd.f32 0.0, %v957
    %959 = vdwg.mxu0
    %960 = vmatpush.msra.mxu0 %v938
    %961 = vmatpush.msra.mxu0 %v935
    %962 = vmatpush.msra.mxu0 %v932
    %963 = vmatpush.msra.mxu0 %v929
    %964 = vmatpush.msra.mxu0 %v926
    %965 = vmatpush.msra.mxu0 %v923
    %966 = vmatpush.msra.mxu0 %v920
    %967 = vmatpush.msra.mxu0 %v917
    %968 = vmatpush.msra.mxu0 %v914
    %969 = vmatpush.msra.mxu0 %v911
    %970 = vmatpush.msra.mxu0 %v908
    %971 = vmatpush.msra.mxu0 %v905
    %972 = vmatpush.msra.mxu0 %v902
    %973 = vmatpush.msra.mxu0 %v899
    %974 = vmatpush.msra.mxu0 %v896
    %975 = vmatpush.msra.mxu0 %v893
    %976 = vmatmul.f32.gmra.mxu0 %v887
    %v977 = vpop.f32.mrf.mxu0
    %v978 = vadd.f32 0.0, %v977
    %979 = vdwg.mxu0
    %980 = vmatpush.msra.mxu0 %v939
    %981 = vmatpush.msra.mxu0 %v936
    %982 = vmatpush.msra.mxu0 %v933
    %983 = vmatpush.msra.mxu0 %v930
    %984 = vmatpush.msra.mxu0 %v927
    %985 = vmatpush.msra.mxu0 %v924
    %986 = vmatpush.msra.mxu0 %v921
    %987 = vmatpush.msra.mxu0 %v918
    %988 = vmatpush.msra.mxu0 %v915
    %989 = vmatpush.msra.mxu0 %v912
    %990 = vmatpush.msra.mxu0 %v909
    %991 = vmatpush.msra.mxu0 %v906
    %992 = vmatpush.msra.mxu0 %v903
    %993 = vmatpush.msra.mxu0 %v900
    %994 = vmatpush.msra.mxu0 %v897
    %995 = vmatpush.msra.mxu0 %v894
    %996 = vmatmul.f32.gmra.mxu0 %v887
    %v997 = vpop.f32.mrf.mxu0
    %v998 = vadd.f32 0.0, %v997
    %999 = vdwg.mxu0
    %v1003 = vrot.slane %v978, 6
    %v1004 = vrot.slane %v998, 4
    %v1005 = vsel %vm188, %v958, %v1003
    %v1006 = vsel %vm190, %v1005, %v1004
    %v1008 = vadd.f32 %v891, %v1006
    %v1009 = vld [vmem:[#allocation7] sm:$0xff]
    %v1010 = vld [vmem:[#allocation7 + $0x8] sm:$0xff]
    %v1011 = vld [vmem:[#allocation7 + $0x10] sm:$0xff]
    %v1012 = vld [vmem:[#allocation7 + $0x18] sm:$0xff]
    %v1013 = vld [vmem:[#allocation7 + $0x20] sm:$0xff]
    %v1014 = vld [vmem:[#allocation7 + $0x28] sm:$0xff]
    %v1015 = vld [vmem:[#allocation7 + $0x30] sm:$0xff]
    %v1016 = vld [vmem:[#allocation7 + $0x38] sm:$0xff]
    %v1017 = vld [vmem:[#allocation7 + $0x40] sm:$0xff]
    %v1018 = vld [vmem:[#allocation7 + $0x48] sm:$0xff]
    %v1019 = vld [vmem:[#allocation7 + $0x50] sm:$0xff]
    %v1020 = vld [vmem:[#allocation7 + $0x58] sm:$0xff]
    %v1021 = vld [vmem:[#allocation7 + $0x60] sm:$0xff]
    %v1022 = vld [vmem:[#allocation7 + $0x68] sm:$0xff]
    %v1023 = vld [vmem:[#allocation7 + $0x70] sm:$0xff]
    %v1024 = vld [vmem:[#allocation7 + $0x78] sm:$0xff]
    %v1025 = vld [vmem:[#allocation7 + $0x80] sm:$0xff]
    %v1026 = vld [vmem:[#allocation7 + $0x88] sm:$0xff]
    %v1027 = vld [vmem:[#allocation7 + $0x90] sm:$0xff]
    %v1028 = vld [vmem:[#allocation7 + $0x98] sm:$0xff]
    %v1029 = vld [vmem:[#allocation7 + $0xa0] sm:$0xff]
    %v1030 = vld [vmem:[#allocation7 + $0xa8] sm:$0xff]
    %v1031 = vld [vmem:[#allocation7 + $0xb0] sm:$0xff]
    %v1032 = vld [vmem:[#allocation7 + $0xb8] sm:$0xff]
    %v1033 = vld [vmem:[#allocation7 + $0xc0] sm:$0xff]
    %v1034 = vld [vmem:[#allocation7 + $0xc8] sm:$0xff]
    %v1035 = vld [vmem:[#allocation7 + $0xd0] sm:$0xff]
    %v1036 = vld [vmem:[#allocation7 + $0xd8] sm:$0xff]
    %v1037 = vld [vmem:[#allocation7 + $0xe0] sm:$0xff]
    %v1038 = vld [vmem:[#allocation7 + $0xe8] sm:$0xff]
    %v1039 = vld [vmem:[#allocation7 + $0xf0] sm:$0xff]
    %v1040 = vld [vmem:[#allocation7 + $0xf8] sm:$0xff]
    %1041 = vmatpush.msra.mxu0 %v1039
    %1042 = vmatpush.msra.mxu0 %v1037
    %1043 = vmatpush.msra.mxu0 %v1035
    %1044 = vmatpush.msra.mxu0 %v1033
    %1045 = vmatpush.msra.mxu0 %v1031
    %1046 = vmatpush.msra.mxu0 %v1029
    %1047 = vmatpush.msra.mxu0 %v1027
    %1048 = vmatpush.msra.mxu0 %v1025
    %1049 = vmatpush.msra.mxu0 %v1023
    %1050 = vmatpush.msra.mxu0 %v1021
    %1051 = vmatpush.msra.mxu0 %v1019
    %1052 = vmatpush.msra.mxu0 %v1017
    %1053 = vmatpush.msra.mxu0 %v1015
    %1054 = vmatpush.msra.mxu0 %v1013
    %1055 = vmatpush.msra.mxu0 %v1011
    %1056 = vmatpush.msra.mxu0 %v1009
    %1057 = vmatmul.f32.gmra.mxu0 %v824
    %v1058 = vpop.f32.mrf.mxu0
    %v1059 = vadd.f32 0.0, %v1058
    %1060 = vdwg.mxu0
    %1061 = vmatpush.msra.mxu0 %v1040
    %1062 = vmatpush.msra.mxu0 %v1038
    %1063 = vmatpush.msra.mxu0 %v1036
    %1064 = vmatpush.msra.mxu0 %v1034
    %1065 = vmatpush.msra.mxu0 %v1032
    %1066 = vmatpush.msra.mxu0 %v1030
    %1067 = vmatpush.msra.mxu0 %v1028
    %1068 = vmatpush.msra.mxu0 %v1026
    %1069 = vmatpush.msra.mxu0 %v1024
    %1070 = vmatpush.msra.mxu0 %v1022
    %1071 = vmatpush.msra.mxu0 %v1020
    %1072 = vmatpush.msra.mxu0 %v1018
    %1073 = vmatpush.msra.mxu0 %v1016
    %1074 = vmatpush.msra.mxu0 %v1014
    %1075 = vmatpush.msra.mxu0 %v1012
    %1076 = vmatpush.msra.mxu0 %v1010
    %1077 = vmatmul.f32.gmra.mxu0 %v824
    %v1078 = vpop.f32.mrf.mxu0
    %v1079 = vadd.f32 0.0, %v1078
    %1080 = vdwg.mxu0
    %v1082 = vrot.slane %v1008, 4
    %v1084 = vadd.f32 %v1082, %v1079
    %1086 = vset.pattern.permute.xlu0 0
    %1087 = vperm.xlu0 %1086, %v1084
    %v1088 = vpop.permute.xlu0 %1087
    %v1091 = vunpack.c.l.s4 269488144
    %v1092 = vunpack.c.0.s8 %v1091
    %v1093 = vperm.slane %v1088, %v1092
    %v1094 = vmul.f32 %v1093, %v280
    %v1095 = vadd.f32 %v1059, %v1094
    %v1096 = vld [vmem:[%s5] sm:$0xff]
    %v1097 = vld [vmem:[%s5 + $0x8] sm:$0xff]
    %v1098 = vld [vmem:[%s5 + $0x10] sm:$0xff]
    %v1099 = vld [vmem:[%s5 + $0x18] sm:$0xff]
    %v1100 = vld [vmem:[%s5 + $0x20] sm:$0xff]
    %v1101 = vld [vmem:[%s5 + $0x28] sm:$0xff]
    %v1102 = vld [vmem:[%s5 + $0x30] sm:$0xff]
    %v1103 = vld [vmem:[%s5 + $0x38] sm:$0xff]
    %v1104 = vld [vmem:[%s5 + $0x40] sm:$0xff]
    %v1105 = vld [vmem:[%s5 + $0x48] sm:$0xff]
    %v1106 = vld [vmem:[%s5 + $0x50] sm:$0xff]
    %v1107 = vld [vmem:[%s5 + $0x58] sm:$0xff]
    %v1108 = vld [vmem:[%s5 + $0x60] sm:$0xff]
    %v1109 = vld [vmem:[%s5 + $0x68] sm:$0xff]
    %v1110 = vld [vmem:[%s5 + $0x70] sm:$0xff]
    %v1111 = vld [vmem:[%s5 + $0x78] sm:$0xff]
    %1112 = vmatpush.msra.mxu0 %v1111
    %1113 = vmatpush.msra.mxu0 %v1110
    %1114 = vmatpush.msra.mxu0 %v1109
    %1115 = vmatpush.msra.mxu0 %v1108
    %1116 = vmatpush.msra.mxu0 %v1107
    %1117 = vmatpush.msra.mxu0 %v1106
    %1118 = vmatpush.msra.mxu0 %v1105
    %1119 = vmatpush.msra.mxu0 %v1104
    %1120 = vmatpush.msra.mxu0 %v1103
    %1121 = vmatpush.msra.mxu0 %v1102
    %1122 = vmatpush.msra.mxu0 %v1101
    %1123 = vmatpush.msra.mxu0 %v1100
    %1124 = vmatpush.msra.mxu0 %v1099
    %1125 = vmatpush.msra.mxu0 %v1098
    %1126 = vmatpush.msra.mxu0 %v1097
    %1127 = vmatpush.msra.mxu0 %v1096
    %1128 = vmatmul.f32.gmra.mxu0 %v1095
    %v1129 = vpop.f32.mrf.mxu0
    %v1130 = vadd.f32 0.0, %v1129
    %1131 = vdwg.mxu0
    %v1132 = vadd.f32 %v1008, %v1130
    %v1133 = vtanh.pop %v1132
    %v1134 = vrot.slane %v1008, 2
    %v1136 = vxor.u32 %v1134, 2147483648
    %v1137 = vmul.f32 %v1136, 1.442695
    %v1138 = vpow.pop %v1137
    %v1139 = vadd.f32 %v1138, 1.0
    %v1140 = vrcp.pop %v1139
    %v1141 = vmul.f32 %v1139, %v1140
    %v1142 = vsub.f32 1.0, %v1141
    %v1143 = vmul.f32 %v1140, %v1142
    %v1144 = vadd.f32 %v1140, %v1143
    %vm1145 = vweird.f32 %v1139
    %vm1146 = vweird.f32 %v1140
    %vm1147 = vmor %vm1145, %vm1146
    %v1148 = vsel %vm1147, %v1140, %v1144
    %v1149 = vand.u32 2147483647, %v1139
    %vm1150 = vcmp.eq.f32.partialorder %v1149, 8.507059e+37
    %v1151 = vand.u32 %v1139, 2147483648
    %v1152 = vor.u32 1.1754944e-38, %v1151
    %v1153 = vsel %vm1150, %v1152, %v1148
    %v1154 = vmul.f32 1.0, %v1153
    %v1155 = vmul.f32 %v1154, %v1133
    %v1156 = vsub.f32 1.0, %v1154
    %v1157 = vmul.f32 %v1156, %v887
    %v1158 = vadd.f32 %v1155, %v1157
    %s1159 = scalar_lea.vmem %s7, 6
    %1160 = vst [vmem:[%s1159] sm:$0x3] %v1158
    %s1161 = scalar_lea.vmem %s0, 24
    %v1162 = vld [vmem:[%s1161] sm:$0x3f]
    %v1163 = vld [vmem:[#allocation4] sm:$0xff]
    %v1164 = vld [vmem:[#allocation4 + $0x8] sm:$0xff]
    %v1165 = vld [vmem:[#allocation4 + $0x10] sm:$0xff]
    %v1166 = vld [vmem:[#allocation4 + $0x18] sm:$0xff]
    %v1167 = vld [vmem:[#allocation4 + $0x20] sm:$0xff]
    %v1168 = vld [vmem:[#allocation4 + $0x28] sm:$0xff]
    %v1169 = vld [vmem:[#allocation4 + $0x30] sm:$0xff]
    %v1170 = vld [vmem:[#allocation4 + $0x38] sm:$0xff]
    %v1171 = vld [vmem:[#allocation4 + $0x40] sm:$0xff]
    %v1172 = vld [vmem:[#allocation4 + $0x48] sm:$0xff]
    %v1173 = vld [vmem:[#allocation4 + $0x50] sm:$0xff]
    %v1174 = vld [vmem:[#allocation4 + $0x58] sm:$0xff]
    %v1175 = vld [vmem:[#allocation4 + $0x60] sm:$0xff]
    %v1176 = vld [vmem:[#allocation4 + $0x68] sm:$0xff]
    %v1177 = vld [vmem:[#allocation4 + $0x70] sm:$0xff]
    %v1178 = vld [vmem:[#allocation4 + $0x78] sm:$0xff]
    %v1179 = vld [vmem:[#allocation4 + $0x80] sm:$0xff]
    %v1180 = vld [vmem:[#allocation4 + $0x88] sm:$0xff]
    %v1181 = vld [vmem:[#allocation4 + $0x90] sm:$0xff]
    %v1182 = vld [vmem:[#allocation4 + $0x98] sm:$0xff]
    %v1183 = vld [vmem:[#allocation4 + $0xa0] sm:$0xff]
    %v1184 = vld [vmem:[#allocation4 + $0xa8] sm:$0xff]
    %v1185 = vld [vmem:[#allocation4 + $0xb0] sm:$0xff]
    %v1186 = vld [vmem:[#allocation4 + $0xb8] sm:$0xff]
    %v1187 = vld [vmem:[#allocation4 + $0xc0] sm:$0xff]
    %v1188 = vld [vmem:[#allocation4 + $0xc8] sm:$0xff]
    %v1189 = vld [vmem:[#allocation4 + $0xd0] sm:$0xff]
    %v1190 = vld [vmem:[#allocation4 + $0xd8] sm:$0xff]
    %v1191 = vld [vmem:[#allocation4 + $0xe0] sm:$0xff]
    %v1192 = vld [vmem:[#allocation4 + $0xe8] sm:$0xff]
    %v1193 = vld [vmem:[#allocation4 + $0xf0] sm:$0xff]
    %v1194 = vld [vmem:[#allocation4 + $0xf8] sm:$0xff]
    %v1195 = vld [vmem:[#allocation4 + $0x100] sm:$0xff]
    %v1196 = vld [vmem:[#allocation4 + $0x108] sm:$0xff]
    %v1197 = vld [vmem:[#allocation4 + $0x110] sm:$0xff]
    %v1198 = vld [vmem:[#allocation4 + $0x118] sm:$0xff]
    %v1199 = vld [vmem:[#allocation4 + $0x120] sm:$0xff]
    %v1200 = vld [vmem:[#allocation4 + $0x128] sm:$0xff]
    %v1201 = vld [vmem:[#allocation4 + $0x130] sm:$0xff]
    %v1202 = vld [vmem:[#allocation4 + $0x138] sm:$0xff]
    %v1203 = vld [vmem:[#allocation4 + $0x140] sm:$0xff]
    %v1204 = vld [vmem:[#allocation4 + $0x148] sm:$0xff]
    %v1205 = vld [vmem:[#allocation4 + $0x150] sm:$0xff]
    %v1206 = vld [vmem:[#allocation4 + $0x158] sm:$0xff]
    %v1207 = vld [vmem:[#allocation4 + $0x160] sm:$0xff]
    %v1208 = vld [vmem:[#allocation4 + $0x168] sm:$0xff]
    %v1209 = vld [vmem:[#allocation4 + $0x170] sm:$0xff]
    %v1210 = vld [vmem:[#allocation4 + $0x178] sm:$0xff]
    %1211 = vmatpush.msra.mxu0 %v1208
    %1212 = vmatpush.msra.mxu0 %v1205
    %1213 = vmatpush.msra.mxu0 %v1202
    %1214 = vmatpush.msra.mxu0 %v1199
    %1215 = vmatpush.msra.mxu0 %v1196
    %1216 = vmatpush.msra.mxu0 %v1193
    %1217 = vmatpush.msra.mxu0 %v1190
    %1218 = vmatpush.msra.mxu0 %v1187
    %1219 = vmatpush.msra.mxu0 %v1184
    %1220 = vmatpush.msra.mxu0 %v1181
    %1221 = vmatpush.msra.mxu0 %v1178
    %1222 = vmatpush.msra.mxu0 %v1175
    %1223 = vmatpush.msra.mxu0 %v1172
    %1224 = vmatpush.msra.mxu0 %v1169
    %1225 = vmatpush.msra.mxu0 %v1166
    %1226 = vmatpush.msra.mxu0 %v1163
    %1227 = vmatmul.f32.gmra.mxu0 %v1158
    %v1228 = vpop.f32.mrf.mxu0
    %v1229 = vadd.f32 0.0, %v1228
    %1230 = vdwg.mxu0
    %1231 = vmatpush.msra.mxu0 %v1209
    %1232 = vmatpush.msra.mxu0 %v1206
    %1233 = vmatpush.msra.mxu0 %v1203
    %1234 = vmatpush.msra.mxu0 %v1200
    %1235 = vmatpush.msra.mxu0 %v1197
    %1236 = vmatpush.msra.mxu0 %v1194
    %1237 = vmatpush.msra.mxu0 %v1191
    %1238 = vmatpush.msra.mxu0 %v1188
    %1239 = vmatpush.msra.mxu0 %v1185
    %1240 = vmatpush.msra.mxu0 %v1182
    %1241 = vmatpush.msra.mxu0 %v1179
    %1242 = vmatpush.msra.mxu0 %v1176
    %1243 = vmatpush.msra.mxu0 %v1173
    %1244 = vmatpush.msra.mxu0 %v1170
    %1245 = vmatpush.msra.mxu0 %v1167
    %1246 = vmatpush.msra.mxu0 %v1164
    %1247 = vmatmul.f32.gmra.mxu0 %v1158
    %v1248 = vpop.f32.mrf.mxu0
    %v1249 = vadd.f32 0.0, %v1248
    %1250 = vdwg.mxu0
    %1251 = vmatpush.msra.mxu0 %v1210
    %1252 = vmatpush.msra.mxu0 %v1207
    %1253 = vmatpush.msra.mxu0 %v1204
    %1254 = vmatpush.msra.mxu0 %v1201
    %1255 = vmatpush.msra.mxu0 %v1198
    %1256 = vmatpush.msra.mxu0 %v1195
    %1257 = vmatpush.msra.mxu0 %v1192
    %1258 = vmatpush.msra.mxu0 %v1189
    %1259 = vmatpush.msra.mxu0 %v1186
    %1260 = vmatpush.msra.mxu0 %v1183
    %1261 = vmatpush.msra.mxu0 %v1180
    %1262 = vmatpush.msra.mxu0 %v1177
    %1263 = vmatpush.msra.mxu0 %v1174
    %1264 = vmatpush.msra.mxu0 %v1171
    %1265 = vmatpush.msra.mxu0 %v1168
    %1266 = vmatpush.msra.mxu0 %v1165
    %1267 = vmatmul.f32.gmra.mxu0 %v1158
    %v1268 = vpop.f32.mrf.mxu0
    %v1269 = vadd.f32 0.0, %v1268
    %1270 = vdwg.mxu0
    %v1274 = vrot.slane %v1249, 6
    %v1275 = vrot.slane %v1269, 4
    %v1276 = vsel %vm188, %v1229, %v1274
    %v1277 = vsel %vm190, %v1276, %v1275
    %v1279 = vadd.f32 %v1162, %v1277
    %v1280 = vld [vmem:[#allocation7] sm:$0xff]
    %v1281 = vld [vmem:[#allocation7 + $0x8] sm:$0xff]
    %v1282 = vld [vmem:[#allocation7 + $0x10] sm:$0xff]
    %v1283 = vld [vmem:[#allocation7 + $0x18] sm:$0xff]
    %v1284 = vld [vmem:[#allocation7 + $0x20] sm:$0xff]
    %v1285 = vld [vmem:[#allocation7 + $0x28] sm:$0xff]
    %v1286 = vld [vmem:[#allocation7 + $0x30] sm:$0xff]
    %v1287 = vld [vmem:[#allocation7 + $0x38] sm:$0xff]
    %v1288 = vld [vmem:[#allocation7 + $0x40] sm:$0xff]
    %v1289 = vld [vmem:[#allocation7 + $0x48] sm:$0xff]
    %v1290 = vld [vmem:[#allocation7 + $0x50] sm:$0xff]
    %v1291 = vld [vmem:[#allocation7 + $0x58] sm:$0xff]
    %v1292 = vld [vmem:[#allocation7 + $0x60] sm:$0xff]
    %v1293 = vld [vmem:[#allocation7 + $0x68] sm:$0xff]
    %v1294 = vld [vmem:[#allocation7 + $0x70] sm:$0xff]
    %v1295 = vld [vmem:[#allocation7 + $0x78] sm:$0xff]
    %v1296 = vld [vmem:[#allocation7 + $0x80] sm:$0xff]
    %v1297 = vld [vmem:[#allocation7 + $0x88] sm:$0xff]
    %v1298 = vld [vmem:[#allocation7 + $0x90] sm:$0xff]
    %v1299 = vld [vmem:[#allocation7 + $0x98] sm:$0xff]
    %v1300 = vld [vmem:[#allocation7 + $0xa0] sm:$0xff]
    %v1301 = vld [vmem:[#allocation7 + $0xa8] sm:$0xff]
    %v1302 = vld [vmem:[#allocation7 + $0xb0] sm:$0xff]
    %v1303 = vld [vmem:[#allocation7 + $0xb8] sm:$0xff]
    %v1304 = vld [vmem:[#allocation7 + $0xc0] sm:$0xff]
    %v1305 = vld [vmem:[#allocation7 + $0xc8] sm:$0xff]
    %v1306 = vld [vmem:[#allocation7 + $0xd0] sm:$0xff]
    %v1307 = vld [vmem:[#allocation7 + $0xd8] sm:$0xff]
    %v1308 = vld [vmem:[#allocation7 + $0xe0] sm:$0xff]
    %v1309 = vld [vmem:[#allocation7 + $0xe8] sm:$0xff]
    %v1310 = vld [vmem:[#allocation7 + $0xf0] sm:$0xff]
    %v1311 = vld [vmem:[#allocation7 + $0xf8] sm:$0xff]
    %1312 = vmatpush.msra.mxu0 %v1310
    %1313 = vmatpush.msra.mxu0 %v1308
    %1314 = vmatpush.msra.mxu0 %v1306
    %1315 = vmatpush.msra.mxu0 %v1304
    %1316 = vmatpush.msra.mxu0 %v1302
    %1317 = vmatpush.msra.mxu0 %v1300
    %1318 = vmatpush.msra.mxu0 %v1298
    %1319 = vmatpush.msra.mxu0 %v1296
    %1320 = vmatpush.msra.mxu0 %v1294
    %1321 = vmatpush.msra.mxu0 %v1292
    %1322 = vmatpush.msra.mxu0 %v1290
    %1323 = vmatpush.msra.mxu0 %v1288
    %1324 = vmatpush.msra.mxu0 %v1286
    %1325 = vmatpush.msra.mxu0 %v1284
    %1326 = vmatpush.msra.mxu0 %v1282
    %1327 = vmatpush.msra.mxu0 %v1280
    %1328 = vmatmul.f32.gmra.mxu0 %v1095
    %v1329 = vpop.f32.mrf.mxu0
    %v1330 = vadd.f32 0.0, %v1329
    %1331 = vdwg.mxu0
    %1332 = vmatpush.msra.mxu0 %v1311
    %1333 = vmatpush.msra.mxu0 %v1309
    %1334 = vmatpush.msra.mxu0 %v1307
    %1335 = vmatpush.msra.mxu0 %v1305
    %1336 = vmatpush.msra.mxu0 %v1303
    %1337 = vmatpush.msra.mxu0 %v1301
    %1338 = vmatpush.msra.mxu0 %v1299
    %1339 = vmatpush.msra.mxu0 %v1297
    %1340 = vmatpush.msra.mxu0 %v1295
    %1341 = vmatpush.msra.mxu0 %v1293
    %1342 = vmatpush.msra.mxu0 %v1291
    %1343 = vmatpush.msra.mxu0 %v1289
    %1344 = vmatpush.msra.mxu0 %v1287
    %1345 = vmatpush.msra.mxu0 %v1285
    %1346 = vmatpush.msra.mxu0 %v1283
    %1347 = vmatpush.msra.mxu0 %v1281
    %1348 = vmatmul.f32.gmra.mxu0 %v1095
    %v1349 = vpop.f32.mrf.mxu0
    %v1350 = vadd.f32 0.0, %v1349
    %1351 = vdwg.mxu0
    %v1353 = vrot.slane %v1279, 4
    %v1355 = vadd.f32 %v1353, %v1350
    %1357 = vset.pattern.permute.xlu0 0
    %1358 = vperm.xlu0 %1357, %v1355
    %v1359 = vpop.permute.xlu0 %1358
    %v1362 = vunpack.c.l.s4 269488144
    %v1363 = vunpack.c.0.s8 %v1362
    %v1364 = vperm.slane %v1359, %v1363
    %v1365 = vmul.f32 %v1364, %v280
    %v1366 = vadd.f32 %v1330, %v1365
    %v1367 = vld [vmem:[%s5] sm:$0xff]
    %v1368 = vld [vmem:[%s5 + $0x8] sm:$0xff]
    %v1369 = vld [vmem:[%s5 + $0x10] sm:$0xff]
    %v1370 = vld [vmem:[%s5 + $0x18] sm:$0xff]
    %v1371 = vld [vmem:[%s5 + $0x20] sm:$0xff]
    %v1372 = vld [vmem:[%s5 + $0x28] sm:$0xff]
    %v1373 = vld [vmem:[%s5 + $0x30] sm:$0xff]
    %v1374 = vld [vmem:[%s5 + $0x38] sm:$0xff]
    %v1375 = vld [vmem:[%s5 + $0x40] sm:$0xff]
    %v1376 = vld [vmem:[%s5 + $0x48] sm:$0xff]
    %v1377 = vld [vmem:[%s5 + $0x50] sm:$0xff]
    %v1378 = vld [vmem:[%s5 + $0x58] sm:$0xff]
    %v1379 = vld [vmem:[%s5 + $0x60] sm:$0xff]
    %v1380 = vld [vmem:[%s5 + $0x68] sm:$0xff]
    %v1381 = vld [vmem:[%s5 + $0x70] sm:$0xff]
    %v1382 = vld [vmem:[%s5 + $0x78] sm:$0xff]
    %1383 = vmatpush.msra.mxu0 %v1382
    %1384 = vmatpush.msra.mxu0 %v1381
    %1385 = vmatpush.msra.mxu0 %v1380
    %1386 = vmatpush.msra.mxu0 %v1379
    %1387 = vmatpush.msra.mxu0 %v1378
    %1388 = vmatpush.msra.mxu0 %v1377
    %1389 = vmatpush.msra.mxu0 %v1376
    %1390 = vmatpush.msra.mxu0 %v1375
    %1391 = vmatpush.msra.mxu0 %v1374
    %1392 = vmatpush.msra.mxu0 %v1373
    %1393 = vmatpush.msra.mxu0 %v1372
    %1394 = vmatpush.msra.mxu0 %v1371
    %1395 = vmatpush.msra.mxu0 %v1370
    %1396 = vmatpush.msra.mxu0 %v1369
    %1397 = vmatpush.msra.mxu0 %v1368
    %1398 = vmatpush.msra.mxu0 %v1367
    %1399 = vmatmul.f32.gmra.mxu0 %v1366
    %v1400 = vpop.f32.mrf.mxu0
    %v1401 = vadd.f32 0.0, %v1400
    %1402 = vdwg.mxu0
    %v1403 = vadd.f32 %v1279, %v1401
    %v1404 = vtanh.pop %v1403
    %v1405 = vrot.slane %v1279, 2
    %v1407 = vxor.u32 %v1405, 2147483648
    %v1408 = vmul.f32 %v1407, 1.442695
    %v1409 = vpow.pop %v1408
    %v1410 = vadd.f32 %v1409, 1.0
    %v1411 = vrcp.pop %v1410
    %v1412 = vmul.f32 %v1410, %v1411
    %v1413 = vsub.f32 1.0, %v1412
    %v1414 = vmul.f32 %v1411, %v1413
    %v1415 = vadd.f32 %v1411, %v1414
    %vm1416 = vweird.f32 %v1410
    %vm1417 = vweird.f32 %v1411
    %vm1418 = vmor %vm1416, %vm1417
    %v1419 = vsel %vm1418, %v1411, %v1415
    %v1420 = vand.u32 2147483647, %v1410
    %vm1421 = vcmp.eq.f32.partialorder %v1420, 8.507059e+37
    %v1422 = vand.u32 %v1410, 2147483648
    %v1423 = vor.u32 1.1754944e-38, %v1422
    %v1424 = vsel %vm1421, %v1423, %v1419
    %v1425 = vmul.f32 1.0, %v1424
    %v1426 = vmul.f32 %v1425, %v1404
    %v1427 = vsub.f32 1.0, %v1425
    %v1428 = vmul.f32 %v1427, %v1158
    %v1429 = vadd.f32 %v1426, %v1428
    %s1430 = scalar_lea.vmem %s7, 8
    %1431 = vst [vmem:[%s1430] sm:$0x3] %v1429
    %s1432 = scalar_lea.vmem %s0, 30
    %v1433 = vld [vmem:[%s1432] sm:$0x3f]
    %v1434 = vld [vmem:[#allocation4] sm:$0xff]
    %v1435 = vld [vmem:[#allocation4 + $0x8] sm:$0xff]
    %v1436 = vld [vmem:[#allocation4 + $0x10] sm:$0xff]
    %v1437 = vld [vmem:[#allocation4 + $0x18] sm:$0xff]
    %v1438 = vld [vmem:[#allocation4 + $0x20] sm:$0xff]
    %v1439 = vld [vmem:[#allocation4 + $0x28] sm:$0xff]
    %v1440 = vld [vmem:[#allocation4 + $0x30] sm:$0xff]
    %v1441 = vld [vmem:[#allocation4 + $0x38] sm:$0xff]
    %v1442 = vld [vmem:[#allocation4 + $0x40] sm:$0xff]
    %v1443 = vld [vmem:[#allocation4 + $0x48] sm:$0xff]
    %v1444 = vld [vmem:[#allocation4 + $0x50] sm:$0xff]
    %v1445 = vld [vmem:[#allocation4 + $0x58] sm:$0xff]
    %v1446 = vld [vmem:[#allocation4 + $0x60] sm:$0xff]
    %v1447 = vld [vmem:[#allocation4 + $0x68] sm:$0xff]
    %v1448 = vld [vmem:[#allocation4 + $0x70] sm:$0xff]
    %v1449 = vld [vmem:[#allocation4 + $0x78] sm:$0xff]
    %v1450 = vld [vmem:[#allocation4 + $0x80] sm:$0xff]
    %v1451 = vld [vmem:[#allocation4 + $0x88] sm:$0xff]
    %v1452 = vld [vmem:[#allocation4 + $0x90] sm:$0xff]
    %v1453 = vld [vmem:[#allocation4 + $0x98] sm:$0xff]
    %v1454 = vld [vmem:[#allocation4 + $0xa0] sm:$0xff]
    %v1455 = vld [vmem:[#allocation4 + $0xa8] sm:$0xff]
    %v1456 = vld [vmem:[#allocation4 + $0xb0] sm:$0xff]
    %v1457 = vld [vmem:[#allocation4 + $0xb8] sm:$0xff]
    %v1458 = vld [vmem:[#allocation4 + $0xc0] sm:$0xff]
    %v1459 = vld [vmem:[#allocation4 + $0xc8] sm:$0xff]
    %v1460 = vld [vmem:[#allocation4 + $0xd0] sm:$0xff]
    %v1461 = vld [vmem:[#allocation4 + $0xd8] sm:$0xff]
    %v1462 = vld [vmem:[#allocation4 + $0xe0] sm:$0xff]
    %v1463 = vld [vmem:[#allocation4 + $0xe8] sm:$0xff]
    %v1464 = vld [vmem:[#allocation4 + $0xf0] sm:$0xff]
    %v1465 = vld [vmem:[#allocation4 + $0xf8] sm:$0xff]
    %v1466 = vld [vmem:[#allocation4 + $0x100] sm:$0xff]
    %v1467 = vld [vmem:[#allocation4 + $0x108] sm:$0xff]
    %v1468 = vld [vmem:[#allocation4 + $0x110] sm:$0xff]
    %v1469 = vld [vmem:[#allocation4 + $0x118] sm:$0xff]
    %v1470 = vld [vmem:[#allocation4 + $0x120] sm:$0xff]
    %v1471 = vld [vmem:[#allocation4 + $0x128] sm:$0xff]
    %v1472 = vld [vmem:[#allocation4 + $0x130] sm:$0xff]
    %v1473 = vld [vmem:[#allocation4 + $0x138] sm:$0xff]
    %v1474 = vld [vmem:[#allocation4 + $0x140] sm:$0xff]
    %v1475 = vld [vmem:[#allocation4 + $0x148] sm:$0xff]
    %v1476 = vld [vmem:[#allocation4 + $0x150] sm:$0xff]
    %v1477 = vld [vmem:[#allocation4 + $0x158] sm:$0xff]
    %v1478 = vld [vmem:[#allocation4 + $0x160] sm:$0xff]
    %v1479 = vld [vmem:[#allocation4 + $0x168] sm:$0xff]
    %v1480 = vld [vmem:[#allocation4 + $0x170] sm:$0xff]
    %v1481 = vld [vmem:[#allocation4 + $0x178] sm:$0xff]
    %1482 = vmatpush.msra.mxu0 %v1479
    %1483 = vmatpush.msra.mxu0 %v1476
    %1484 = vmatpush.msra.mxu0 %v1473
    %1485 = vmatpush.msra.mxu0 %v1470
    %1486 = vmatpush.msra.mxu0 %v1467
    %1487 = vmatpush.msra.mxu0 %v1464
    %1488 = vmatpush.msra.mxu0 %v1461
    %1489 = vmatpush.msra.mxu0 %v1458
    %1490 = vmatpush.msra.mxu0 %v1455
    %1491 = vmatpush.msra.mxu0 %v1452
    %1492 = vmatpush.msra.mxu0 %v1449
    %1493 = vmatpush.msra.mxu0 %v1446
    %1494 = vmatpush.msra.mxu0 %v1443
    %1495 = vmatpush.msra.mxu0 %v1440
    %1496 = vmatpush.msra.mxu0 %v1437
    %1497 = vmatpush.msra.mxu0 %v1434
    %1498 = vmatmul.f32.gmra.mxu0 %v1429
    %v1499 = vpop.f32.mrf.mxu0
    %v1500 = vadd.f32 0.0, %v1499
    %1501 = vdwg.mxu0
    %1502 = vmatpush.msra.mxu0 %v1480
    %1503 = vmatpush.msra.mxu0 %v1477
    %1504 = vmatpush.msra.mxu0 %v1474
    %1505 = vmatpush.msra.mxu0 %v1471
    %1506 = vmatpush.msra.mxu0 %v1468
    %1507 = vmatpush.msra.mxu0 %v1465
    %1508 = vmatpush.msra.mxu0 %v1462
    %1509 = vmatpush.msra.mxu0 %v1459
    %1510 = vmatpush.msra.mxu0 %v1456
    %1511 = vmatpush.msra.mxu0 %v1453
    %1512 = vmatpush.msra.mxu0 %v1450
    %1513 = vmatpush.msra.mxu0 %v1447
    %1514 = vmatpush.msra.mxu0 %v1444
    %1515 = vmatpush.msra.mxu0 %v1441
    %1516 = vmatpush.msra.mxu0 %v1438
    %1517 = vmatpush.msra.mxu0 %v1435
    %1518 = vmatmul.f32.gmra.mxu0 %v1429
    %v1519 = vpop.f32.mrf.mxu0
    %v1520 = vadd.f32 0.0, %v1519
    %1521 = vdwg.mxu0
    %1522 = vmatpush.msra.mxu0 %v1481
    %1523 = vmatpush.msra.mxu0 %v1478
    %1524 = vmatpush.msra.mxu0 %v1475
    %1525 = vmatpush.msra.mxu0 %v1472
    %1526 = vmatpush.msra.mxu0 %v1469
    %1527 = vmatpush.msra.mxu0 %v1466
    %1528 = vmatpush.msra.mxu0 %v1463
    %1529 = vmatpush.msra.mxu0 %v1460
    %1530 = vmatpush.msra.mxu0 %v1457
    %1531 = vmatpush.msra.mxu0 %v1454
    %1532 = vmatpush.msra.mxu0 %v1451
    %1533 = vmatpush.msra.mxu0 %v1448
    %1534 = vmatpush.msra.mxu0 %v1445
    %1535 = vmatpush.msra.mxu0 %v1442
    %1536 = vmatpush.msra.mxu0 %v1439
    %1537 = vmatpush.msra.mxu0 %v1436
    %1538 = vmatmul.f32.gmra.mxu0 %v1429
    %v1539 = vpop.f32.mrf.mxu0
    %v1540 = vadd.f32 0.0, %v1539
    %1541 = vdwg.mxu0
    %v1545 = vrot.slane %v1520, 6
    %v1546 = vrot.slane %v1540, 4
    %v1547 = vsel %vm188, %v1500, %v1545
    %v1548 = vsel %vm190, %v1547, %v1546
    %v1550 = vadd.f32 %v1433, %v1548
    %v1551 = vld [vmem:[#allocation7] sm:$0xff]
    %v1552 = vld [vmem:[#allocation7 + $0x8] sm:$0xff]
    %v1553 = vld [vmem:[#allocation7 + $0x10] sm:$0xff]
    %v1554 = vld [vmem:[#allocation7 + $0x18] sm:$0xff]
    %v1555 = vld [vmem:[#allocation7 + $0x20] sm:$0xff]
    %v1556 = vld [vmem:[#allocation7 + $0x28] sm:$0xff]
    %v1557 = vld [vmem:[#allocation7 + $0x30] sm:$0xff]
    %v1558 = vld [vmem:[#allocation7 + $0x38] sm:$0xff]
    %v1559 = vld [vmem:[#allocation7 + $0x40] sm:$0xff]
    %v1560 = vld [vmem:[#allocation7 + $0x48] sm:$0xff]
    %v1561 = vld [vmem:[#allocation7 + $0x50] sm:$0xff]
    %v1562 = vld [vmem:[#allocation7 + $0x58] sm:$0xff]
    %v1563 = vld [vmem:[#allocation7 + $0x60] sm:$0xff]
    %v1564 = vld [vmem:[#allocation7 + $0x68] sm:$0xff]
    %v1565 = vld [vmem:[#allocation7 + $0x70] sm:$0xff]
    %v1566 = vld [vmem:[#allocation7 + $0x78] sm:$0xff]
    %v1567 = vld [vmem:[#allocation7 + $0x80] sm:$0xff]
    %v1568 = vld [vmem:[#allocation7 + $0x88] sm:$0xff]
    %v1569 = vld [vmem:[#allocation7 + $0x90] sm:$0xff]
    %v1570 = vld [vmem:[#allocation7 + $0x98] sm:$0xff]
    %v1571 = vld [vmem:[#allocation7 + $0xa0] sm:$0xff]
    %v1572 = vld [vmem:[#allocation7 + $0xa8] sm:$0xff]
    %v1573 = vld [vmem:[#allocation7 + $0xb0] sm:$0xff]
    %v1574 = vld [vmem:[#allocation7 + $0xb8] sm:$0xff]
    %v1575 = vld [vmem:[#allocation7 + $0xc0] sm:$0xff]
    %v1576 = vld [vmem:[#allocation7 + $0xc8] sm:$0xff]
    %v1577 = vld [vmem:[#allocation7 + $0xd0] sm:$0xff]
    %v1578 = vld [vmem:[#allocation7 + $0xd8] sm:$0xff]
    %v1579 = vld [vmem:[#allocation7 + $0xe0] sm:$0xff]
    %v1580 = vld [vmem:[#allocation7 + $0xe8] sm:$0xff]
    %v1581 = vld [vmem:[#allocation7 + $0xf0] sm:$0xff]
    %v1582 = vld [vmem:[#allocation7 + $0xf8] sm:$0xff]
    %1583 = vmatpush.msra.mxu0 %v1581
    %1584 = vmatpush.msra.mxu0 %v1579
    %1585 = vmatpush.msra.mxu0 %v1577
    %1586 = vmatpush.msra.mxu0 %v1575
    %1587 = vmatpush.msra.mxu0 %v1573
    %1588 = vmatpush.msra.mxu0 %v1571
    %1589 = vmatpush.msra.mxu0 %v1569
    %1590 = vmatpush.msra.mxu0 %v1567
    %1591 = vmatpush.msra.mxu0 %v1565
    %1592 = vmatpush.msra.mxu0 %v1563
    %1593 = vmatpush.msra.mxu0 %v1561
    %1594 = vmatpush.msra.mxu0 %v1559
    %1595 = vmatpush.msra.mxu0 %v1557
    %1596 = vmatpush.msra.mxu0 %v1555
    %1597 = vmatpush.msra.mxu0 %v1553
    %1598 = vmatpush.msra.mxu0 %v1551
    %1599 = vmatmul.f32.gmra.mxu0 %v1366
    %v1600 = vpop.f32.mrf.mxu0
    %v1601 = vadd.f32 0.0, %v1600
    %1602 = vdwg.mxu0
    %1603 = vmatpush.msra.mxu0 %v1582
    %1604 = vmatpush.msra.mxu0 %v1580
    %1605 = vmatpush.msra.mxu0 %v1578
    %1606 = vmatpush.msra.mxu0 %v1576
    %1607 = vmatpush.msra.mxu0 %v1574
    %1608 = vmatpush.msra.mxu0 %v1572
    %1609 = vmatpush.msra.mxu0 %v1570
    %1610 = vmatpush.msra.mxu0 %v1568
    %1611 = vmatpush.msra.mxu0 %v1566
    %1612 = vmatpush.msra.mxu0 %v1564
    %1613 = vmatpush.msra.mxu0 %v1562
    %1614 = vmatpush.msra.mxu0 %v1560
    %1615 = vmatpush.msra.mxu0 %v1558
    %1616 = vmatpush.msra.mxu0 %v1556
    %1617 = vmatpush.msra.mxu0 %v1554
    %1618 = vmatpush.msra.mxu0 %v1552
    %1619 = vmatmul.f32.gmra.mxu0 %v1366
    %v1620 = vpop.f32.mrf.mxu0
    %v1621 = vadd.f32 0.0, %v1620
    %1622 = vdwg.mxu0
    %v1624 = vrot.slane %v1550, 4
    %v1626 = vadd.f32 %v1624, %v1621
    %1628 = vset.pattern.permute.xlu0 0
    %1629 = vperm.xlu0 %1628, %v1626
    %v1630 = vpop.permute.xlu0 %1629
    %v1633 = vunpack.c.l.s4 269488144
    %v1634 = vunpack.c.0.s8 %v1633
    %v1635 = vperm.slane %v1630, %v1634
    %v1636 = vmul.f32 %v1635, %v280
    %v1637 = vadd.f32 %v1601, %v1636
    %v1638 = vld [vmem:[%s5] sm:$0xff]
    %v1639 = vld [vmem:[%s5 + $0x8] sm:$0xff]
    %v1640 = vld [vmem:[%s5 + $0x10] sm:$0xff]
    %v1641 = vld [vmem:[%s5 + $0x18] sm:$0xff]
    %v1642 = vld [vmem:[%s5 + $0x20] sm:$0xff]
    %v1643 = vld [vmem:[%s5 + $0x28] sm:$0xff]
    %v1644 = vld [vmem:[%s5 + $0x30] sm:$0xff]
    %v1645 = vld [vmem:[%s5 + $0x38] sm:$0xff]
    %v1646 = vld [vmem:[%s5 + $0x40] sm:$0xff]
    %v1647 = vld [vmem:[%s5 + $0x48] sm:$0xff]
    %v1648 = vld [vmem:[%s5 + $0x50] sm:$0xff]
    %v1649 = vld [vmem:[%s5 + $0x58] sm:$0xff]
    %v1650 = vld [vmem:[%s5 + $0x60] sm:$0xff]
    %v1651 = vld [vmem:[%s5 + $0x68] sm:$0xff]
    %v1652 = vld [vmem:[%s5 + $0x70] sm:$0xff]
    %v1653 = vld [vmem:[%s5 + $0x78] sm:$0xff]
    %1654 = vmatpush.msra.mxu0 %v1653
    %1655 = vmatpush.msra.mxu0 %v1652
    %1656 = vmatpush.msra.mxu0 %v1651
    %1657 = vmatpush.msra.mxu0 %v1650
    %1658 = vmatpush.msra.mxu0 %v1649
    %1659 = vmatpush.msra.mxu0 %v1648
    %1660 = vmatpush.msra.mxu0 %v1647
    %1661 = vmatpush.msra.mxu0 %v1646
    %1662 = vmatpush.msra.mxu0 %v1645
    %1663 = vmatpush.msra.mxu0 %v1644
    %1664 = vmatpush.msra.mxu0 %v1643
    %1665 = vmatpush.msra.mxu0 %v1642
    %1666 = vmatpush.msra.mxu0 %v1641
    %1667 = vmatpush.msra.mxu0 %v1640
    %1668 = vmatpush.msra.mxu0 %v1639
    %1669 = vmatpush.msra.mxu0 %v1638
    %1670 = vmatmul.f32.gmra.mxu0 %v1637
    %v1671 = vpop.f32.mrf.mxu0
    %v1672 = vadd.f32 0.0, %v1671
    %1673 = vdwg.mxu0
    %v1674 = vadd.f32 %v1550, %v1672
    %v1675 = vtanh.pop %v1674
    %v1676 = vrot.slane %v1550, 2
    %v1678 = vxor.u32 %v1676, 2147483648
    %v1679 = vmul.f32 %v1678, 1.442695
    %v1680 = vpow.pop %v1679
    %v1681 = vadd.f32 %v1680, 1.0
    %v1682 = vrcp.pop %v1681
    %v1683 = vmul.f32 %v1681, %v1682
    %v1684 = vsub.f32 1.0, %v1683
    %v1685 = vmul.f32 %v1682, %v1684
    %v1686 = vadd.f32 %v1682, %v1685
    %vm1687 = vweird.f32 %v1681
    %vm1688 = vweird.f32 %v1682
    %vm1689 = vmor %vm1687, %vm1688
    %v1690 = vsel %vm1689, %v1682, %v1686
    %v1691 = vand.u32 2147483647, %v1681
    %vm1692 = vcmp.eq.f32.partialorder %v1691, 8.507059e+37
    %v1693 = vand.u32 %v1681, 2147483648
    %v1694 = vor.u32 1.1754944e-38, %v1693
    %v1695 = vsel %vm1692, %v1694, %v1690
    %v1696 = vmul.f32 1.0, %v1695
    %v1697 = vmul.f32 %v1696, %v1675
    %v1698 = vsub.f32 1.0, %v1696
    %v1699 = vmul.f32 %v1698, %v1429
    %v1700 = vadd.f32 %v1697, %v1699
    %s1701 = scalar_lea.vmem %s7, 10
    %1702 = vst [vmem:[%s1701] sm:$0x3] %v1700
    %s1703 = scalar_lea.vmem %s0, 36
    %v1704 = vld [vmem:[%s1703] sm:$0x3f]
    %v1705 = vld [vmem:[#allocation4] sm:$0xff]
    %v1706 = vld [vmem:[#allocation4 + $0x8] sm:$0xff]
    %v1707 = vld [vmem:[#allocation4 + $0x10] sm:$0xff]
    %v1708 = vld [vmem:[#allocation4 + $0x18] sm:$0xff]
    %v1709 = vld [vmem:[#allocation4 + $0x20] sm:$0xff]
    %v1710 = vld [vmem:[#allocation4 + $0x28] sm:$0xff]
    %v1711 = vld [vmem:[#allocation4 + $0x30] sm:$0xff]
    %v1712 = vld [vmem:[#allocation4 + $0x38] sm:$0xff]
    %v1713 = vld [vmem:[#allocation4 + $0x40] sm:$0xff]
    %v1714 = vld [vmem:[#allocation4 + $0x48] sm:$0xff]
    %v1715 = vld [vmem:[#allocation4 + $0x50] sm:$0xff]
    %v1716 = vld [vmem:[#allocation4 + $0x58] sm:$0xff]
    %v1717 = vld [vmem:[#allocation4 + $0x60] sm:$0xff]
    %v1718 = vld [vmem:[#allocation4 + $0x68] sm:$0xff]
    %v1719 = vld [vmem:[#allocation4 + $0x70] sm:$0xff]
    %v1720 = vld [vmem:[#allocation4 + $0x78] sm:$0xff]
    %v1721 = vld [vmem:[#allocation4 + $0x80] sm:$0xff]
    %v1722 = vld [vmem:[#allocation4 + $0x88] sm:$0xff]
    %v1723 = vld [vmem:[#allocation4 + $0x90] sm:$0xff]
    %v1724 = vld [vmem:[#allocation4 + $0x98] sm:$0xff]
    %v1725 = vld [vmem:[#allocation4 + $0xa0] sm:$0xff]
    %v1726 = vld [vmem:[#allocation4 + $0xa8] sm:$0xff]
    %v1727 = vld [vmem:[#allocation4 + $0xb0] sm:$0xff]
    %v1728 = vld [vmem:[#allocation4 + $0xb8] sm:$0xff]
    %v1729 = vld [vmem:[#allocation4 + $0xc0] sm:$0xff]
    %v1730 = vld [vmem:[#allocation4 + $0xc8] sm:$0xff]
    %v1731 = vld [vmem:[#allocation4 + $0xd0] sm:$0xff]
    %v1732 = vld [vmem:[#allocation4 + $0xd8] sm:$0xff]
    %v1733 = vld [vmem:[#allocation4 + $0xe0] sm:$0xff]
    %v1734 = vld [vmem:[#allocation4 + $0xe8] sm:$0xff]
    %v1735 = vld [vmem:[#allocation4 + $0xf0] sm:$0xff]
    %v1736 = vld [vmem:[#allocation4 + $0xf8] sm:$0xff]
    %v1737 = vld [vmem:[#allocation4 + $0x100] sm:$0xff]
    %v1738 = vld [vmem:[#allocation4 + $0x108] sm:$0xff]
    %v1739 = vld [vmem:[#allocation4 + $0x110] sm:$0xff]
    %v1740 = vld [vmem:[#allocation4 + $0x118] sm:$0xff]
    %v1741 = vld [vmem:[#allocation4 + $0x120] sm:$0xff]
    %v1742 = vld [vmem:[#allocation4 + $0x128] sm:$0xff]
    %v1743 = vld [vmem:[#allocation4 + $0x130] sm:$0xff]
    %v1744 = vld [vmem:[#allocation4 + $0x138] sm:$0xff]
    %v1745 = vld [vmem:[#allocation4 + $0x140] sm:$0xff]
    %v1746 = vld [vmem:[#allocation4 + $0x148] sm:$0xff]
    %v1747 = vld [vmem:[#allocation4 + $0x150] sm:$0xff]
    %v1748 = vld [vmem:[#allocation4 + $0x158] sm:$0xff]
    %v1749 = vld [vmem:[#allocation4 + $0x160] sm:$0xff]
    %v1750 = vld [vmem:[#allocation4 + $0x168] sm:$0xff]
    %v1751 = vld [vmem:[#allocation4 + $0x170] sm:$0xff]
    %v1752 = vld [vmem:[#allocation4 + $0x178] sm:$0xff]
    %1753 = vmatpush.msra.mxu0 %v1750
    %1754 = vmatpush.msra.mxu0 %v1747
    %1755 = vmatpush.msra.mxu0 %v1744
    %1756 = vmatpush.msra.mxu0 %v1741
    %1757 = vmatpush.msra.mxu0 %v1738
    %1758 = vmatpush.msra.mxu0 %v1735
    %1759 = vmatpush.msra.mxu0 %v1732
    %1760 = vmatpush.msra.mxu0 %v1729
    %1761 = vmatpush.msra.mxu0 %v1726
    %1762 = vmatpush.msra.mxu0 %v1723
    %1763 = vmatpush.msra.mxu0 %v1720
    %1764 = vmatpush.msra.mxu0 %v1717
    %1765 = vmatpush.msra.mxu0 %v1714
    %1766 = vmatpush.msra.mxu0 %v1711
    %1767 = vmatpush.msra.mxu0 %v1708
    %1768 = vmatpush.msra.mxu0 %v1705
    %1769 = vmatmul.f32.gmra.mxu0 %v1700
    %v1770 = vpop.f32.mrf.mxu0
    %v1771 = vadd.f32 0.0, %v1770
    %1772 = vdwg.mxu0
    %1773 = vmatpush.msra.mxu0 %v1751
    %1774 = vmatpush.msra.mxu0 %v1748
    %1775 = vmatpush.msra.mxu0 %v1745
    %1776 = vmatpush.msra.mxu0 %v1742
    %1777 = vmatpush.msra.mxu0 %v1739
    %1778 = vmatpush.msra.mxu0 %v1736
    %1779 = vmatpush.msra.mxu0 %v1733
    %1780 = vmatpush.msra.mxu0 %v1730
    %1781 = vmatpush.msra.mxu0 %v1727
    %1782 = vmatpush.msra.mxu0 %v1724
    %1783 = vmatpush.msra.mxu0 %v1721
    %1784 = vmatpush.msra.mxu0 %v1718
    %1785 = vmatpush.msra.mxu0 %v1715
    %1786 = vmatpush.msra.mxu0 %v1712
    %1787 = vmatpush.msra.mxu0 %v1709
    %1788 = vmatpush.msra.mxu0 %v1706
    %1789 = vmatmul.f32.gmra.mxu0 %v1700
    %v1790 = vpop.f32.mrf.mxu0
    %v1791 = vadd.f32 0.0, %v1790
    %1792 = vdwg.mxu0
    %1793 = vmatpush.msra.mxu0 %v1752
    %1794 = vmatpush.msra.mxu0 %v1749
    %1795 = vmatpush.msra.mxu0 %v1746
    %1796 = vmatpush.msra.mxu0 %v1743
    %1797 = vmatpush.msra.mxu0 %v1740
    %1798 = vmatpush.msra.mxu0 %v1737
    %1799 = vmatpush.msra.mxu0 %v1734
    %1800 = vmatpush.msra.mxu0 %v1731
    %1801 = vmatpush.msra.mxu0 %v1728
    %1802 = vmatpush.msra.mxu0 %v1725
    %1803 = vmatpush.msra.mxu0 %v1722
    %1804 = vmatpush.msra.mxu0 %v1719
    %1805 = vmatpush.msra.mxu0 %v1716
    %1806 = vmatpush.msra.mxu0 %v1713
    %1807 = vmatpush.msra.mxu0 %v1710
    %1808 = vmatpush.msra.mxu0 %v1707
    %1809 = vmatmul.f32.gmra.mxu0 %v1700
    %v1810 = vpop.f32.mrf.mxu0
    %v1811 = vadd.f32 0.0, %v1810
    %1812 = vdwg.mxu0
    %v1816 = vrot.slane %v1791, 6
    %v1817 = vrot.slane %v1811, 4
    %v1818 = vsel %vm188, %v1771, %v1816
    %v1819 = vsel %vm190, %v1818, %v1817
    %v1821 = vadd.f32 %v1704, %v1819
    %v1822 = vld [vmem:[#allocation7] sm:$0xff]
    %v1823 = vld [vmem:[#allocation7 + $0x8] sm:$0xff]
    %v1824 = vld [vmem:[#allocation7 + $0x10] sm:$0xff]
    %v1825 = vld [vmem:[#allocation7 + $0x18] sm:$0xff]
    %v1826 = vld [vmem:[#allocation7 + $0x20] sm:$0xff]
    %v1827 = vld [vmem:[#allocation7 + $0x28] sm:$0xff]
    %v1828 = vld [vmem:[#allocation7 + $0x30] sm:$0xff]
    %v1829 = vld [vmem:[#allocation7 + $0x38] sm:$0xff]
    %v1830 = vld [vmem:[#allocation7 + $0x40] sm:$0xff]
    %v1831 = vld [vmem:[#allocation7 + $0x48] sm:$0xff]
    %v1832 = vld [vmem:[#allocation7 + $0x50] sm:$0xff]
    %v1833 = vld [vmem:[#allocation7 + $0x58] sm:$0xff]
    %v1834 = vld [vmem:[#allocation7 + $0x60] sm:$0xff]
    %v1835 = vld [vmem:[#allocation7 + $0x68] sm:$0xff]
    %v1836 = vld [vmem:[#allocation7 + $0x70] sm:$0xff]
    %v1837 = vld [vmem:[#allocation7 + $0x78] sm:$0xff]
    %v1838 = vld [vmem:[#allocation7 + $0x80] sm:$0xff]
    %v1839 = vld [vmem:[#allocation7 + $0x88] sm:$0xff]
    %v1840 = vld [vmem:[#allocation7 + $0x90] sm:$0xff]
    %v1841 = vld [vmem:[#allocation7 + $0x98] sm:$0xff]
    %v1842 = vld [vmem:[#allocation7 + $0xa0] sm:$0xff]
    %v1843 = vld [vmem:[#allocation7 + $0xa8] sm:$0xff]
    %v1844 = vld [vmem:[#allocation7 + $0xb0] sm:$0xff]
    %v1845 = vld [vmem:[#allocation7 + $0xb8] sm:$0xff]
    %v1846 = vld [vmem:[#allocation7 + $0xc0] sm:$0xff]
    %v1847 = vld [vmem:[#allocation7 + $0xc8] sm:$0xff]
    %v1848 = vld [vmem:[#allocation7 + $0xd0] sm:$0xff]
    %v1849 = vld [vmem:[#allocation7 + $0xd8] sm:$0xff]
    %v1850 = vld [vmem:[#allocation7 + $0xe0] sm:$0xff]
    %v1851 = vld [vmem:[#allocation7 + $0xe8] sm:$0xff]
    %v1852 = vld [vmem:[#allocation7 + $0xf0] sm:$0xff]
    %v1853 = vld [vmem:[#allocation7 + $0xf8] sm:$0xff]
    %1854 = vmatpush.msra.mxu0 %v1852
    %1855 = vmatpush.msra.mxu0 %v1850
    %1856 = vmatpush.msra.mxu0 %v1848
    %1857 = vmatpush.msra.mxu0 %v1846
    %1858 = vmatpush.msra.mxu0 %v1844
    %1859 = vmatpush.msra.mxu0 %v1842
    %1860 = vmatpush.msra.mxu0 %v1840
    %1861 = vmatpush.msra.mxu0 %v1838
    %1862 = vmatpush.msra.mxu0 %v1836
    %1863 = vmatpush.msra.mxu0 %v1834
    %1864 = vmatpush.msra.mxu0 %v1832
    %1865 = vmatpush.msra.mxu0 %v1830
    %1866 = vmatpush.msra.mxu0 %v1828
    %1867 = vmatpush.msra.mxu0 %v1826
    %1868 = vmatpush.msra.mxu0 %v1824
    %1869 = vmatpush.msra.mxu0 %v1822
    %1870 = vmatmul.f32.gmra.mxu0 %v1637
    %v1871 = vpop.f32.mrf.mxu0
    %v1872 = vadd.f32 0.0, %v1871
    %1873 = vdwg.mxu0
    %1874 = vmatpush.msra.mxu0 %v1853
    %1875 = vmatpush.msra.mxu0 %v1851
    %1876 = vmatpush.msra.mxu0 %v1849
    %1877 = vmatpush.msra.mxu0 %v1847
    %1878 = vmatpush.msra.mxu0 %v1845
    %1879 = vmatpush.msra.mxu0 %v1843
    %1880 = vmatpush.msra.mxu0 %v1841
    %1881 = vmatpush.msra.mxu0 %v1839
    %1882 = vmatpush.msra.mxu0 %v1837
    %1883 = vmatpush.msra.mxu0 %v1835
    %1884 = vmatpush.msra.mxu0 %v1833
    %1885 = vmatpush.msra.mxu0 %v1831
    %1886 = vmatpush.msra.mxu0 %v1829
    %1887 = vmatpush.msra.mxu0 %v1827
    %1888 = vmatpush.msra.mxu0 %v1825
    %1889 = vmatpush.msra.mxu0 %v1823
    %1890 = vmatmul.f32.gmra.mxu0 %v1637
    %v1891 = vpop.f32.mrf.mxu0
    %v1892 = vadd.f32 0.0, %v1891
    %1893 = vdwg.mxu0
    %v1895 = vrot.slane %v1821, 4
    %v1897 = vadd.f32 %v1895, %v1892
    %1899 = vset.pattern.permute.xlu0 0
    %1900 = vperm.xlu0 %1899, %v1897
    %v1901 = vpop.permute.xlu0 %1900
    %v1904 = vunpack.c.l.s4 269488144
    %v1905 = vunpack.c.0.s8 %v1904
    %v1906 = vperm.slane %v1901, %v1905
    %v1907 = vmul.f32 %v1906, %v280
    %v1908 = vadd.f32 %v1872, %v1907
    %v1909 = vld [vmem:[%s5] sm:$0xff]
    %v1910 = vld [vmem:[%s5 + $0x8] sm:$0xff]
    %v1911 = vld [vmem:[%s5 + $0x10] sm:$0xff]
    %v1912 = vld [vmem:[%s5 + $0x18] sm:$0xff]
    %v1913 = vld [vmem:[%s5 + $0x20] sm:$0xff]
    %v1914 = vld [vmem:[%s5 + $0x28] sm:$0xff]
    %v1915 = vld [vmem:[%s5 + $0x30] sm:$0xff]
    %v1916 = vld [vmem:[%s5 + $0x38] sm:$0xff]
    %v1917 = vld [vmem:[%s5 + $0x40] sm:$0xff]
    %v1918 = vld [vmem:[%s5 + $0x48] sm:$0xff]
    %v1919 = vld [vmem:[%s5 + $0x50] sm:$0xff]
    %v1920 = vld [vmem:[%s5 + $0x58] sm:$0xff]
    %v1921 = vld [vmem:[%s5 + $0x60] sm:$0xff]
    %v1922 = vld [vmem:[%s5 + $0x68] sm:$0xff]
    %v1923 = vld [vmem:[%s5 + $0x70] sm:$0xff]
    %v1924 = vld [vmem:[%s5 + $0x78] sm:$0xff]
    %1925 = vmatpush.msra.mxu0 %v1924
    %1926 = vmatpush.msra.mxu0 %v1923
    %1927 = vmatpush.msra.mxu0 %v1922
    %1928 = vmatpush.msra.mxu0 %v1921
    %1929 = vmatpush.msra.mxu0 %v1920
    %1930 = vmatpush.msra.mxu0 %v1919
    %1931 = vmatpush.msra.mxu0 %v1918
    %1932 = vmatpush.msra.mxu0 %v1917
    %1933 = vmatpush.msra.mxu0 %v1916
    %1934 = vmatpush.msra.mxu0 %v1915
    %1935 = vmatpush.msra.mxu0 %v1914
    %1936 = vmatpush.msra.mxu0 %v1913
    %1937 = vmatpush.msra.mxu0 %v1912
    %1938 = vmatpush.msra.mxu0 %v1911
    %1939 = vmatpush.msra.mxu0 %v1910
    %1940 = vmatpush.msra.mxu0 %v1909
    %1941 = vmatmul.f32.gmra.mxu0 %v1908
    %v1942 = vpop.f32.mrf.mxu0
    %v1943 = vadd.f32 0.0, %v1942
    %1944 = vdwg.mxu0
    %v1945 = vadd.f32 %v1821, %v1943
    %v1946 = vtanh.pop %v1945
    %v1947 = vrot.slane %v1821, 2
    %v1949 = vxor.u32 %v1947, 2147483648
    %v1950 = vmul.f32 %v1949, 1.442695
    %v1951 = vpow.pop %v1950
    %v1952 = vadd.f32 %v1951, 1.0
    %v1953 = vrcp.pop %v1952
    %v1954 = vmul.f32 %v1952, %v1953
    %v1955 = vsub.f32 1.0, %v1954
    %v1956 = vmul.f32 %v1953, %v1955
    %v1957 = vadd.f32 %v1953, %v1956
    %vm1958 = vweird.f32 %v1952
    %vm1959 = vweird.f32 %v1953
    %vm1960 = vmor %vm1958, %vm1959
    %v1961 = vsel %vm1960, %v1953, %v1957
    %v1962 = vand.u32 2147483647, %v1952
    %vm1963 = vcmp.eq.f32.partialorder %v1962, 8.507059e+37
    %v1964 = vand.u32 %v1952, 2147483648
    %v1965 = vor.u32 1.1754944e-38, %v1964
    %v1966 = vsel %vm1963, %v1965, %v1961
    %v1967 = vmul.f32 1.0, %v1966
    %v1968 = vmul.f32 %v1967, %v1946
    %v1969 = vsub.f32 1.0, %v1967
    %v1970 = vmul.f32 %v1969, %v1700
    %v1971 = vadd.f32 %v1968, %v1970
    %s1972 = scalar_lea.vmem %s7, 12
    %1973 = vst [vmem:[%s1972] sm:$0x3] %v1971
    %s1974 = scalar_lea.vmem %s0, 42
    %v1975 = vld [vmem:[%s1974] sm:$0x3f]
    %v1976 = vld [vmem:[#allocation4] sm:$0xff]
    %v1977 = vld [vmem:[#allocation4 + $0x8] sm:$0xff]
    %v1978 = vld [vmem:[#allocation4 + $0x10] sm:$0xff]
    %v1979 = vld [vmem:[#allocation4 + $0x18] sm:$0xff]
    %v1980 = vld [vmem:[#allocation4 + $0x20] sm:$0xff]
    %v1981 = vld [vmem:[#allocation4 + $0x28] sm:$0xff]
    %v1982 = vld [vmem:[#allocation4 + $0x30] sm:$0xff]
    %v1983 = vld [vmem:[#allocation4 + $0x38] sm:$0xff]
    %v1984 = vld [vmem:[#allocation4 + $0x40] sm:$0xff]
    %v1985 = vld [vmem:[#allocation4 + $0x48] sm:$0xff]
    %v1986 = vld [vmem:[#allocation4 + $0x50] sm:$0xff]
    %v1987 = vld [vmem:[#allocation4 + $0x58] sm:$0xff]
    %v1988 = vld [vmem:[#allocation4 + $0x60] sm:$0xff]
    %v1989 = vld [vmem:[#allocation4 + $0x68] sm:$0xff]
    %v1990 = vld [vmem:[#allocation4 + $0x70] sm:$0xff]
    %v1991 = vld [vmem:[#allocation4 + $0x78] sm:$0xff]
    %v1992 = vld [vmem:[#allocation4 + $0x80] sm:$0xff]
    %v1993 = vld [vmem:[#allocation4 + $0x88] sm:$0xff]
    %v1994 = vld [vmem:[#allocation4 + $0x90] sm:$0xff]
    %v1995 = vld [vmem:[#allocation4 + $0x98] sm:$0xff]
    %v1996 = vld [vmem:[#allocation4 + $0xa0] sm:$0xff]
    %v1997 = vld [vmem:[#allocation4 + $0xa8] sm:$0xff]
    %v1998 = vld [vmem:[#allocation4 + $0xb0] sm:$0xff]
    %v1999 = vld [vmem:[#allocation4 + $0xb8] sm:$0xff]
    %v2000 = vld [vmem:[#allocation4 + $0xc0] sm:$0xff]
    %v2001 = vld [vmem:[#allocation4 + $0xc8] sm:$0xff]
    %v2002 = vld [vmem:[#allocation4 + $0xd0] sm:$0xff]
    %v2003 = vld [vmem:[#allocation4 + $0xd8] sm:$0xff]
    %v2004 = vld [vmem:[#allocation4 + $0xe0] sm:$0xff]
    %v2005 = vld [vmem:[#allocation4 + $0xe8] sm:$0xff]
    %v2006 = vld [vmem:[#allocation4 + $0xf0] sm:$0xff]
    %v2007 = vld [vmem:[#allocation4 + $0xf8] sm:$0xff]
    %v2008 = vld [vmem:[#allocation4 + $0x100] sm:$0xff]
    %v2009 = vld [vmem:[#allocation4 + $0x108] sm:$0xff]
    %v2010 = vld [vmem:[#allocation4 + $0x110] sm:$0xff]
    %v2011 = vld [vmem:[#allocation4 + $0x118] sm:$0xff]
    %v2012 = vld [vmem:[#allocation4 + $0x120] sm:$0xff]
    %v2013 = vld [vmem:[#allocation4 + $0x128] sm:$0xff]
    %v2014 = vld [vmem:[#allocation4 + $0x130] sm:$0xff]
    %v2015 = vld [vmem:[#allocation4 + $0x138] sm:$0xff]
    %v2016 = vld [vmem:[#allocation4 + $0x140] sm:$0xff]
    %v2017 = vld [vmem:[#allocation4 + $0x148] sm:$0xff]
    %v2018 = vld [vmem:[#allocation4 + $0x150] sm:$0xff]
    %v2019 = vld [vmem:[#allocation4 + $0x158] sm:$0xff]
    %v2020 = vld [vmem:[#allocation4 + $0x160] sm:$0xff]
    %v2021 = vld [vmem:[#allocation4 + $0x168] sm:$0xff]
    %v2022 = vld [vmem:[#allocation4 + $0x170] sm:$0xff]
    %v2023 = vld [vmem:[#allocation4 + $0x178] sm:$0xff]
    %2024 = vmatpush.msra.mxu0 %v2021
    %2025 = vmatpush.msra.mxu0 %v2018
    %2026 = vmatpush.msra.mxu0 %v2015
    %2027 = vmatpush.msra.mxu0 %v2012
    %2028 = vmatpush.msra.mxu0 %v2009
    %2029 = vmatpush.msra.mxu0 %v2006
    %2030 = vmatpush.msra.mxu0 %v2003
    %2031 = vmatpush.msra.mxu0 %v2000
    %2032 = vmatpush.msra.mxu0 %v1997
    %2033 = vmatpush.msra.mxu0 %v1994
    %2034 = vmatpush.msra.mxu0 %v1991
    %2035 = vmatpush.msra.mxu0 %v1988
    %2036 = vmatpush.msra.mxu0 %v1985
    %2037 = vmatpush.msra.mxu0 %v1982
    %2038 = vmatpush.msra.mxu0 %v1979
    %2039 = vmatpush.msra.mxu0 %v1976
    %2040 = vmatmul.f32.gmra.mxu0 %v1971
    %v2041 = vpop.f32.mrf.mxu0
    %v2042 = vadd.f32 0.0, %v2041
    %2043 = vdwg.mxu0
    %2044 = vmatpush.msra.mxu0 %v2022
    %2045 = vmatpush.msra.mxu0 %v2019
    %2046 = vmatpush.msra.mxu0 %v2016
    %2047 = vmatpush.msra.mxu0 %v2013
    %2048 = vmatpush.msra.mxu0 %v2010
    %2049 = vmatpush.msra.mxu0 %v2007
    %2050 = vmatpush.msra.mxu0 %v2004
    %2051 = vmatpush.msra.mxu0 %v2001
    %2052 = vmatpush.msra.mxu0 %v1998
    %2053 = vmatpush.msra.mxu0 %v1995
    %2054 = vmatpush.msra.mxu0 %v1992
    %2055 = vmatpush.msra.mxu0 %v1989
    %2056 = vmatpush.msra.mxu0 %v1986
    %2057 = vmatpush.msra.mxu0 %v1983
    %2058 = vmatpush.msra.mxu0 %v1980
    %2059 = vmatpush.msra.mxu0 %v1977
    %2060 = vmatmul.f32.gmra.mxu0 %v1971
    %v2061 = vpop.f32.mrf.mxu0
    %v2062 = vadd.f32 0.0, %v2061
    %2063 = vdwg.mxu0
    %2064 = vmatpush.msra.mxu0 %v2023
    %2065 = vmatpush.msra.mxu0 %v2020
    %2066 = vmatpush.msra.mxu0 %v2017
    %2067 = vmatpush.msra.mxu0 %v2014
    %2068 = vmatpush.msra.mxu0 %v2011
    %2069 = vmatpush.msra.mxu0 %v2008
    %2070 = vmatpush.msra.mxu0 %v2005
    %2071 = vmatpush.msra.mxu0 %v2002
    %2072 = vmatpush.msra.mxu0 %v1999
    %2073 = vmatpush.msra.mxu0 %v1996
    %2074 = vmatpush.msra.mxu0 %v1993
    %2075 = vmatpush.msra.mxu0 %v1990
    %2076 = vmatpush.msra.mxu0 %v1987
    %2077 = vmatpush.msra.mxu0 %v1984
    %2078 = vmatpush.msra.mxu0 %v1981
    %2079 = vmatpush.msra.mxu0 %v1978
    %2080 = vmatmul.f32.gmra.mxu0 %v1971
    %v2081 = vpop.f32.mrf.mxu0
    %v2082 = vadd.f32 0.0, %v2081
    %2083 = vdwg.mxu0
    %v2087 = vrot.slane %v2062, 6
    %v2088 = vrot.slane %v2082, 4
    %v2089 = vsel %vm188, %v2042, %v2087
    %v2090 = vsel %vm190, %v2089, %v2088
    %v2092 = vadd.f32 %v1975, %v2090
    %v2093 = vld [vmem:[#allocation7] sm:$0xff]
    %v2094 = vld [vmem:[#allocation7 + $0x8] sm:$0xff]
    %v2095 = vld [vmem:[#allocation7 + $0x10] sm:$0xff]
    %v2096 = vld [vmem:[#allocation7 + $0x18] sm:$0xff]
    %v2097 = vld [vmem:[#allocation7 + $0x20] sm:$0xff]
    %v2098 = vld [vmem:[#allocation7 + $0x28] sm:$0xff]
    %v2099 = vld [vmem:[#allocation7 + $0x30] sm:$0xff]
    %v2100 = vld [vmem:[#allocation7 + $0x38] sm:$0xff]
    %v2101 = vld [vmem:[#allocation7 + $0x40] sm:$0xff]
    %v2102 = vld [vmem:[#allocation7 + $0x48] sm:$0xff]
    %v2103 = vld [vmem:[#allocation7 + $0x50] sm:$0xff]
    %v2104 = vld [vmem:[#allocation7 + $0x58] sm:$0xff]
    %v2105 = vld [vmem:[#allocation7 + $0x60] sm:$0xff]
    %v2106 = vld [vmem:[#allocation7 + $0x68] sm:$0xff]
    %v2107 = vld [vmem:[#allocation7 + $0x70] sm:$0xff]
    %v2108 = vld [vmem:[#allocation7 + $0x78] sm:$0xff]
    %v2109 = vld [vmem:[#allocation7 + $0x80] sm:$0xff]
    %v2110 = vld [vmem:[#allocation7 + $0x88] sm:$0xff]
    %v2111 = vld [vmem:[#allocation7 + $0x90] sm:$0xff]
    %v2112 = vld [vmem:[#allocation7 + $0x98] sm:$0xff]
    %v2113 = vld [vmem:[#allocation7 + $0xa0] sm:$0xff]
    %v2114 = vld [vmem:[#allocation7 + $0xa8] sm:$0xff]
    %v2115 = vld [vmem:[#allocation7 + $0xb0] sm:$0xff]
    %v2116 = vld [vmem:[#allocation7 + $0xb8] sm:$0xff]
    %v2117 = vld [vmem:[#allocation7 + $0xc0] sm:$0xff]
    %v2118 = vld [vmem:[#allocation7 + $0xc8] sm:$0xff]
    %v2119 = vld [vmem:[#allocation7 + $0xd0] sm:$0xff]
    %v2120 = vld [vmem:[#allocation7 + $0xd8] sm:$0xff]
    %v2121 = vld [vmem:[#allocation7 + $0xe0] sm:$0xff]
    %v2122 = vld [vmem:[#allocation7 + $0xe8] sm:$0xff]
    %v2123 = vld [vmem:[#allocation7 + $0xf0] sm:$0xff]
    %v2124 = vld [vmem:[#allocation7 + $0xf8] sm:$0xff]
    %2125 = vmatpush.msra.mxu0 %v2123
    %2126 = vmatpush.msra.mxu0 %v2121
    %2127 = vmatpush.msra.mxu0 %v2119
    %2128 = vmatpush.msra.mxu0 %v2117
    %2129 = vmatpush.msra.mxu0 %v2115
    %2130 = vmatpush.msra.mxu0 %v2113
    %2131 = vmatpush.msra.mxu0 %v2111
    %2132 = vmatpush.msra.mxu0 %v2109
    %2133 = vmatpush.msra.mxu0 %v2107
    %2134 = vmatpush.msra.mxu0 %v2105
    %2135 = vmatpush.msra.mxu0 %v2103
    %2136 = vmatpush.msra.mxu0 %v2101
    %2137 = vmatpush.msra.mxu0 %v2099
    %2138 = vmatpush.msra.mxu0 %v2097
    %2139 = vmatpush.msra.mxu0 %v2095
    %2140 = vmatpush.msra.mxu0 %v2093
    %2141 = vmatmul.f32.gmra.mxu0 %v1908
    %v2142 = vpop.f32.mrf.mxu0
    %v2143 = vadd.f32 0.0, %v2142
    %2144 = vdwg.mxu0
    %2145 = vmatpush.msra.mxu0 %v2124
    %2146 = vmatpush.msra.mxu0 %v2122
    %2147 = vmatpush.msra.mxu0 %v2120
    %2148 = vmatpush.msra.mxu0 %v2118
    %2149 = vmatpush.msra.mxu0 %v2116
    %2150 = vmatpush.msra.mxu0 %v2114
    %2151 = vmatpush.msra.mxu0 %v2112
    %2152 = vmatpush.msra.mxu0 %v2110
    %2153 = vmatpush.msra.mxu0 %v2108
    %2154 = vmatpush.msra.mxu0 %v2106
    %2155 = vmatpush.msra.mxu0 %v2104
    %2156 = vmatpush.msra.mxu0 %v2102
    %2157 = vmatpush.msra.mxu0 %v2100
    %2158 = vmatpush.msra.mxu0 %v2098
    %2159 = vmatpush.msra.mxu0 %v2096
    %2160 = vmatpush.msra.mxu0 %v2094
    %2161 = vmatmul.f32.gmra.mxu0 %v1908
    %v2162 = vpop.f32.mrf.mxu0
    %v2163 = vadd.f32 0.0, %v2162
    %2164 = vdwg.mxu0
    %v2166 = vrot.slane %v2092, 4
    %v2168 = vadd.f32 %v2166, %v2163
    %2170 = vset.pattern.permute.xlu0 0
    %2171 = vperm.xlu0 %2170, %v2168
    %v2172 = vpop.permute.xlu0 %2171
    %v2175 = vunpack.c.l.s4 269488144
    %v2176 = vunpack.c.0.s8 %v2175
    %v2177 = vperm.slane %v2172, %v2176
    %v2178 = vmul.f32 %v2177, %v280
    %v2179 = vadd.f32 %v2143, %v2178
    %v2180 = vld [vmem:[%s5] sm:$0xff]
    %v2181 = vld [vmem:[%s5 + $0x8] sm:$0xff]
    %v2182 = vld [vmem:[%s5 + $0x10] sm:$0xff]
    %v2183 = vld [vmem:[%s5 + $0x18] sm:$0xff]
    %v2184 = vld [vmem:[%s5 + $0x20] sm:$0xff]
    %v2185 = vld [vmem:[%s5 + $0x28] sm:$0xff]
    %v2186 = vld [vmem:[%s5 + $0x30] sm:$0xff]
    %v2187 = vld [vmem:[%s5 + $0x38] sm:$0xff]
    %v2188 = vld [vmem:[%s5 + $0x40] sm:$0xff]
    %v2189 = vld [vmem:[%s5 + $0x48] sm:$0xff]
    %v2190 = vld [vmem:[%s5 + $0x50] sm:$0xff]
    %v2191 = vld [vmem:[%s5 + $0x58] sm:$0xff]
    %v2192 = vld [vmem:[%s5 + $0x60] sm:$0xff]
    %v2193 = vld [vmem:[%s5 + $0x68] sm:$0xff]
    %v2194 = vld [vmem:[%s5 + $0x70] sm:$0xff]
    %v2195 = vld [vmem:[%s5 + $0x78] sm:$0xff]
    %2196 = vmatpush.msra.mxu0 %v2195
    %2197 = vmatpush.msra.mxu0 %v2194
    %2198 = vmatpush.msra.mxu0 %v2193
    %2199 = vmatpush.msra.mxu0 %v2192
    %2200 = vmatpush.msra.mxu0 %v2191
    %2201 = vmatpush.msra.mxu0 %v2190
    %2202 = vmatpush.msra.mxu0 %v2189
    %2203 = vmatpush.msra.mxu0 %v2188
    %2204 = vmatpush.msra.mxu0 %v2187
    %2205 = vmatpush.msra.mxu0 %v2186
    %2206 = vmatpush.msra.mxu0 %v2185
    %2207 = vmatpush.msra.mxu0 %v2184
    %2208 = vmatpush.msra.mxu0 %v2183
    %2209 = vmatpush.msra.mxu0 %v2182
    %2210 = vmatpush.msra.mxu0 %v2181
    %2211 = vmatpush.msra.mxu0 %v2180
    %2212 = vmatmul.f32.gmra.mxu0 %v2179
    %v2213 = vpop.f32.mrf.mxu0
    %v2214 = vadd.f32 0.0, %v2213
    %2215 = vdwg.mxu0
    %v2216 = vadd.f32 %v2092, %v2214
    %v2217 = vtanh.pop %v2216
    %v2218 = vrot.slane %v2092, 2
    %v2220 = vxor.u32 %v2218, 2147483648
    %v2221 = vmul.f32 %v2220, 1.442695
    %v2222 = vpow.pop %v2221
    %v2223 = vadd.f32 %v2222, 1.0
    %v2224 = vrcp.pop %v2223
    %v2225 = vmul.f32 %v2223, %v2224
    %v2226 = vsub.f32 1.0, %v2225
    %v2227 = vmul.f32 %v2224, %v2226
    %v2228 = vadd.f32 %v2224, %v2227
    %vm2229 = vweird.f32 %v2223
    %vm2230 = vweird.f32 %v2224
    %vm2231 = vmor %vm2229, %vm2230
    %v2232 = vsel %vm2231, %v2224, %v2228
    %v2233 = vand.u32 2147483647, %v2223
    %vm2234 = vcmp.eq.f32.partialorder %v2233, 8.507059e+37
    %v2235 = vand.u32 %v2223, 2147483648
    %v2236 = vor.u32 1.1754944e-38, %v2235
    %v2237 = vsel %vm2234, %v2236, %v2232
    %v2238 = vmul.f32 1.0, %v2237
    %v2239 = vmul.f32 %v2238, %v2217
    %v2240 = vsub.f32 1.0, %v2238
    %v2241 = vmul.f32 %v2240, %v1971
    %v2242 = vadd.f32 %v2239, %v2241
    %s2243 = scalar_lea.vmem %s7, 14
    %2244 = vst [vmem:[%s2243] sm:$0x3] %v2242
    %2245 = vst [vmem:[#allocation2] sm:$0x3] %v2242
    %2246 = vst [vmem:[#allocation3] sm:$0x3] %v2179
    // Predicated region
    $region42: #{lmu_gate_forward.1} parent=1 // pred_check
      %p2247 = pneg %p63
    $region43: #{lmu_gate_forward.1} parent=1 // pred_check_branch
      %2249 = sbr.rel (%p2247) target = $region45
    $region44: #{lmu_gate_forward.1} parent=1 // pred_region
      %2250 = vst [vmem:[#allocation9] sm:$0x3] %v2242
      %2251 = vst [vmem:[#allocation10] sm:$0x3] %v2179
    $region45: #{lmu_gate_forward.1} parent=1 // pred_fallthru
      _
    // Predicated region
    $region46: #{lmu_gate_forward.1} parent=1 // pred_check
      _
    $region47: #{lmu_gate_forward.1} parent=1 // pred_check_branch
      %2253 = sbr.rel (0) target = $region49
    $region48: #{lmu_gate_forward.1} parent=1 // pred_region
      _
    $region49: #{lmu_gate_forward.1} parent=1 // pred_fallthru
      _
    // Predicated region
    $region50: #{lmu_gate_forward.1} parent=1 // pred_check
      _
    $region51: #{lmu_gate_forward.1} parent=1 // pred_check_branch
      %2255 = sbr.rel (0) target = $region53
    $region52: #{lmu_gate_forward.1} parent=1 // pred_region
      %2257 = vsyncadd [#allocation6], 0
      %s2259 = sshll.u32 [#allocation9], 4
      %s2260 = int_to_ptr.vmem [resolvable:$true] %s2259
      %s2261 = sshll.u32 %s8, 4
      %s2262 = int_to_ptr.hbm [resolvable:$true] %s2261
      %2264 = dma.vmem_to_hbm [thread:$0]  %s2260, 32, %s2262, [#allocation6]
    $region53: #{lmu_gate_forward.1} parent=1 // pred_fallthru
      _
    // Predicated region
    $region54: #{lmu_gate_forward.1} parent=1 // pred_check
      _
    $region55: #{lmu_gate_forward.1} parent=1 // pred_check_branch
      %2266 = sbr.rel (0) target = $region57
    $region56: #{lmu_gate_forward.1} parent=1 // pred_region
      %2268 = vsyncadd [#allocation11], 0
      %s2270 = sshll.u32 [#allocation10], 4
      %s2271 = int_to_ptr.vmem [resolvable:$true] %s2270
      %s2272 = sshll.u32 %s9, 4
      %s2273 = int_to_ptr.hbm [resolvable:$true] %s2272
      %2275 = dma.vmem_to_hbm [thread:$0]  %s2271, 32, %s2273, [#allocation11]
    $region57: #{lmu_gate_forward.1} parent=1 // pred_fallthru
      _
    // Predicated region
    $region58: #{lmu_gate_forward.1} parent=1 // pred_check
      _
    $region59: #{lmu_gate_forward.1} parent=1 // pred_check_branch
      %2277 = sbr.rel (0) target = $region61
    $region60: #{lmu_gate_forward.1} parent=1 // pred_region
      _
    $region61: #{lmu_gate_forward.1} parent=1 // pred_fallthru
      _
    // Predicated region
    $region62: #{lmu_gate_forward.1} parent=1 // pred_check
      _
    $region63: #{lmu_gate_forward.1} parent=1 // pred_check_branch
      %2279 = sbr.rel (0) target = $region65
    $region64: #{lmu_gate_forward.1} parent=1 // pred_region
      %2281 = dma.done [#allocation6], 32
    $region65: #{lmu_gate_forward.1} parent=1 // pred_fallthru
      _
    // Predicated region
    $region66: #{lmu_gate_forward.1} parent=1 // pred_check
      _
    $region67: #{lmu_gate_forward.1} parent=1 // pred_check_branch
      %2283 = sbr.rel (0) target = $region69
    $region68: #{lmu_gate_forward.1} parent=1 // pred_region
      %2285 = dma.done [#allocation11], 32
    $region69: #{lmu_gate_forward.1} parent=1 // pred_fallthru
      _
    %2286 = vsyncpa [#allocation5], 1
    %2287 = vsyncpa [#allocation8], 1
    %2288 = vsyncpa [#allocation6], 1
    %2289 = vsyncpa [#allocation11], 1

</llo_original>
